<compile_context>
chip_gen: v6e
topology: v6e:2x2x1
jax: 0.10.0
libtpu: 0.0.40
codegen_flags: <defaults>
</compile_context>

<pallas_src>
import functools
import math

import jax
import jax.numpy as jnp
from jax import lax
from jax.experimental import pallas as pl
from jax.experimental.pallas import tpu as pltpu


# ----------------------------------------------------------------------------
# In-kernel helpers
# ----------------------------------------------------------------------------
def _softmax_last(s):
    """Numerically stable softmax over the last axis (exact normalization)."""
    s = s - jnp.max(s, axis=-1, keepdims=True)
    e = jnp.exp(s)
    return e * pl.reciprocal(jnp.sum(e, axis=-1, keepdims=True), approx=False)


def _dot_t(a, b):
    """(M, K) x (P, K) -> (M, P): contract the last dim of both operands, so a
    torch-layout weight is consumed transposed with no materialized copy."""
    return lax.dot_general(a, b, (((1,), (1,)), ((), ())),
                           preferred_element_type=jnp.float32)


# ----------------------------------------------------------------------------
# Fused SAMLayer-branch kernel: one grid step == one branch of the layer.
# ----------------------------------------------------------------------------
def _sam_branch_kernel(q_ref, kv_ref, w_in_ref, b_in_ref, w_out_ref, b_out_ref,
                       out_ref, qkv_scr, qy_scr, score_scr, *, num_heads):
    # q_ref / kv_ref: (L, N, E) in the torch (seq, batch, embed) layout.
    # out_ref block:  (1, L, N, E), indexed by branch.
    L, N, E = q_ref.shape
    S = L
    H = num_heads
    d = E // H
    scale = 1.0 / math.sqrt(d)

    branch0 = pl.program_id(0) == 0
    q_in = q_ref[...]
    kv_in = kv_ref[...]
    # branch 0: x (self source == key/value) = kv, y (query) = q   -> q_out
    # branch 1: x = q,                         y = kv              -> kv_out
    x = jnp.where(branch0, kv_in, q_in)
    y = jnp.where(branch0, q_in, kv_in)

    w_in = w_in_ref[...]      # (3E, E) = [Wq; Wk; Wv]  (native dtype -> MXU)
    b_in = b_in_ref[...]      # (1, 3E)
    w_out = w_out_ref[...]    # (E, E)
    b_out = b_out_ref[...]    # (1, E)

    # ---- batch-flattened projections: one MXU matmul each -------------------
    x2 = x.reshape(L * N, E)
    y2 = y.reshape(L * N, E)
    qkv = _dot_t(x2, w_in) + b_in                              # (L*N, 3E) f32
    qy = (_dot_t(y2, w_in[:E, :]) + b_in[:, :E]) * scale       # (L*N, E)  f32

    # Re-pack once into batch-major VMEM scratch so the attention loops read
    # contiguous (L, *) slabs instead of re-slicing live values across passes.
    qkv3 = qkv.reshape(L, N, 3 * E)
    qy3 = qy.reshape(L, N, E)
    for n in range(N):
        qkv_scr[n] = qkv3[:, n, :]
        qy_scr[n] = qy3[:, n, :]

    # ---- pass 1: head-averaged self-attention probabilities (the mask) ------
    for n in range(N):
        q_n = qkv_scr[n, :, 0:E] * scale          # scale once per batch, not per head
        k_n = qkv_scr[n, :, E:2 * E]
        p_sum = jnp.zeros((L, S), jnp.float32)
        for h in range(H):
            s = _dot_t(q_n[:, h * d:(h + 1) * d], k_n[:, h * d:(h + 1) * d])
            p_sum = p_sum + _softmax_last(s)
        score_scr[n] = p_sum * (1.0 / H)

    # ---- pass 2: masked cross attention + single out-projection -------------
    # torch's score.repeat(H, 1, 1): flat head f = n*H + h reads score[f % N].
    ctxs = []
    for n in range(N):
        qy_n = qy_scr[n]                           # (L, E), already scaled
        k_n = qkv_scr[n, :, E:2 * E]
        v_n = qkv_scr[n, :, 2 * E:3 * E]
        heads = []
        for h in range(H):
            mask = score_scr[(n * H + h) % N]                       # (L, S)
            s = _dot_t(qy_n[:, h * d:(h + 1) * d],
                       k_n[:, h * d:(h + 1) * d]) + mask
            p = _softmax_last(s)
            heads.append(jnp.dot(p, v_n[:, h * d:(h + 1) * d],
                                 preferred_element_type=jnp.float32))  # (L, d)
        ctxs.append(jnp.concatenate(heads, axis=-1))                # (L, E)

    # One (L*N, E) @ (E, E) out-projection for all batches (contraction = E),
    # landing directly in the (L, N, E) output layout.
    ctx_all = jnp.stack(ctxs, axis=1).reshape(L * N, E)
    out = _dot_t(ctx_all, w_out) + b_out
    out_ref[0] = out.reshape(L, N, E).astype(out_ref.dtype)


# ----------------------------------------------------------------------------
# SAMLayer.forward
# ----------------------------------------------------------------------------
def sam_layer_forward(q, kv, params, num_heads):
    """Returns (q_out, kv_out), both (L, N, E)."""
    L, N, E = q.shape
    assert kv.shape == (L, N, E), "SAMLayer semantics require matching q/kv shapes"
    assert E % num_heads == 0

    w_in = params["in_proj_weight"]                    # (3E, E), shared by all 4 calls
    b_in = params["in_proj_bias"].reshape(1, 3 * E)
    w_out = params["out_proj_weight"]                  # (E, E)
    b_out = params["out_proj_bias"].reshape(1, E)

    kernel = functools.partial(_sam_branch_kernel, num_heads=num_heads)
    out = pl.pallas_call(
        kernel,
        out_shape=jax.ShapeDtypeStruct((2, L, N, E), q.dtype),
        grid=(2,),
        in_specs=[
            pl.BlockSpec((L, N, E), lambda i: (0, 0, 0)),    # q
            pl.BlockSpec((L, N, E), lambda i: (0, 0, 0)),    # kv
            # Constant-index weight blocks stay resident across the grid (no
            # per-branch re-DMA).
            # TODO(synk): pipeline_mode=pl.Buffered(1) would additionally drop
            # their second pipeline buffer (halves weight VMEM at large E).
            pl.BlockSpec((3 * E, E), lambda i: (0, 0)),      # in_proj_weight
            pl.BlockSpec((1, 3 * E), lambda i: (0, 0)),      # in_proj_bias
            pl.BlockSpec((E, E), lambda i: (0, 0)),          # out_proj_weight
            pl.BlockSpec((1, E), lambda i: (0, 0)),          # out_proj_bias
        ],
        out_specs=pl.BlockSpec((1, L, N, E), lambda i: (i, 0, 0, 0)),
        scratch_shapes=[
            pltpu.VMEM((N, L, 3 * E), jnp.float32),  # projected QKV of x (batch-major)
            pltpu.VMEM((N, L, E), jnp.float32),      # projected (scaled) Q of y
            pltpu.VMEM((N, L, L), jnp.float32),      # head-averaged self-attn scores
        ],
        compiler_params=pltpu.CompilerParams(
            dimension_semantics=("parallel",),       # one branch per TensorCore on v7x
            vmem_limit_bytes=32 * 1024 * 1024),
    )(q, kv, w_in, b_in, w_out, b_out)

    # TODO(synk): for very long sequences the O(N*L*S) score scratch should be
    # bounded by a query-row-tile grid axis; whole-array blocks keep the
    # cross-batch mask indexing (score[(n*H+h) % N]) simplest at these sizes.
    return out[0], out[1]


# ----------------------------------------------------------------------------
# Pure-JAX reference (mirrors torch nn.MultiheadAttention slow path, eval mode)
# ----------------------------------------------------------------------------
_PREC = jax.lax.Precision.HIGHEST


def _mha_ref(query, key, value, params, num_heads, attn_mask=None):
    L, N, E = query.shape
    S = key.shape[0]
    H, d = num_heads, E // num_heads
    w_in, b_in = params["in_proj_weight"], params["in_proj_bias"]
    qp = jnp.dot(query.reshape(L * N, E), w_in[:E].T, precision=_PREC) + b_in[:E]
    kp = jnp.dot(key.reshape(S * N, E), w_in[E:2 * E].T, precision=_PREC) + b_in[E:2 * E]
    vp = jnp.dot(value.reshape(S * N, E), w_in[2 * E:].T, precision=_PREC) + b_in[2 * E:]
    qh = qp.reshape(L, N * H, d).transpose(1, 0, 2)
    kh = kp.reshape(S, N * H, d).transpose(1, 0, 2)
    vh = vp.reshape(S, N * H, d).transpose(1, 0, 2)
    s = jnp.einsum("bqd,bkd->bqk", qh / math.sqrt(d), kh, precision=_PREC)
    if attn_mask is not None:
        s = s + attn_mask
    p = jax.nn.softmax(s, axis=-1)
    ctx = jnp.einsum("bqk,bkd->bqd", p, vh, precision=_PREC)
    out = (jnp.dot(ctx.transpose(1, 0, 2).reshape(L * N, E),
                   params["out_proj_weight"].T, precision=_PREC)
           + params["out_proj_bias"]).reshape(L, N, E)
    return out, p.reshape(N, H, L, S).mean(axis=1)


def _sam_layer_ref(q, kv, params, num_heads):
    _, kv_score = _mha_ref(kv, kv, kv, params, num_heads)
    q_out, _ = _mha_ref(q, kv, kv, params, num_heads,
                        attn_mask=jnp.tile(kv_score, (num_heads, 1, 1)))
    _, q_score = _mha_ref(q, q, q, params, num_heads)
    kv_out, _ = _mha_ref(kv, q, q, params, num_heads,
                         attn_mask=jnp.tile(q_score, (num_heads, 1, 1)))
    return q_out, kv_out


def init_params(key, embed_size):
    k1, k2, k3, k4 = jax.random.split(key, 4)
    return {
        "in_proj_weight": 0.1 * jax.random.normal(
            k1, (3 * embed_size, embed_size), jnp.float32),
        "in_proj_bias": 0.1 * jax.random.normal(k3, (3 * embed_size,), jnp.float32),
        "out_proj_weight": 0.1 * jax.random.normal(
            k2, (embed_size, embed_size), jnp.float32),
        "out_proj_bias": 0.1 * jax.random.normal(k4, (embed_size,), jnp.float32),
    }


if __name__ == "__main__":
    SEQ, BATCH, EMBED, HEADS = 8, 2, 32, 4   # ff_hidden_size unused in forward

    root = jax.random.PRNGKey(0)
    kp, kq, kkv = jax.random.split(root, 3)
    params = init_params(kp, EMBED)
    q = jax.random.normal(kq, (SEQ, BATCH, EMBED), jnp.float32)    # (L, N, E)
    kv = jax.random.normal(kkv, (SEQ, BATCH, EMBED), jnp.float32)  # (S, N, E)

    fwd = jax.jit(functools.partial(sam_layer_forward, num_heads=HEADS))
    q_out, kv_out = fwd(q, kv, params)
    jax.block_until_ready((q_out, kv_out))

    assert q_out.shape == (SEQ, BATCH, EMBED)
    assert kv_out.shape == (SEQ, BATCH, EMBED)
    assert bool(jnp.all(jnp.isfinite(q_out))) and bool(jnp.all(jnp.isfinite(kv_out)))

    # Correctness vs. pure-JAX reference (exact softmax normalization in-kernel
    # -> tight tolerance, versus the previous 2e-2).
    q_ref, kv_ref = _sam_layer_ref(q, kv, params, HEADS)
    assert jnp.allclose(q_out, q_ref, atol=1e-4, rtol=1e-4), \
        float(jnp.max(jnp.abs(q_out - q_ref)))
    assert jnp.allclose(kv_out, kv_ref, atol=1e-4, rtol=1e-4), \
        float(jnp.max(jnp.abs(kv_out - kv_ref)))

    print("KERNEL_OK")
</pallas_src>

<mosaic_0001>
module attributes {stable_mosaic.version = 11 : i64} {
  func.func @_sam_branch_kernel(%arg0: i32, %arg1: memref<8x2x32xf32, #tpu.memory_space<vmem>>, %arg2: memref<8x2x32xf32, #tpu.memory_space<vmem>>, %arg3: memref<96x32xf32, #tpu.memory_space<vmem>>, %arg4: memref<1x96xf32, #tpu.memory_space<vmem>>, %arg5: memref<32x32xf32, #tpu.memory_space<vmem>>, %arg6: memref<1x32xf32, #tpu.memory_space<vmem>>, %arg7: memref<1x8x2x32xf32, #tpu.memory_space<vmem>>, %arg8: memref<2x8x96xf32, #tpu.memory_space<vmem>>, %arg9: memref<2x8x32xf32, #tpu.memory_space<vmem>>, %arg10: memref<2x8x8xf32, #tpu.memory_space<vmem>>) attributes {dimension_semantics = [#tpu.dimension_semantics<parallel>], iteration_bounds = array<i64: 2>, scalar_prefetch = 0 : i64, scratch_operands = 3 : i64, tpu.core_type = #tpu.core_type<tc>, window_params = [{pipeline_mode = #tpu.pipeline_mode<synchronous>, transform_indices = @transform_0, window_bounds = array<i64: 8, 2, 32>}, {pipeline_mode = #tpu.pipeline_mode<synchronous>, transform_indices = @transform_1, window_bounds = array<i64: 8, 2, 32>}, {pipeline_mode = #tpu.pipeline_mode<synchronous>, transform_indices = @transform_2, window_bounds = array<i64: 96, 32>}, {pipeline_mode = #tpu.pipeline_mode<synchronous>, transform_indices = @transform_3, window_bounds = array<i64: 1, 96>}, {pipeline_mode = #tpu.pipeline_mode<synchronous>, transform_indices = @transform_4, window_bounds = array<i64: 32, 32>}, {pipeline_mode = #tpu.pipeline_mode<synchronous>, transform_indices = @transform_5, window_bounds = array<i64: 1, 32>}, {transform_indices = @transform_6, window_bounds = array<i64: 1, 8, 2, 32>}]} {
    %c0_i32 = arith.constant 0 : i32
    %0 = arith.cmpi eq, %arg0, %c0_i32 : i32
    %c0 = arith.constant 0 : index
    %c0_0 = arith.constant 0 : index
    %c0_1 = arith.constant 0 : index
    %1 = vector.load %arg1[%c0, %c0_0, %c0_1] : memref<8x2x32xf32, #tpu.memory_space<vmem>>, vector<8x2x32xf32>
    %c0_2 = arith.constant 0 : index
    %c0_3 = arith.constant 0 : index
    %c0_4 = arith.constant 0 : index
    %2 = vector.load %arg2[%c0_2, %c0_3, %c0_4] : memref<8x2x32xf32, #tpu.memory_space<vmem>>, vector<8x2x32xf32>
    %3 = arith.select %0, %2, %1 : vector<8x2x32xf32>
    %4 = arith.select %0, %1, %2 : vector<8x2x32xf32>
    %c0_5 = arith.constant 0 : index
    %c0_6 = arith.constant 0 : index
    %5 = vector.load %arg3[%c0_5, %c0_6] : memref<96x32xf32, #tpu.memory_space<vmem>>, vector<96x32xf32>
    %c0_7 = arith.constant 0 : index
    %c0_8 = arith.constant 0 : index
    %6 = vector.load %arg4[%c0_7, %c0_8] : memref<1x96xf32, #tpu.memory_space<vmem>>, vector<1x96xf32>
    %c0_9 = arith.constant 0 : index
    %c0_10 = arith.constant 0 : index
    %7 = vector.load %arg5[%c0_9, %c0_10] : memref<32x32xf32, #tpu.memory_space<vmem>>, vector<32x32xf32>
    %c0_11 = arith.constant 0 : index
    %c0_12 = arith.constant 0 : index
    %8 = vector.load %arg6[%c0_11, %c0_12] : memref<1x32xf32, #tpu.memory_space<vmem>>, vector<1x32xf32>
    %9 = vector.shape_cast %3 : vector<8x2x32xf32> to vector<16x32xf32>
    %10 = vector.shape_cast %4 : vector<8x2x32xf32> to vector<16x32xf32>
    %cst = arith.constant dense<0.000000e+00> : vector<16x96xf32>
    %11 = tpu.matmul %9, %5, %cst {dimension_numbers = #tpu.dot_dimension_numbers<[1], [1], [0], [0], [0, 0, 1, 0], [], []>} : vector<16x32xf32>, vector<96x32xf32>, vector<16x96xf32> -> vector<16x96xf32>
    %12 = vector.broadcast %6 : vector<1x96xf32> to vector<16x96xf32>
    %13 = arith.addf %11, %12 : vector<16x96xf32>
    %14 = vector.extract_strided_slice %5 {offsets = [0, 0], sizes = [32, 32], strides = [1, 1]} : vector<96x32xf32> to vector<32x32xf32>
    %cst_13 = arith.constant dense<0.000000e+00> : vector<16x32xf32>
    %15 = tpu.matmul %10, %14, %cst_13 {dimension_numbers = #tpu.dot_dimension_numbers<[1], [1], [0], [0], [0, 0, 1, 0], [], []>} : vector<16x32xf32>, vector<32x32xf32>, vector<16x32xf32> -> vector<16x32xf32>
    %16 = vector.extract_strided_slice %6 {offsets = [0, 0], sizes = [1, 32], strides = [1, 1]} : vector<1x96xf32> to vector<1x32xf32>
    %17 = vector.broadcast %16 : vector<1x32xf32> to vector<16x32xf32>
    %18 = arith.addf %15, %17 : vector<16x32xf32>
    %cst_14 = arith.constant 0.353553385 : f32
    %19 = vector.broadcast %cst_14 : f32 to vector<16x32xf32>
    %20 = arith.mulf %18, %19 : vector<16x32xf32>
    %21 = vector.shape_cast %13 : vector<16x96xf32> to vector<8x2x96xf32>
    %22 = vector.shape_cast %20 : vector<16x32xf32> to vector<8x2x32xf32>
    %23 = vector.extract_strided_slice %21 {offsets = [0, 0, 0], sizes = [8, 1, 96], strides = [1, 1, 1]} : vector<8x2x96xf32> to vector<8x1x96xf32>
    %24 = vector.shape_cast %23 : vector<8x1x96xf32> to vector<8x96xf32>
    %c0_15 = arith.constant 0 : index
    %c0_16 = arith.constant 0 : index
    %c0_17 = arith.constant 0 : index
    %25 = vector.load %arg8[%c0_15, %c0_16, %c0_17] : memref<2x8x96xf32, #tpu.memory_space<vmem>>, vector<1x8x96xf32>
    %26 = vector.shape_cast %25 : vector<1x8x96xf32> to vector<8x96xf32>
    %27 = vector.shape_cast %24 : vector<8x96xf32> to vector<1x8x96xf32>
    tpu.vector_store %arg8[%c0_15, %c0_16, %c0_17], %27 {strides = array<i32>} : memref<2x8x96xf32, #tpu.memory_space<vmem>>, vector<1x8x96xf32>,
    %28 = vector.extract_strided_slice %22 {offsets = [0, 0, 0], sizes = [8, 1, 32], strides = [1, 1, 1]} : vector<8x2x32xf32> to vector<8x1x32xf32>
    %29 = vector.shape_cast %28 : vector<8x1x32xf32> to vector<8x32xf32>
    %c0_18 = arith.constant 0 : index
    %c0_19 = arith.constant 0 : index
    %c0_20 = arith.constant 0 : index
    %30 = vector.load %arg9[%c0_18, %c0_19, %c0_20] : memref<2x8x32xf32, #tpu.memory_space<vmem>>, vector<1x8x32xf32>
    %31 = vector.shape_cast %30 : vector<1x8x32xf32> to vector<8x32xf32>
    %32 = vector.shape_cast %29 : vector<8x32xf32> to vector<1x8x32xf32>
    tpu.vector_store %arg9[%c0_18, %c0_19, %c0_20], %32 {strides = array<i32>} : memref<2x8x32xf32, #tpu.memory_space<vmem>>, vector<1x8x32xf32>,
    %33 = vector.extract_strided_slice %21 {offsets = [0, 1, 0], sizes = [8, 1, 96], strides = [1, 1, 1]} : vector<8x2x96xf32> to vector<8x1x96xf32>
    %34 = vector.shape_cast %33 : vector<8x1x96xf32> to vector<8x96xf32>
    %c1 = arith.constant 1 : index
    %c0_21 = arith.constant 0 : index
    %c0_22 = arith.constant 0 : index
    %35 = vector.load %arg8[%c1, %c0_21, %c0_22] : memref<2x8x96xf32, #tpu.memory_space<vmem>>, vector<1x8x96xf32>
    %36 = vector.shape_cast %35 : vector<1x8x96xf32> to vector<8x96xf32>
    %37 = vector.shape_cast %34 : vector<8x96xf32> to vector<1x8x96xf32>
    tpu.vector_store %arg8[%c1, %c0_21, %c0_22], %37 {strides = array<i32>} : memref<2x8x96xf32, #tpu.memory_space<vmem>>, vector<1x8x96xf32>,
    %38 = vector.extract_strided_slice %22 {offsets = [0, 1, 0], sizes = [8, 1, 32], strides = [1, 1, 1]} : vector<8x2x32xf32> to vector<8x1x32xf32>
    %39 = vector.shape_cast %38 : vector<8x1x32xf32> to vector<8x32xf32>
    %c1_23 = arith.constant 1 : index
    %c0_24 = arith.constant 0 : index
    %c0_25 = arith.constant 0 : index
    %40 = vector.load %arg9[%c1_23, %c0_24, %c0_25] : memref<2x8x32xf32, #tpu.memory_space<vmem>>, vector<1x8x32xf32>
    %41 = vector.shape_cast %40 : vector<1x8x32xf32> to vector<8x32xf32>
    %42 = vector.shape_cast %39 : vector<8x32xf32> to vector<1x8x32xf32>
    tpu.vector_store %arg9[%c1_23, %c0_24, %c0_25], %42 {strides = array<i32>} : memref<2x8x32xf32, #tpu.memory_space<vmem>>, vector<1x8x32xf32>,
    %c0_26 = arith.constant 0 : index
    %c0_27 = arith.constant 0 : index
    %c0_28 = arith.constant 0 : index
    %43 = vector.load %arg8[%c0_26, %c0_27, %c0_28] : memref<2x8x96xf32, #tpu.memory_space<vmem>>, vector<1x8x32xf32>
    %44 = vector.shape_cast %43 : vector<1x8x32xf32> to vector<8x32xf32>
    %cst_29 = arith.constant 0.353553385 : f32
    %45 = vector.broadcast %cst_29 : f32 to vector<8x32xf32>
    %46 = arith.mulf %44, %45 : vector<8x32xf32>
    %c0_30 = arith.constant 0 : index
    %c0_31 = arith.constant 0 : index
    %c32 = arith.constant 32 : index
    %47 = vector.load %arg8[%c0_30, %c0_31, %c32] : memref<2x8x96xf32, #tpu.memory_space<vmem>>, vector<1x8x32xf32>
    %48 = vector.shape_cast %47 : vector<1x8x32xf32> to vector<8x32xf32>
    %cst_32 = arith.constant 0.000000e+00 : f32
    %49 = vector.broadcast %cst_32 : f32 to vector<8x8xf32>
    %50 = vector.extract_strided_slice %46 {offsets = [0, 0], sizes = [8, 8], strides = [1, 1]} : vector<8x32xf32> to vector<8x8xf32>
    %51 = vector.extract_strided_slice %48 {offsets = [0, 0], sizes = [8, 8], strides = [1, 1]} : vector<8x32xf32> to vector<8x8xf32>
    %cst_33 = arith.constant dense<0.000000e+00> : vector<8x8xf32>
    %52 = tpu.matmul %50, %51, %cst_33 {dimension_numbers = #tpu.dot_dimension_numbers<[1], [1], [0], [0], [0, 0, 1, 0], [], []>} : vector<8x8xf32>, vector<8x8xf32>, vector<8x8xf32> -> vector<8x8xf32>
    %cst_34 = arith.constant dense<0xFF800000> : vector<8xf32>
    %53 = vector.multi_reduction <maximumf>, %52, %cst_34 [1] : vector<8x8xf32> to vector<8xf32>
    %54 = vector.shape_cast %53 : vector<8xf32> to vector<8x1xf32>
    %55 = vector.broadcast %54 : vector<8x1xf32> to vector<8x8xf32>
    %56 = arith.subf %52, %55 : vector<8x8xf32>
    %57 = math.exp %56 : vector<8x8xf32>
    %cst_35 = arith.constant dense<0.000000e+00> : vector<8xf32>
    %58 = vector.multi_reduction <add>, %57, %cst_35 [1] : vector<8x8xf32> to vector<8xf32>
    %59 = vector.shape_cast %58 : vector<8xf32> to vector<8x1xf32>
    %60 = tpu.reciprocal %59 : vector<8x1xf32> -> vector<8x1xf32>
    %61 = vector.broadcast %60 : vector<8x1xf32> to vector<8x8xf32>
    %62 = arith.mulf %57, %61 : vector<8x8xf32>
    %63 = arith.addf %49, %62 : vector<8x8xf32>
    %64 = vector.extract_strided_slice %46 {offsets = [0, 8], sizes = [8, 8], strides = [1, 1]} : vector<8x32xf32> to vector<8x8xf32>
    %65 = vector.extract_strided_slice %48 {offsets = [0, 8], sizes = [8, 8], strides = [1, 1]} : vector<8x32xf32> to vector<8x8xf32>
    %cst_36 = arith.constant dense<0.000000e+00> : vector<8x8xf32>
    %66 = tpu.matmul %64, %65, %cst_36 {dimension_numbers = #tpu.dot_dimension_numbers<[1], [1], [0], [0], [0, 0, 1, 0], [], []>} : vector<8x8xf32>, vector<8x8xf32>, vector<8x8xf32> -> vector<8x8xf32>
    %cst_37 = arith.constant dense<0xFF800000> : vector<8xf32>
    %67 = vector.multi_reduction <maximumf>, %66, %cst_37 [1] : vector<8x8xf32> to vector<8xf32>
    %68 = vector.shape_cast %67 : vector<8xf32> to vector<8x1xf32>
    %69 = vector.broadcast %68 : vector<8x1xf32> to vector<8x8xf32>
    %70 = arith.subf %66, %69 : vector<8x8xf32>
    %71 = math.exp %70 : vector<8x8xf32>
    %cst_38 = arith.constant dense<0.000000e+00> : vector<8xf32>
    %72 = vector.multi_reduction <add>, %71, %cst_38 [1] : vector<8x8xf32> to vector<8xf32>
    %73 = vector.shape_cast %72 : vector<8xf32> to vector<8x1xf32>
    %74 = tpu.reciprocal %73 : vector<8x1xf32> -> vector<8x1xf32>
    %75 = vector.broadcast %74 : vector<8x1xf32> to vector<8x8xf32>
    %76 = arith.mulf %71, %75 : vector<8x8xf32>
    %77 = arith.addf %63, %76 : vector<8x8xf32>
    %78 = vector.extract_strided_slice %46 {offsets = [0, 16], sizes = [8, 8], strides = [1, 1]} : vector<8x32xf32> to vector<8x8xf32>
    %79 = vector.extract_strided_slice %48 {offsets = [0, 16], sizes = [8, 8], strides = [1, 1]} : vector<8x32xf32> to vector<8x8xf32>
    %cst_39 = arith.constant dense<0.000000e+00> : vector<8x8xf32>
    %80 = tpu.matmul %78, %79, %cst_39 {dimension_numbers = #tpu.dot_dimension_numbers<[1], [1], [0], [0], [0, 0, 1, 0], [], []>} : vector<8x8xf32>, vector<8x8xf32>, vector<8x8xf32> -> vector<8x8xf32>
    %cst_40 = arith.constant dense<0xFF800000> : vector<8xf32>
    %81 = vector.multi_reduction <maximumf>, %80, %cst_40 [1] : vector<8x8xf32> to vector<8xf32>
    %82 = vector.shape_cast %81 : vector<8xf32> to vector<8x1xf32>
    %83 = vector.broadcast %82 : vector<8x1xf32> to vector<8x8xf32>
    %84 = arith.subf %80, %83 : vector<8x8xf32>
    %85 = math.exp %84 : vector<8x8xf32>
    %cst_41 = arith.constant dense<0.000000e+00> : vector<8xf32>
    %86 = vector.multi_reduction <add>, %85, %cst_41 [1] : vector<8x8xf32> to vector<8xf32>
    %87 = vector.shape_cast %86 : vector<8xf32> to vector<8x1xf32>
    %88 = tpu.reciprocal %87 : vector<8x1xf32> -> vector<8x1xf32>
    %89 = vector.broadcast %88 : vector<8x1xf32> to vector<8x8xf32>
    %90 = arith.mulf %85, %89 : vector<8x8xf32>
    %91 = arith.addf %77, %90 : vector<8x8xf32>
    %92 = vector.extract_strided_slice %46 {offsets = [0, 24], sizes = [8, 8], strides = [1, 1]} : vector<8x32xf32> to vector<8x8xf32>
    %93 = vector.extract_strided_slice %48 {offsets = [0, 24], sizes = [8, 8], strides = [1, 1]} : vector<8x32xf32> to vector<8x8xf32>
    %cst_42 = arith.constant dense<0.000000e+00> : vector<8x8xf32>
    %94 = tpu.matmul %92, %93, %cst_42 {dimension_numbers = #tpu.dot_dimension_numbers<[1], [1], [0], [0], [0, 0, 1, 0], [], []>} : vector<8x8xf32>, vector<8x8xf32>, vector<8x8xf32> -> vector<8x8xf32>
    %cst_43 = arith.constant dense<0xFF800000> : vector<8xf32>
    %95 = vector.multi_reduction <maximumf>, %94, %cst_43 [1] : vector<8x8xf32> to vector<8xf32>
    %96 = vector.shape_cast %95 : vector<8xf32> to vector<8x1xf32>
    %97 = vector.broadcast %96 : vector<8x1xf32> to vector<8x8xf32>
    %98 = arith.subf %94, %97 : vector<8x8xf32>
    %99 = math.exp %98 : vector<8x8xf32>
    %cst_44 = arith.constant dense<0.000000e+00> : vector<8xf32>
    %100 = vector.multi_reduction <add>, %99, %cst_44 [1] : vector<8x8xf32> to vector<8xf32>
    %101 = vector.shape_cast %100 : vector<8xf32> to vector<8x1xf32>
    %102 = tpu.reciprocal %101 : vector<8x1xf32> -> vector<8x1xf32>
    %103 = vector.broadcast %102 : vector<8x1xf32> to vector<8x8xf32>
    %104 = arith.mulf %99, %103 : vector<8x8xf32>
    %105 = arith.addf %91, %104 : vector<8x8xf32>
    %cst_45 = arith.constant 2.500000e-01 : f32
    %106 = vector.broadcast %cst_45 : f32 to vector<8x8xf32>
    %107 = arith.mulf %105, %106 : vector<8x8xf32>
    %c0_46 = arith.constant 0 : index
    %c0_47 = arith.constant 0 : index
    %c0_48 = arith.constant 0 : index
    %108 = vector.load %arg10[%c0_46, %c0_47, %c0_48] : memref<2x8x8xf32, #tpu.memory_space<vmem>>, vector<1x8x8xf32>
    %109 = vector.shape_cast %108 : vector<1x8x8xf32> to vector<8x8xf32>
    %110 = vector.shape_cast %107 : vector<8x8xf32> to vector<1x8x8xf32>
    tpu.vector_store %arg10[%c0_46, %c0_47, %c0_48], %110 {strides = array<i32>} : memref<2x8x8xf32, #tpu.memory_space<vmem>>, vector<1x8x8xf32>,
    %c1_49 = arith.constant 1 : index
    %c0_50 = arith.constant 0 : index
    %c0_51 = arith.constant 0 : index
    %111 = vector.load %arg8[%c1_49, %c0_50, %c0_51] : memref<2x8x96xf32, #tpu.memory_space<vmem>>, vector<1x8x32xf32>
    %112 = vector.shape_cast %111 : vector<1x8x32xf32> to vector<8x32xf32>
    %cst_52 = arith.constant 0.353553385 : f32
    %113 = vector.broadcast %cst_52 : f32 to vector<8x32xf32>
    %114 = arith.mulf %112, %113 : vector<8x32xf32>
    %c1_53 = arith.constant 1 : index
    %c0_54 = arith.constant 0 : index
    %c32_55 = arith.constant 32 : index
    %115 = vector.load %arg8[%c1_53, %c0_54, %c32_55] : memref<2x8x96xf32, #tpu.memory_space<vmem>>, vector<1x8x32xf32>
    %116 = vector.shape_cast %115 : vector<1x8x32xf32> to vector<8x32xf32>
    %cst_56 = arith.constant 0.000000e+00 : f32
    %117 = vector.broadcast %cst_56 : f32 to vector<8x8xf32>
    %118 = vector.extract_strided_slice %114 {offsets = [0, 0], sizes = [8, 8], strides = [1, 1]} : vector<8x32xf32> to vector<8x8xf32>
    %119 = vector.extract_strided_slice %116 {offsets = [0, 0], sizes = [8, 8], strides = [1, 1]} : vector<8x32xf32> to vector<8x8xf32>
    %cst_57 = arith.constant dense<0.000000e+00> : vector<8x8xf32>
    %120 = tpu.matmul %118, %119, %cst_57 {dimension_numbers = #tpu.dot_dimension_numbers<[1], [1], [0], [0], [0, 0, 1, 0], [], []>} : vector<8x8xf32>, vector<8x8xf32>, vector<8x8xf32> -> vector<8x8xf32>
    %cst_58 = arith.constant dense<0xFF800000> : vector<8xf32>
    %121 = vector.multi_reduction <maximumf>, %120, %cst_58 [1] : vector<8x8xf32> to vector<8xf32>
    %122 = vector.shape_cast %121 : vector<8xf32> to vector<8x1xf32>
    %123 = vector.broadcast %122 : vector<8x1xf32> to vector<8x8xf32>
    %124 = arith.subf %120, %123 : vector<8x8xf32>
    %125 = math.exp %124 : vector<8x8xf32>
    %cst_59 = arith.constant dense<0.000000e+00> : vector<8xf32>
    %126 = vector.multi_reduction <add>, %125, %cst_59 [1] : vector<8x8xf32> to vector<8xf32>
    %127 = vector.shape_cast %126 : vector<8xf32> to vector<8x1xf32>
    %128 = tpu.reciprocal %127 : vector<8x1xf32> -> vector<8x1xf32>
    %129 = vector.broadcast %128 : vector<8x1xf32> to vector<8x8xf32>
    %130 = arith.mulf %125, %129 : vector<8x8xf32>
    %131 = arith.addf %117, %130 : vector<8x8xf32>
    %132 = vector.extract_strided_slice %114 {offsets = [0, 8], sizes = [8, 8], strides = [1, 1]} : vector<8x32xf32> to vector<8x8xf32>
    %133 = vector.extract_strided_slice %116 {offsets = [0, 8], sizes = [8, 8], strides = [1, 1]} : vector<8x32xf32> to vector<8x8xf32>
    %cst_60 = arith.constant dense<0.000000e+00> : vector<8x8xf32>
    %134 = tpu.matmul %132, %133, %cst_60 {dimension_numbers = #tpu.dot_dimension_numbers<[1], [1], [0], [0], [0, 0, 1, 0], [], []>} : vector<8x8xf32>, vector<8x8xf32>, vector<8x8xf32> -> vector<8x8xf32>
    %cst_61 = arith.constant dense<0xFF800000> : vector<8xf32>
    %135 = vector.multi_reduction <maximumf>, %134, %cst_61 [1] : vector<8x8xf32> to vector<8xf32>
    %136 = vector.shape_cast %135 : vector<8xf32> to vector<8x1xf32>
    %137 = vector.broadcast %136 : vector<8x1xf32> to vector<8x8xf32>
    %138 = arith.subf %134, %137 : vector<8x8xf32>
    %139 = math.exp %138 : vector<8x8xf32>
    %cst_62 = arith.constant dense<0.000000e+00> : vector<8xf32>
    %140 = vector.multi_reduction <add>, %139, %cst_62 [1] : vector<8x8xf32> to vector<8xf32>
    %141 = vector.shape_cast %140 : vector<8xf32> to vector<8x1xf32>
    %142 = tpu.reciprocal %141 : vector<8x1xf32> -> vector<8x1xf32>
    %143 = vector.broadcast %142 : vector<8x1xf32> to vector<8x8xf32>
    %144 = arith.mulf %139, %143 : vector<8x8xf32>
    %145 = arith.addf %131, %144 : vector<8x8xf32>
    %146 = vector.extract_strided_slice %114 {offsets = [0, 16], sizes = [8, 8], strides = [1, 1]} : vector<8x32xf32> to vector<8x8xf32>
    %147 = vector.extract_strided_slice %116 {offsets = [0, 16], sizes = [8, 8], strides = [1, 1]} : vector<8x32xf32> to vector<8x8xf32>
    %cst_63 = arith.constant dense<0.000000e+00> : vector<8x8xf32>
    %148 = tpu.matmul %146, %147, %cst_63 {dimension_numbers = #tpu.dot_dimension_numbers<[1], [1], [0], [0], [0, 0, 1, 0], [], []>} : vector<8x8xf32>, vector<8x8xf32>, vector<8x8xf32> -> vector<8x8xf32>
    %cst_64 = arith.constant dense<0xFF800000> : vector<8xf32>
    %149 = vector.multi_reduction <maximumf>, %148, %cst_64 [1] : vector<8x8xf32> to vector<8xf32>
    %150 = vector.shape_cast %149 : vector<8xf32> to vector<8x1xf32>
    %151 = vector.broadcast %150 : vector<8x1xf32> to vector<8x8xf32>
    %152 = arith.subf %148, %151 : vector<8x8xf32>
    %153 = math.exp %152 : vector<8x8xf32>
    %cst_65 = arith.constant dense<0.000000e+00> : vector<8xf32>
    %154 = vector.multi_reduction <add>, %153, %cst_65 [1] : vector<8x8xf32> to vector<8xf32>
    %155 = vector.shape_cast %154 : vector<8xf32> to vector<8x1xf32>
    %156 = tpu.reciprocal %155 : vector<8x1xf32> -> vector<8x1xf32>
    %157 = vector.broadcast %156 : vector<8x1xf32> to vector<8x8xf32>
    %158 = arith.mulf %153, %157 : vector<8x8xf32>
    %159 = arith.addf %145, %158 : vector<8x8xf32>
    %160 = vector.extract_strided_slice %114 {offsets = [0, 24], sizes = [8, 8], strides = [1, 1]} : vector<8x32xf32> to vector<8x8xf32>
    %161 = vector.extract_strided_slice %116 {offsets = [0, 24], sizes = [8, 8], strides = [1, 1]} : vector<8x32xf32> to vector<8x8xf32>
    %cst_66 = arith.constant dense<0.000000e+00> : vector<8x8xf32>
    %162 = tpu.matmul %160, %161, %cst_66 {dimension_numbers = #tpu.dot_dimension_numbers<[1], [1], [0], [0], [0, 0, 1, 0], [], []>} : vector<8x8xf32>, vector<8x8xf32>, vector<8x8xf32> -> vector<8x8xf32>
    %cst_67 = arith.constant dense<0xFF800000> : vector<8xf32>
    %163 = vector.multi_reduction <maximumf>, %162, %cst_67 [1] : vector<8x8xf32> to vector<8xf32>
    %164 = vector.shape_cast %163 : vector<8xf32> to vector<8x1xf32>
    %165 = vector.broadcast %164 : vector<8x1xf32> to vector<8x8xf32>
    %166 = arith.subf %162, %165 : vector<8x8xf32>
    %167 = math.exp %166 : vector<8x8xf32>
    %cst_68 = arith.constant dense<0.000000e+00> : vector<8xf32>
    %168 = vector.multi_reduction <add>, %167, %cst_68 [1] : vector<8x8xf32> to vector<8xf32>
    %169 = vector.shape_cast %168 : vector<8xf32> to vector<8x1xf32>
    %170 = tpu.reciprocal %169 : vector<8x1xf32> -> vector<8x1xf32>
    %171 = vector.broadcast %170 : vector<8x1xf32> to vector<8x8xf32>
    %172 = arith.mulf %167, %171 : vector<8x8xf32>
    %173 = arith.addf %159, %172 : vector<8x8xf32>
    %cst_69 = arith.constant 2.500000e-01 : f32
    %174 = vector.broadcast %cst_69 : f32 to vector<8x8xf32>
    %175 = arith.mulf %173, %174 : vector<8x8xf32>
    %c1_70 = arith.constant 1 : index
    %c0_71 = arith.constant 0 : index
    %c0_72 = arith.constant 0 : index
    %176 = vector.load %arg10[%c1_70, %c0_71, %c0_72] : memref<2x8x8xf32, #tpu.memory_space<vmem>>, vector<1x8x8xf32>
    %177 = vector.shape_cast %176 : vector<1x8x8xf32> to vector<8x8xf32>
    %178 = vector.shape_cast %175 : vector<8x8xf32> to vector<1x8x8xf32>
    tpu.vector_store %arg10[%c1_70, %c0_71, %c0_72], %178 {strides = array<i32>} : memref<2x8x8xf32, #tpu.memory_space<vmem>>, vector<1x8x8xf32>,
    %c0_73 = arith.constant 0 : index
    %c0_74 = arith.constant 0 : index
    %c0_75 = arith.constant 0 : index
    %179 = vector.load %arg9[%c0_73, %c0_74, %c0_75] : memref<2x8x32xf32, #tpu.memory_space<vmem>>, vector<1x8x32xf32>
    %180 = vector.shape_cast %179 : vector<1x8x32xf32> to vector<8x32xf32>
    %c0_76 = arith.constant 0 : index
    %c0_77 = arith.constant 0 : index
    %c32_78 = arith.constant 32 : index
    %181 = vector.load %arg8[%c0_76, %c0_77, %c32_78] : memref<2x8x96xf32, #tpu.memory_space<vmem>>, vector<1x8x32xf32>
    %182 = vector.shape_cast %181 : vector<1x8x32xf32> to vector<8x32xf32>
    %c0_79 = arith.constant 0 : index
    %c0_80 = arith.constant 0 : index
    %c64 = arith.constant 64 : index
    %183 = vector.load %arg8[%c0_79, %c0_80, %c64] : memref<2x8x96xf32, #tpu.memory_space<vmem>>, vector<1x8x32xf32>
    %184 = vector.shape_cast %183 : vector<1x8x32xf32> to vector<8x32xf32>
    %c0_81 = arith.constant 0 : index
    %c0_82 = arith.constant 0 : index
    %c0_83 = arith.constant 0 : index
    %185 = vector.load %arg10[%c0_81, %c0_82, %c0_83] : memref<2x8x8xf32, #tpu.memory_space<vmem>>, vector<1x8x8xf32>
    %186 = vector.shape_cast %185 : vector<1x8x8xf32> to vector<8x8xf32>
    %187 = vector.extract_strided_slice %180 {offsets = [0, 0], sizes = [8, 8], strides = [1, 1]} : vector<8x32xf32> to vector<8x8xf32>
    %188 = vector.extract_strided_slice %182 {offsets = [0, 0], sizes = [8, 8], strides = [1, 1]} : vector<8x32xf32> to vector<8x8xf32>
    %cst_84 = arith.constant dense<0.000000e+00> : vector<8x8xf32>
    %189 = tpu.matmul %187, %188, %cst_84 {dimension_numbers = #tpu.dot_dimension_numbers<[1], [1], [0], [0], [0, 0, 1, 0], [], []>} : vector<8x8xf32>, vector<8x8xf32>, vector<8x8xf32> -> vector<8x8xf32>
    %190 = arith.addf %189, %186 : vector<8x8xf32>
    %cst_85 = arith.constant dense<0xFF800000> : vector<8xf32>
    %191 = vector.multi_reduction <maximumf>, %190, %cst_85 [1] : vector<8x8xf32> to vector<8xf32>
    %192 = vector.shape_cast %191 : vector<8xf32> to vector<8x1xf32>
    %193 = vector.broadcast %192 : vector<8x1xf32> to vector<8x8xf32>
    %194 = arith.subf %190, %193 : vector<8x8xf32>
    %195 = math.exp %194 : vector<8x8xf32>
    %cst_86 = arith.constant dense<0.000000e+00> : vector<8xf32>
    %196 = vector.multi_reduction <add>, %195, %cst_86 [1] : vector<8x8xf32> to vector<8xf32>
    %197 = vector.shape_cast %196 : vector<8xf32> to vector<8x1xf32>
    %198 = tpu.reciprocal %197 : vector<8x1xf32> -> vector<8x1xf32>
    %199 = vector.broadcast %198 : vector<8x1xf32> to vector<8x8xf32>
    %200 = arith.mulf %195, %199 : vector<8x8xf32>
    %201 = vector.extract_strided_slice %184 {offsets = [0, 0], sizes = [8, 8], strides = [1, 1]} : vector<8x32xf32> to vector<8x8xf32>
    %cst_87 = arith.constant dense<0.000000e+00> : vector<8x8xf32>
    %202 = tpu.matmul %200, %201, %cst_87 {dimension_numbers = #tpu.dot_dimension_numbers<[1], [0], [0], [1], [0, 0, 1, 1], [], []>} : vector<8x8xf32>, vector<8x8xf32>, vector<8x8xf32> -> vector<8x8xf32>
    %c1_88 = arith.constant 1 : index
    %c0_89 = arith.constant 0 : index
    %c0_90 = arith.constant 0 : index
    %203 = vector.load %arg10[%c1_88, %c0_89, %c0_90] : memref<2x8x8xf32, #tpu.memory_space<vmem>>, vector<1x8x8xf32>
    %204 = vector.shape_cast %203 : vector<1x8x8xf32> to vector<8x8xf32>
    %205 = vector.extract_strided_slice %180 {offsets = [0, 8], sizes = [8, 8], strides = [1, 1]} : vector<8x32xf32> to vector<8x8xf32>
    %206 = vector.extract_strided_slice %182 {offsets = [0, 8], sizes = [8, 8], strides = [1, 1]} : vector<8x32xf32> to vector<8x8xf32>
    %cst_91 = arith.constant dense<0.000000e+00> : vector<8x8xf32>
    %207 = tpu.matmul %205, %206, %cst_91 {dimension_numbers = #tpu.dot_dimension_numbers<[1], [1], [0], [0], [0, 0, 1, 0], [], []>} : vector<8x8xf32>, vector<8x8xf32>, vector<8x8xf32> -> vector<8x8xf32>
    %208 = arith.addf %207, %204 : vector<8x8xf32>
    %cst_92 = arith.constant dense<0xFF800000> : vector<8xf32>
    %209 = vector.multi_reduction <maximumf>, %208, %cst_92 [1] : vector<8x8xf32> to vector<8xf32>
    %210 = vector.shape_cast %209 : vector<8xf32> to vector<8x1xf32>
    %211 = vector.broadcast %210 : vector<8x1xf32> to vector<8x8xf32>
    %212 = arith.subf %208, %211 : vector<8x8xf32>
    %213 = math.exp %212 : vector<8x8xf32>
    %cst_93 = arith.constant dense<0.000000e+00> : vector<8xf32>
    %214 = vector.multi_reduction <add>, %213, %cst_93 [1] : vector<8x8xf32> to vector<8xf32>
    %215 = vector.shape_cast %214 : vector<8xf32> to vector<8x1xf32>
    %216 = tpu.reciprocal %215 : vector<8x1xf32> -> vector<8x1xf32>
    %217 = vector.broadcast %216 : vector<8x1xf32> to vector<8x8xf32>
    %218 = arith.mulf %213, %217 : vector<8x8xf32>
    %219 = vector.extract_strided_slice %184 {offsets = [0, 8], sizes = [8, 8], strides = [1, 1]} : vector<8x32xf32> to vector<8x8xf32>
    %cst_94 = arith.constant dense<0.000000e+00> : vector<8x8xf32>
    %220 = tpu.matmul %218, %219, %cst_94 {dimension_numbers = #tpu.dot_dimension_numbers<[1], [0], [0], [1], [0, 0, 1, 1], [], []>} : vector<8x8xf32>, vector<8x8xf32>, vector<8x8xf32> -> vector<8x8xf32>
    %c0_95 = arith.constant 0 : index
    %c0_96 = arith.constant 0 : index
    %c0_97 = arith.constant 0 : index
    %221 = vector.load %arg10[%c0_95, %c0_96, %c0_97] : memref<2x8x8xf32, #tpu.memory_space<vmem>>, vector<1x8x8xf32>
    %222 = vector.shape_cast %221 : vector<1x8x8xf32> to vector<8x8xf32>
    %223 = vector.extract_strided_slice %180 {offsets = [0, 16], sizes = [8, 8], strides = [1, 1]} : vector<8x32xf32> to vector<8x8xf32>
    %224 = vector.extract_strided_slice %182 {offsets = [0, 16], sizes = [8, 8], strides = [1, 1]} : vector<8x32xf32> to vector<8x8xf32>
    %cst_98 = arith.constant dense<0.000000e+00> : vector<8x8xf32>
    %225 = tpu.matmul %223, %224, %cst_98 {dimension_numbers = #tpu.dot_dimension_numbers<[1], [1], [0], [0], [0, 0, 1, 0], [], []>} : vector<8x8xf32>, vector<8x8xf32>, vector<8x8xf32> -> vector<8x8xf32>
    %226 = arith.addf %225, %222 : vector<8x8xf32>
    %cst_99 = arith.constant dense<0xFF800000> : vector<8xf32>
    %227 = vector.multi_reduction <maximumf>, %226, %cst_99 [1] : vector<8x8xf32> to vector<8xf32>
    %228 = vector.shape_cast %227 : vector<8xf32> to vector<8x1xf32>
    %229 = vector.broadcast %228 : vector<8x1xf32> to vector<8x8xf32>
    %230 = arith.subf %226, %229 : vector<8x8xf32>
    %231 = math.exp %230 : vector<8x8xf32>
    %cst_100 = arith.constant dense<0.000000e+00> : vector<8xf32>
    %232 = vector.multi_reduction <add>, %231, %cst_100 [1] : vector<8x8xf32> to vector<8xf32>
    %233 = vector.shape_cast %232 : vector<8xf32> to vector<8x1xf32>
    %234 = tpu.reciprocal %233 : vector<8x1xf32> -> vector<8x1xf32>
    %235 = vector.broadcast %234 : vector<8x1xf32> to vector<8x8xf32>
    %236 = arith.mulf %231, %235 : vector<8x8xf32>
    %237 = vector.extract_strided_slice %184 {offsets = [0, 16], sizes = [8, 8], strides = [1, 1]} : vector<8x32xf32> to vector<8x8xf32>
    %cst_101 = arith.constant dense<0.000000e+00> : vector<8x8xf32>
    %238 = tpu.matmul %236, %237, %cst_101 {dimension_numbers = #tpu.dot_dimension_numbers<[1], [0], [0], [1], [0, 0, 1, 1], [], []>} : vector<8x8xf32>, vector<8x8xf32>, vector<8x8xf32> -> vector<8x8xf32>
    %c1_102 = arith.constant 1 : index
    %c0_103 = arith.constant 0 : index
    %c0_104 = arith.constant 0 : index
    %239 = vector.load %arg10[%c1_102, %c0_103, %c0_104] : memref<2x8x8xf32, #tpu.memory_space<vmem>>, vector<1x8x8xf32>
    %240 = vector.shape_cast %239 : vector<1x8x8xf32> to vector<8x8xf32>
    %241 = vector.extract_strided_slice %180 {offsets = [0, 24], sizes = [8, 8], strides = [1, 1]} : vector<8x32xf32> to vector<8x8xf32>
    %242 = vector.extract_strided_slice %182 {offsets = [0, 24], sizes = [8, 8], strides = [1, 1]} : vector<8x32xf32> to vector<8x8xf32>
    %cst_105 = arith.constant dense<0.000000e+00> : vector<8x8xf32>
    %243 = tpu.matmul %241, %242, %cst_105 {dimension_numbers = #tpu.dot_dimension_numbers<[1], [1], [0], [0], [0, 0, 1, 0], [], []>} : vector<8x8xf32>, vector<8x8xf32>, vector<8x8xf32> -> vector<8x8xf32>
    %244 = arith.addf %243, %240 : vector<8x8xf32>
    %cst_106 = arith.constant dense<0xFF800000> : vector<8xf32>
    %245 = vector.multi_reduction <maximumf>, %244, %cst_106 [1] : vector<8x8xf32> to vector<8xf32>
    %246 = vector.shape_cast %245 : vector<8xf32> to vector<8x1xf32>
    %247 = vector.broadcast %246 : vector<8x1xf32> to vector<8x8xf32>
    %248 = arith.subf %244, %247 : vector<8x8xf32>
    %249 = math.exp %248 : vector<8x8xf32>
    %cst_107 = arith.constant dense<0.000000e+00> : vector<8xf32>
    %250 = vector.multi_reduction <add>, %249, %cst_107 [1] : vector<8x8xf32> to vector<8xf32>
    %251 = vector.shape_cast %250 : vector<8xf32> to vector<8x1xf32>
    %252 = tpu.reciprocal %251 : vector<8x1xf32> -> vector<8x1xf32>
    %253 = vector.broadcast %252 : vector<8x1xf32> to vector<8x8xf32>
    %254 = arith.mulf %249, %253 : vector<8x8xf32>
    %255 = vector.extract_strided_slice %184 {offsets = [0, 24], sizes = [8, 8], strides = [1, 1]} : vector<8x32xf32> to vector<8x8xf32>
    %cst_108 = arith.constant dense<0.000000e+00> : vector<8x8xf32>
    %256 = tpu.matmul %254, %255, %cst_108 {dimension_numbers = #tpu.dot_dimension_numbers<[1], [0], [0], [1], [0, 0, 1, 1], [], []>} : vector<8x8xf32>, vector<8x8xf32>, vector<8x8xf32> -> vector<8x8xf32>
    %257 = tpu.concatenate %202, %220, %238, %256 in 1 : vector<8x8xf32>, vector<8x8xf32>, vector<8x8xf32>, vector<8x8xf32> -> vector<8x32xf32>
    %c1_109 = arith.constant 1 : index
    %c0_110 = arith.constant 0 : index
    %c0_111 = arith.constant 0 : index
    %258 = vector.load %arg9[%c1_109, %c0_110, %c0_111] : memref<2x8x32xf32, #tpu.memory_space<vmem>>, vector<1x8x32xf32>
    %259 = vector.shape_cast %258 : vector<1x8x32xf32> to vector<8x32xf32>
    %c1_112 = arith.constant 1 : index
    %c0_113 = arith.constant 0 : index
    %c32_114 = arith.constant 32 : index
    %260 = vector.load %arg8[%c1_112, %c0_113, %c32_114] : memref<2x8x96xf32, #tpu.memory_space<vmem>>, vector<1x8x32xf32>
    %261 = vector.shape_cast %260 : vector<1x8x32xf32> to vector<8x32xf32>
    %c1_115 = arith.constant 1 : index
    %c0_116 = arith.constant 0 : index
    %c64_117 = arith.constant 64 : index
    %262 = vector.load %arg8[%c1_115, %c0_116, %c64_117] : memref<2x8x96xf32, #tpu.memory_space<vmem>>, vector<1x8x32xf32>
    %263 = vector.shape_cast %262 : vector<1x8x32xf32> to vector<8x32xf32>
    %c0_118 = arith.constant 0 : index
    %c0_119 = arith.constant 0 : index
    %c0_120 = arith.constant 0 : index
    %264 = vector.load %arg10[%c0_118, %c0_119, %c0_120] : memref<2x8x8xf32, #tpu.memory_space<vmem>>, vector<1x8x8xf32>
    %265 = vector.shape_cast %264 : vector<1x8x8xf32> to vector<8x8xf32>
    %266 = vector.extract_strided_slice %259 {offsets = [0, 0], sizes = [8, 8], strides = [1, 1]} : vector<8x32xf32> to vector<8x8xf32>
    %267 = vector.extract_strided_slice %261 {offsets = [0, 0], sizes = [8, 8], strides = [1, 1]} : vector<8x32xf32> to vector<8x8xf32>
    %cst_121 = arith.constant dense<0.000000e+00> : vector<8x8xf32>
    %268 = tpu.matmul %266, %267, %cst_121 {dimension_numbers = #tpu.dot_dimension_numbers<[1], [1], [0], [0], [0, 0, 1, 0], [], []>} : vector<8x8xf32>, vector<8x8xf32>, vector<8x8xf32> -> vector<8x8xf32>
    %269 = arith.addf %268, %265 : vector<8x8xf32>
    %cst_122 = arith.constant dense<0xFF800000> : vector<8xf32>
    %270 = vector.multi_reduction <maximumf>, %269, %cst_122 [1] : vector<8x8xf32> to vector<8xf32>
    %271 = vector.shape_cast %270 : vector<8xf32> to vector<8x1xf32>
    %272 = vector.broadcast %271 : vector<8x1xf32> to vector<8x8xf32>
    %273 = arith.subf %269, %272 : vector<8x8xf32>
    %274 = math.exp %273 : vector<8x8xf32>
    %cst_123 = arith.constant dense<0.000000e+00> : vector<8xf32>
    %275 = vector.multi_reduction <add>, %274, %cst_123 [1] : vector<8x8xf32> to vector<8xf32>
    %276 = vector.shape_cast %275 : vector<8xf32> to vector<8x1xf32>
    %277 = tpu.reciprocal %276 : vector<8x1xf32> -> vector<8x1xf32>
    %278 = vector.broadcast %277 : vector<8x1xf32> to vector<8x8xf32>
    %279 = arith.mulf %274, %278 : vector<8x8xf32>
    %280 = vector.extract_strided_slice %263 {offsets = [0, 0], sizes = [8, 8], strides = [1, 1]} : vector<8x32xf32> to vector<8x8xf32>
    %cst_124 = arith.constant dense<0.000000e+00> : vector<8x8xf32>
    %281 = tpu.matmul %279, %280, %cst_124 {dimension_numbers = #tpu.dot_dimension_numbers<[1], [0], [0], [1], [0, 0, 1, 1], [], []>} : vector<8x8xf32>, vector<8x8xf32>, vector<8x8xf32> -> vector<8x8xf32>
    %c1_125 = arith.constant 1 : index
    %c0_126 = arith.constant 0 : index
    %c0_127 = arith.constant 0 : index
    %282 = vector.load %arg10[%c1_125, %c0_126, %c0_127] : memref<2x8x8xf32, #tpu.memory_space<vmem>>, vector<1x8x8xf32>
    %283 = vector.shape_cast %282 : vector<1x8x8xf32> to vector<8x8xf32>
    %284 = vector.extract_strided_slice %259 {offsets = [0, 8], sizes = [8, 8], strides = [1, 1]} : vector<8x32xf32> to vector<8x8xf32>
    %285 = vector.extract_strided_slice %261 {offsets = [0, 8], sizes = [8, 8], strides = [1, 1]} : vector<8x32xf32> to vector<8x8xf32>
    %cst_128 = arith.constant dense<0.000000e+00> : vector<8x8xf32>
    %286 = tpu.matmul %284, %285, %cst_128 {dimension_numbers = #tpu.dot_dimension_numbers<[1], [1], [0], [0], [0, 0, 1, 0], [], []>} : vector<8x8xf32>, vector<8x8xf32>, vector<8x8xf32> -> vector<8x8xf32>
    %287 = arith.addf %286, %283 : vector<8x8xf32>
    %cst_129 = arith.constant dense<0xFF800000> : vector<8xf32>
    %288 = vector.multi_reduction <maximumf>, %287, %cst_129 [1] : vector<8x8xf32> to vector<8xf32>
    %289 = vector.shape_cast %288 : vector<8xf32> to vector<8x1xf32>
    %290 = vector.broadcast %289 : vector<8x1xf32> to vector<8x8xf32>
    %291 = arith.subf %287, %290 : vector<8x8xf32>
    %292 = math.exp %291 : vector<8x8xf32>
    %cst_130 = arith.constant dense<0.000000e+00> : vector<8xf32>
    %293 = vector.multi_reduction <add>, %292, %cst_130 [1] : vector<8x8xf32> to vector<8xf32>
    %294 = vector.shape_cast %293 : vector<8xf32> to vector<8x1xf32>
    %295 = tpu.reciprocal %294 : vector<8x1xf32> -> vector<8x1xf32>
    %296 = vector.broadcast %295 : vector<8x1xf32> to vector<8x8xf32>
    %297 = arith.mulf %292, %296 : vector<8x8xf32>
    %298 = vector.extract_strided_slice %263 {offsets = [0, 8], sizes = [8, 8], strides = [1, 1]} : vector<8x32xf32> to vector<8x8xf32>
    %cst_131 = arith.constant dense<0.000000e+00> : vector<8x8xf32>
    %299 = tpu.matmul %297, %298, %cst_131 {dimension_numbers = #tpu.dot_dimension_numbers<[1], [0], [0], [1], [0, 0, 1, 1], [], []>} : vector<8x8xf32>, vector<8x8xf32>, vector<8x8xf32> -> vector<8x8xf32>
    %c0_132 = arith.constant 0 : index
    %c0_133 = arith.constant 0 : index
    %c0_134 = arith.constant 0 : index
    %300 = vector.load %arg10[%c0_132, %c0_133, %c0_134] : memref<2x8x8xf32, #tpu.memory_space<vmem>>, vector<1x8x8xf32>
    %301 = vector.shape_cast %300 : vector<1x8x8xf32> to vector<8x8xf32>
    %302 = vector.extract_strided_slice %259 {offsets = [0, 16], sizes = [8, 8], strides = [1, 1]} : vector<8x32xf32> to vector<8x8xf32>
    %303 = vector.extract_strided_slice %261 {offsets = [0, 16], sizes = [8, 8], strides = [1, 1]} : vector<8x32xf32> to vector<8x8xf32>
    %cst_135 = arith.constant dense<0.000000e+00> : vector<8x8xf32>
    %304 = tpu.matmul %302, %303, %cst_135 {dimension_numbers = #tpu.dot_dimension_numbers<[1], [1], [0], [0], [0, 0, 1, 0], [], []>} : vector<8x8xf32>, vector<8x8xf32>, vector<8x8xf32> -> vector<8x8xf32>
    %305 = arith.addf %304, %301 : vector<8x8xf32>
    %cst_136 = arith.constant dense<0xFF800000> : vector<8xf32>
    %306 = vector.multi_reduction <maximumf>, %305, %cst_136 [1] : vector<8x8xf32> to vector<8xf32>
    %307 = vector.shape_cast %306 : vector<8xf32> to vector<8x1xf32>
    %308 = vector.broadcast %307 : vector<8x1xf32> to vector<8x8xf32>
    %309 = arith.subf %305, %308 : vector<8x8xf32>
    %310 = math.exp %309 : vector<8x8xf32>
    %cst_137 = arith.constant dense<0.000000e+00> : vector<8xf32>
    %311 = vector.multi_reduction <add>, %310, %cst_137 [1] : vector<8x8xf32> to vector<8xf32>
    %312 = vector.shape_cast %311 : vector<8xf32> to vector<8x1xf32>
    %313 = tpu.reciprocal %312 : vector<8x1xf32> -> vector<8x1xf32>
    %314 = vector.broadcast %313 : vector<8x1xf32> to vector<8x8xf32>
    %315 = arith.mulf %310, %314 : vector<8x8xf32>
    %316 = vector.extract_strided_slice %263 {offsets = [0, 16], sizes = [8, 8], strides = [1, 1]} : vector<8x32xf32> to vector<8x8xf32>
    %cst_138 = arith.constant dense<0.000000e+00> : vector<8x8xf32>
    %317 = tpu.matmul %315, %316, %cst_138 {dimension_numbers = #tpu.dot_dimension_numbers<[1], [0], [0], [1], [0, 0, 1, 1], [], []>} : vector<8x8xf32>, vector<8x8xf32>, vector<8x8xf32> -> vector<8x8xf32>
    %c1_139 = arith.constant 1 : index
    %c0_140 = arith.constant 0 : index
    %c0_141 = arith.constant 0 : index
    %318 = vector.load %arg10[%c1_139, %c0_140, %c0_141] : memref<2x8x8xf32, #tpu.memory_space<vmem>>, vector<1x8x8xf32>
    %319 = vector.shape_cast %318 : vector<1x8x8xf32> to vector<8x8xf32>
    %320 = vector.extract_strided_slice %259 {offsets = [0, 24], sizes = [8, 8], strides = [1, 1]} : vector<8x32xf32> to vector<8x8xf32>
    %321 = vector.extract_strided_slice %261 {offsets = [0, 24], sizes = [8, 8], strides = [1, 1]} : vector<8x32xf32> to vector<8x8xf32>
    %cst_142 = arith.constant dense<0.000000e+00> : vector<8x8xf32>
    %322 = tpu.matmul %320, %321, %cst_142 {dimension_numbers = #tpu.dot_dimension_numbers<[1], [1], [0], [0], [0, 0, 1, 0], [], []>} : vector<8x8xf32>, vector<8x8xf32>, vector<8x8xf32> -> vector<8x8xf32>
    %323 = arith.addf %322, %319 : vector<8x8xf32>
    %cst_143 = arith.constant dense<0xFF800000> : vector<8xf32>
    %324 = vector.multi_reduction <maximumf>, %323, %cst_143 [1] : vector<8x8xf32> to vector<8xf32>
    %325 = vector.shape_cast %324 : vector<8xf32> to vector<8x1xf32>
    %326 = vector.broadcast %325 : vector<8x1xf32> to vector<8x8xf32>
    %327 = arith.subf %323, %326 : vector<8x8xf32>
    %328 = math.exp %327 : vector<8x8xf32>
    %cst_144 = arith.constant dense<0.000000e+00> : vector<8xf32>
    %329 = vector.multi_reduction <add>, %328, %cst_144 [1] : vector<8x8xf32> to vector<8xf32>
    %330 = vector.shape_cast %329 : vector<8xf32> to vector<8x1xf32>
    %331 = tpu.reciprocal %330 : vector<8x1xf32> -> vector<8x1xf32>
    %332 = vector.broadcast %331 : vector<8x1xf32> to vector<8x8xf32>
    %333 = arith.mulf %328, %332 : vector<8x8xf32>
    %334 = vector.extract_strided_slice %263 {offsets = [0, 24], sizes = [8, 8], strides = [1, 1]} : vector<8x32xf32> to vector<8x8xf32>
    %cst_145 = arith.constant dense<0.000000e+00> : vector<8x8xf32>
    %335 = tpu.matmul %333, %334, %cst_145 {dimension_numbers = #tpu.dot_dimension_numbers<[1], [0], [0], [1], [0, 0, 1, 1], [], []>} : vector<8x8xf32>, vector<8x8xf32>, vector<8x8xf32> -> vector<8x8xf32>
    %336 = tpu.concatenate %281, %299, %317, %335 in 1 : vector<8x8xf32>, vector<8x8xf32>, vector<8x8xf32>, vector<8x8xf32> -> vector<8x32xf32>
    %337 = vector.shape_cast %257 : vector<8x32xf32> to vector<8x1x32xf32>
    %338 = vector.shape_cast %336 : vector<8x32xf32> to vector<8x1x32xf32>
    %339 = tpu.concatenate %337, %338 in 1 : vector<8x1x32xf32>, vector<8x1x32xf32> -> vector<8x2x32xf32>
    %340 = vector.shape_cast %339 : vector<8x2x32xf32> to vector<16x32xf32>
    %cst_146 = arith.constant dense<0.000000e+00> : vector<16x32xf32>
    %341 = tpu.matmul %340, %7, %cst_146 {dimension_numbers = #tpu.dot_dimension_numbers<[1], [1], [0], [0], [0, 0, 1, 0], [], []>} : vector<16x32xf32>, vector<32x32xf32>, vector<16x32xf32> -> vector<16x32xf32>
    %342 = vector.broadcast %8 : vector<1x32xf32> to vector<16x32xf32>
    %343 = arith.addf %341, %342 : vector<16x32xf32>
    %344 = vector.shape_cast %343 : vector<16x32xf32> to vector<8x2x32xf32>
    %c0_147 = arith.constant 0 : index
    %c0_148 = arith.constant 0 : index
    %c0_149 = arith.constant 0 : index
    %c0_150 = arith.constant 0 : index
    %345 = vector.load %arg7[%c0_147, %c0_148, %c0_149, %c0_150] : memref<1x8x2x32xf32, #tpu.memory_space<vmem>>, vector<1x8x2x32xf32>
    %346 = vector.shape_cast %345 : vector<1x8x2x32xf32> to vector<8x2x32xf32>
    %347 = vector.shape_cast %344 : vector<8x2x32xf32> to vector<1x8x2x32xf32>
    tpu.vector_store %arg7[%c0_147, %c0_148, %c0_149, %c0_150], %347 {strides = array<i32>} : memref<1x8x2x32xf32, #tpu.memory_space<vmem>>, vector<1x8x2x32xf32>,
    return
  }
  func.func @transform_0(%arg0: i32) -> (i32, i32, i32) {
    %c0_i32 = arith.constant 0 : i32
    %c0_i32_0 = arith.constant 0 : i32
    %c0_i32_1 = arith.constant 0 : i32
    %c0_i32_2 = arith.constant 0 : i32
    return %c0_i32, %c0_i32_0, %c0_i32_1 : i32, i32, i32
  }
  func.func @transform_1(%arg0: i32) -> (i32, i32, i32) {
    %c0_i32 = arith.constant 0 : i32
    %c0_i32_0 = arith.constant 0 : i32
    %c0_i32_1 = arith.constant 0 : i32
    %c0_i32_2 = arith.constant 0 : i32
    return %c0_i32, %c0_i32_0, %c0_i32_1 : i32, i32, i32
  }
  func.func @transform_2(%arg0: i32) -> (i32, i32) {
    %c0_i32 = arith.constant 0 : i32
    %c0_i32_0 = arith.constant 0 : i32
    %c0_i32_1 = arith.constant 0 : i32
    return %c0_i32, %c0_i32_0 : i32, i32
  }
  func.func @transform_3(%arg0: i32) -> (i32, i32) {
    %c0_i32 = arith.constant 0 : i32
    %c0_i32_0 = arith.constant 0 : i32
    %c0_i32_1 = arith.constant 0 : i32
    return %c0_i32, %c0_i32_0 : i32, i32
  }
  func.func @transform_4(%arg0: i32) -> (i32, i32) {
    %c0_i32 = arith.constant 0 : i32
    %c0_i32_0 = arith.constant 0 : i32
    %c0_i32_1 = arith.constant 0 : i32
    return %c0_i32, %c0_i32_0 : i32, i32
  }
  func.func @transform_5(%arg0: i32) -> (i32, i32) {
    %c0_i32 = arith.constant 0 : i32
    %c0_i32_0 = arith.constant 0 : i32
    %c0_i32_1 = arith.constant 0 : i32
    return %c0_i32, %c0_i32_0 : i32, i32
  }
  func.func @transform_6(%arg0: i32) -> (i32, i32, i32, i32) {
    %c0_i32 = arith.constant 0 : i32
    %c0_i32_0 = arith.constant 0 : i32
    %c0_i32_1 = arith.constant 0 : i32
    %c0_i32_2 = arith.constant 0 : i32
    return %arg0, %c0_i32, %c0_i32_0, %c0_i32_1 : i32, i32, i32, i32
  }
}

</mosaic_0001>

<llo_original>
// kernel: sam_layer_forward.1
$region0: #{sam_layer_forward.1}
  #allocation0 [shape = 'u32[]', space=smem, size = 0x4, offset = 0x4, fixed_abs, tag = 'smem constant byte address 0x4 - core index']
  #allocation1 [shape = 'u32[144,128]{1,0:T(1,128)}', space=vmem, size = 0x12000, scoped, tag = 'internal scratch']
  #allocation2 [shape = 'f32[2,8,96]{2,1,0:T(8,128)}', space=vmem, size = 0x2000, scoped, tag = 'scratch operand']
  #allocation3 [shape = 'f32[2,8,32]{2,1,0:T(8,128)}', space=vmem, size = 0x2000, scoped, tag = 'scratch operand']
  #allocation4 [shape = 'f32[2,8,8]{2,1,0:T(8,128)}', space=vmem, size = 0x2000, scoped, tag = 'scratch operand']
  %s0 = inlined_call_operand.vmem [shape: f32[8,2,32], index: 0, kind: input, shape index: {}]
  %s1 = inlined_call_operand.vmem [shape: f32[8,2,32], index: 1, kind: input, shape index: {}]
  %s2 = inlined_call_operand.vmem [shape: f32[96,32], index: 2, kind: input, shape index: {}]
  %s3 = inlined_call_operand.vmem [shape: f32[1,96], index: 3, kind: input, shape index: {}]
  %s4 = inlined_call_operand.vmem [shape: f32[32,32], index: 4, kind: input, shape index: {}]
  %s5 = inlined_call_operand.vmem [shape: f32[1,32], index: 5, kind: input, shape index: {}]
  %s6 = inlined_call_operand.vmem [shape: f32[2,8,2,32], index: 6, kind: output, shape index: {}]
  %s7 = sld [smem:[#allocation0]]
  $region57: #{sam_layer_forward.1} parent=0
    _
  %s9 = ssub.s32 1, %s7
  %s10 = scalar_select 0, %s9, %s7
  loop: start=0, step=1, limit=4
  $region2: #{sam_layer_forward.1} parent=0 // loop_pre_header
    _
  $region3: #{sam_layer_forward.1} parent=0 // loop_header
    %s12 = sphi 0, %s16
    %p13 = scmp.ge.s32.totalorder %s12, 4
    %s20 = sphi 0, %s20
    %s22 = sphi 0, %s20
    %s23 = sphi 0, %s22
    %s37 = sphi 0, %s23
    %s41 = sphi 0, %s41
    %s43 = sphi 0, %s41
    %s44 = sphi 0, %s43
    %s58 = sphi 0, %s44
    %s62 = sphi 0, %s62
    %s64 = sphi 0, %s62
    %s65 = sphi 0, %s64
    %s79 = sphi 0, %s65
    %s83 = sphi 0, %s83
    %s85 = sphi 0, %s83
    %s86 = sphi 0, %s85
    %s100 = sphi 0, %s86
    %s104 = sphi 0, %s104
    %s106 = sphi 0, %s104
    %s107 = sphi 0, %s106
    %s121 = sphi 0, %s107
    %s125 = sphi 0, %s125
    %s127 = sphi 0, %s125
    %s128 = sphi 0, %s127
    %s142 = sphi 0, %s128
    %s148 = sphi 0, %s150
    %s151 = sphi 0, %s148
    %s152 = sphi 0, %s151
    %s168 = sphi 0, %s152
  $region4: #{sam_layer_forward.1} parent=0 // loop_header_branch
    %15 = sbr.rel (%p13) target = $region8
  $region5: #{sam_layer_forward.1} parent=0 // loop_body
    %s17 = ssub.s32 %s12, 1
    %s18 = ssub.s32 %s12, 2
    %s19 = sadd.s32 %s12, 1
    %s21 = sadd.s32 %s20, 1
    %p24 = scmp.eq.s32.totalorder %s12, 1
    %p25 = scmp.ne.s32.totalorder %s20, %s22
    %p26 = scmp.eq.s32.totalorder %s12, 0
    %p27 = por %p25, %p26
    %p28 = scmp.ne.s32.totalorder %s20, %s22
    %p29 = scmp.eq.s32.totalorder %s17, 1
    %p30 = por %p28, %p29
    %p31 = scmp.ne.s32.totalorder %s22, %s23
    %p32 = scmp.eq.s32.totalorder %s17, 0
    %p33 = por %p31, %p32
    %p34 = scmp.ne.s32.totalorder %s22, %s23
    %p35 = scmp.eq.s32.totalorder %s18, 1
    %p36 = por %p34, %p35
    %p38 = scmp.ne.s32.totalorder %s23, %s37
    %p39 = scmp.eq.s32.totalorder %s18, 0
    %p40 = por %p38, %p39
    %s42 = sadd.s32 %s41, 1
    %p45 = scmp.eq.s32.totalorder %s12, 1
    %p46 = scmp.ne.s32.totalorder %s41, %s43
    %p47 = scmp.eq.s32.totalorder %s12, 0
    %p48 = por %p46, %p47
    %p49 = scmp.ne.s32.totalorder %s41, %s43
    %p50 = scmp.eq.s32.totalorder %s17, 1
    %p51 = por %p49, %p50
    %p52 = scmp.ne.s32.totalorder %s43, %s44
    %p53 = scmp.eq.s32.totalorder %s17, 0
    %p54 = por %p52, %p53
    %p55 = scmp.ne.s32.totalorder %s43, %s44
    %p56 = scmp.eq.s32.totalorder %s18, 1
    %p57 = por %p55, %p56
    %p59 = scmp.ne.s32.totalorder %s44, %s58
    %p60 = scmp.eq.s32.totalorder %s18, 0
    %p61 = por %p59, %p60
    %s63 = sadd.s32 %s62, 1
    %p66 = scmp.eq.s32.totalorder %s12, 1
    %p67 = scmp.ne.s32.totalorder %s62, %s64
    %p68 = scmp.eq.s32.totalorder %s12, 0
    %p69 = por %p67, %p68
    %p70 = scmp.ne.s32.totalorder %s62, %s64
    %p71 = scmp.eq.s32.totalorder %s17, 1
    %p72 = por %p70, %p71
    %p73 = scmp.ne.s32.totalorder %s64, %s65
    %p74 = scmp.eq.s32.totalorder %s17, 0
    %p75 = por %p73, %p74
    %p76 = scmp.ne.s32.totalorder %s64, %s65
    %p77 = scmp.eq.s32.totalorder %s18, 1
    %p78 = por %p76, %p77
    %p80 = scmp.ne.s32.totalorder %s65, %s79
    %p81 = scmp.eq.s32.totalorder %s18, 0
    %p82 = por %p80, %p81
    %s84 = sadd.s32 %s83, 1
    %p87 = scmp.eq.s32.totalorder %s12, 1
    %p88 = scmp.ne.s32.totalorder %s83, %s85
    %p89 = scmp.eq.s32.totalorder %s12, 0
    %p90 = por %p88, %p89
    %p91 = scmp.ne.s32.totalorder %s83, %s85
    %p92 = scmp.eq.s32.totalorder %s17, 1
    %p93 = por %p91, %p92
    %p94 = scmp.ne.s32.totalorder %s85, %s86
    %p95 = scmp.eq.s32.totalorder %s17, 0
    %p96 = por %p94, %p95
    %p97 = scmp.ne.s32.totalorder %s85, %s86
    %p98 = scmp.eq.s32.totalorder %s18, 1
    %p99 = por %p97, %p98
    %p101 = scmp.ne.s32.totalorder %s86, %s100
    %p102 = scmp.eq.s32.totalorder %s18, 0
    %p103 = por %p101, %p102
    %s105 = sadd.s32 %s104, 1
    %p108 = scmp.eq.s32.totalorder %s12, 1
    %p109 = scmp.ne.s32.totalorder %s104, %s106
    %p110 = scmp.eq.s32.totalorder %s12, 0
    %p111 = por %p109, %p110
    %p112 = scmp.ne.s32.totalorder %s104, %s106
    %p113 = scmp.eq.s32.totalorder %s17, 1
    %p114 = por %p112, %p113
    %p115 = scmp.ne.s32.totalorder %s106, %s107
    %p116 = scmp.eq.s32.totalorder %s17, 0
    %p117 = por %p115, %p116
    %p118 = scmp.ne.s32.totalorder %s106, %s107
    %p119 = scmp.eq.s32.totalorder %s18, 1
    %p120 = por %p118, %p119
    %p122 = scmp.ne.s32.totalorder %s107, %s121
    %p123 = scmp.eq.s32.totalorder %s18, 0
    %p124 = por %p122, %p123
    %s126 = sadd.s32 %s125, 1
    %p129 = scmp.eq.s32.totalorder %s12, 1
    %p130 = scmp.ne.s32.totalorder %s125, %s127
    %p131 = scmp.eq.s32.totalorder %s12, 0
    %p132 = por %p130, %p131
    %p133 = scmp.ne.s32.totalorder %s125, %s127
    %p134 = scmp.eq.s32.totalorder %s17, 1
    %p135 = por %p133, %p134
    %p136 = scmp.ne.s32.totalorder %s127, %s128
    %p137 = scmp.eq.s32.totalorder %s17, 0
    %p138 = por %p136, %p137
    %p139 = scmp.ne.s32.totalorder %s127, %s128
    %p140 = scmp.eq.s32.totalorder %s18, 1
    %p141 = por %p139, %p140
    %p143 = scmp.ne.s32.totalorder %s128, %s142
    %p144 = scmp.eq.s32.totalorder %s18, 0
    %p145 = por %p143, %p144
    %s146 = ssub.s32 %s12, %s19
    %p147 = scmp.eq.s32.totalorder %s146, 0
    %s149 = sadd.s32 %s148, 1
    %s150 = scalar_select %p147, %s148, %s149
    %p153 = pneg %p147
    %p154 = scmp.eq.s32.totalorder %s12, 1
    %p155 = por %p153, %p154
    %p156 = scmp.ne.s32.totalorder %s148, %s151
    %p157 = scmp.eq.s32.totalorder %s12, 0
    %p158 = por %p156, %p157
    %p159 = scmp.ne.s32.totalorder %s148, %s151
    %p160 = scmp.eq.s32.totalorder %s17, 1
    %p161 = por %p159, %p160
    %p162 = scmp.ne.s32.totalorder %s151, %s152
    %p163 = scmp.eq.s32.totalorder %s17, 0
    %p164 = por %p162, %p163
    %p165 = scmp.ne.s32.totalorder %s151, %s152
    %p166 = scmp.eq.s32.totalorder %s18, 1
    %p167 = por %p165, %p166
    %p169 = scmp.ne.s32.totalorder %s152, %s168
    %p170 = scmp.eq.s32.totalorder %s18, 0
    %p171 = por %p169, %p170
    %p172 = scmp.le.s32.totalorder 1, %s12
    %p173 = scmp.lt.s32.totalorder %s12, 3
    %p174 = pnand %p172, %p173
    %p175 = pneg %p174
    // Predicated region
    $region9: #{sam_layer_forward.1} parent=5 // pred_check
      _
    $region10: #{sam_layer_forward.1} parent=5 // pred_check_branch
      %177 = sbr.rel (%p174) target = $region12
    $region11: #{sam_layer_forward.1} parent=5 // pred_region
      %s178 = ssub.s32 %s12, 1
      // Predicated region
      $region13: #{sam_layer_forward.1} parent=11 // pred_check
        %p179 = pneg %p33
      $region14: #{sam_layer_forward.1} parent=11 // pred_check_branch
        %181 = sbr.rel (%p179) target = $region16
      $region15: #{sam_layer_forward.1} parent=11 // pred_region
        _
      $region16: #{sam_layer_forward.1} parent=11 // pred_fallthru
        _
      // Predicated region
      $region17: #{sam_layer_forward.1} parent=11 // pred_check
        %p182 = pneg %p54
      $region18: #{sam_layer_forward.1} parent=11 // pred_check_branch
        %184 = sbr.rel (%p182) target = $region20
      $region19: #{sam_layer_forward.1} parent=11 // pred_region
        _
      $region20: #{sam_layer_forward.1} parent=11 // pred_fallthru
        _
      // Predicated region
      $region21: #{sam_layer_forward.1} parent=11 // pred_check
        %p185 = pneg %p75
      $region22: #{sam_layer_forward.1} parent=11 // pred_check_branch
        %187 = sbr.rel (%p185) target = $region24
      $region23: #{sam_layer_forward.1} parent=11 // pred_region
        _
      $region24: #{sam_layer_forward.1} parent=11 // pred_fallthru
        _
      // Predicated region
      $region25: #{sam_layer_forward.1} parent=11 // pred_check
        %p188 = pneg %p96
      $region26: #{sam_layer_forward.1} parent=11 // pred_check_branch
        %190 = sbr.rel (%p188) target = $region28
      $region27: #{sam_layer_forward.1} parent=11 // pred_region
        _
      $region28: #{sam_layer_forward.1} parent=11 // pred_fallthru
        _
      // Predicated region
      $region29: #{sam_layer_forward.1} parent=11 // pred_check
        %p191 = pneg %p117
      $region30: #{sam_layer_forward.1} parent=11 // pred_check_branch
        %193 = sbr.rel (%p191) target = $region32
      $region31: #{sam_layer_forward.1} parent=11 // pred_region
        _
      $region32: #{sam_layer_forward.1} parent=11 // pred_fallthru
        _
      // Predicated region
      $region33: #{sam_layer_forward.1} parent=11 // pred_check
        %p194 = pneg %p138
      $region34: #{sam_layer_forward.1} parent=11 // pred_check_branch
        %196 = sbr.rel (%p194) target = $region36
      $region35: #{sam_layer_forward.1} parent=11 // pred_region
        _
      $region36: #{sam_layer_forward.1} parent=11 // pred_fallthru
        _
    $region12: #{sam_layer_forward.1} parent=5 // pred_fallthru
      _
    %p197 = scmp.lt.s32.totalorder %s12, 2
    // Predicated region
    $region37: #{sam_layer_forward.1} parent=5 // pred_check
      %p198 = pneg %p197
    $region38: #{sam_layer_forward.1} parent=5 // pred_check_branch
      %200 = sbr.rel (%p198) target = $region40
    $region39: #{sam_layer_forward.1} parent=5 // pred_region
      _
    $region40: #{sam_layer_forward.1} parent=5 // pred_fallthru
      _
    %p201 = scmp.le.s32.totalorder 1, %s12
    %p202 = scmp.lt.s32.totalorder %s12, 3
    %p203 = pnand %p201, %p202
    %p204 = pneg %p203
    // Predicated region
    $region41: #{sam_layer_forward.1} parent=5 // pred_check
      _
    $region42: #{sam_layer_forward.1} parent=5 // pred_check_branch
      %206 = sbr.rel (%p203) target = $region44
    $region43: #{sam_layer_forward.1} parent=5 // pred_region
      %s207 = ssub.s32 %s12, 1
      %p208 = pneg %p33
      %p209 = pneg %p30
      %p210 = pneg %p54
      %p211 = pneg %p51
      %p212 = pneg %p75
      %p213 = pneg %p72
      %p214 = pneg %p96
      %p215 = pneg %p93
      %p216 = pneg %p117
      %p217 = pneg %p114
      %p218 = pneg %p138
      %p219 = pneg %p135
      %p220 = pneg %p164
      %p221 = pneg %p161
      %p222 = scmp.lt.s32.totalorder %s17, 1
      %s223 = scalar_select %p222, %s17, 1
      %s224 = smul.addr %s223, 8
      %s225 = smul.addr %s224, 2
      %s226 = scalar_lea.vmem %s6, %s225
      %p227 = scmp.lt.s32.totalorder %s17, 1
      %s228 = scalar_select %p227, %s17, 1
      %s229 = smul.addr %s228, 8
      %s230 = smul.addr %s229, 2
      %s231 = scalar_lea.vmem %s6, %s230
      %p232 = scmp.eq.s32.totalorder %s17, 0
      %v233 = vld [vmem:[%s0] sm:$0x3]
      %v234 = vld [vmem:[%s0 + $0x2] sm:$0x3]
      %v235 = vld [vmem:[%s0 + $0x4] sm:$0x3]
      %v236 = vld [vmem:[%s0 + $0x6] sm:$0x3]
      %v237 = vld [vmem:[%s0 + $0x8] sm:$0x3]
      %v238 = vld [vmem:[%s0 + $0xa] sm:$0x3]
      %v239 = vld [vmem:[%s0 + $0xc] sm:$0x3]
      %v240 = vld [vmem:[%s0 + $0xe] sm:$0x3]
      %v241 = vld [vmem:[%s1] sm:$0x3]
      %v242 = vld [vmem:[%s1 + $0x2] sm:$0x3]
      %v243 = vld [vmem:[%s1 + $0x4] sm:$0x3]
      %v244 = vld [vmem:[%s1 + $0x6] sm:$0x3]
      %v245 = vld [vmem:[%s1 + $0x8] sm:$0x3]
      %v246 = vld [vmem:[%s1 + $0xa] sm:$0x3]
      %v247 = vld [vmem:[%s1 + $0xc] sm:$0x3]
      %v248 = vld [vmem:[%s1 + $0xe] sm:$0x3]
      %s249 = scalar_select %p232, 1, 0
      %v250 = vstv %s249
      %vm251 = vcmp.eq.s32.totalorder %v250, 1
      %v252 = vsel %vm251, %v241, %v233
      %v253 = vsel %vm251, %v242, %v234
      %v254 = vsel %vm251, %v243, %v235
      %v255 = vsel %vm251, %v244, %v236
      %v256 = vsel %vm251, %v245, %v237
      %v257 = vsel %vm251, %v246, %v238
      %v258 = vsel %vm251, %v247, %v239
      %v259 = vsel %vm251, %v248, %v240
      %v260 = vsel %vm251, %v233, %v241
      %v261 = vsel %vm251, %v234, %v242
      %v262 = vsel %vm251, %v235, %v243
      %v263 = vsel %vm251, %v236, %v244
      %v264 = vsel %vm251, %v237, %v245
      %v265 = vsel %vm251, %v238, %v246
      %v266 = vsel %vm251, %v239, %v247
      %v267 = vsel %vm251, %v240, %v248
      %v268 = vld [vmem:[%s2] sm:$0xff]
      %v269 = vld [vmem:[%s2 + $0x8] sm:$0xff]
      %v270 = vld [vmem:[%s2 + $0x10] sm:$0xff]
      %v271 = vld [vmem:[%s2 + $0x18] sm:$0xff]
      %v272 = vld [vmem:[%s2 + $0x20] sm:$0xff]
      %v273 = vld [vmem:[%s2 + $0x28] sm:$0xff]
      %v274 = vld [vmem:[%s2 + $0x30] sm:$0xff]
      %v275 = vld [vmem:[%s2 + $0x38] sm:$0xff]
      %v276 = vld [vmem:[%s2 + $0x40] sm:$0xff]
      %v277 = vld [vmem:[%s2 + $0x48] sm:$0xff]
      %v278 = vld [vmem:[%s2 + $0x50] sm:$0xff]
      %v279 = vld [vmem:[%s2 + $0x58] sm:$0xff]
      %v280 = vld [vmem:[%s3] sm:$0x1]
      %v281 = vld [vmem:[%s4] sm:$0xff]
      %v282 = vld [vmem:[%s4 + $0x8] sm:$0xff]
      %v283 = vld [vmem:[%s4 + $0x10] sm:$0xff]
      %v284 = vld [vmem:[%s4 + $0x18] sm:$0xff]
      %v285 = vld [vmem:[%s5] sm:$0x1]
      %v287 = vlaneseq
      %v288 = vshrl.u32 %v287, 7
      %v289 = vsub.s32 0, %v288
      %v290 = vrot.slane %v280, %v289
      %v300 = vcombine.low %v252, %v253
      %v301 = vcombine.low %v254, %v255
      %v303 = vunpack.c.l.s4 1983009808
      %v304 = vunpack.c.0.s8 %v303
      %v305 = vlaneseq
      %v306 = vshrl.u32 %v305, 7
      %v307 = vsub.s32 %v304, %v306
      %v308 = vrot.slane %v300, %v307
      %v310 = vunpack.c.l.s4 1983009808
      %v311 = vunpack.c.0.s8 %v310
      %v312 = vlaneseq
      %v313 = vshrl.u32 %v312, 7
      %v314 = vsub.s32 %v311, %v313
      %v315 = vrot.slane %v301, %v314
      %v316 = vcombine.low %v308, %v315
      %v317 = vcombine.low %v256, %v257
      %v318 = vcombine.low %v258, %v259
      %v320 = vunpack.c.l.s4 1983009808
      %v321 = vunpack.c.0.s8 %v320
      %v322 = vlaneseq
      %v323 = vshrl.u32 %v322, 7
      %v324 = vsub.s32 %v321, %v323
      %v325 = vrot.slane %v317, %v324
      %v327 = vunpack.c.l.s4 1983009808
      %v328 = vunpack.c.0.s8 %v327
      %v329 = vlaneseq
      %v330 = vshrl.u32 %v329, 7
      %v331 = vsub.s32 %v328, %v330
      %v332 = vrot.slane %v318, %v331
      %v333 = vcombine.low %v325, %v332
      %vm334 = vcmask 261120
      %v335 = vsel %vm334, %v316, 0
      %v337 = vsel %vm334, %v333, 0
      %v340 = vsel %vm334, %v268, 0
      %v343 = vsel %vm334, %v269, 0
      %v346 = vsel %vm334, %v270, 0
      %v349 = vsel %vm334, %v271, 0
      %v352 = vsel %vm334, %v272, 0
      %v355 = vsel %vm334, %v273, 0
      %v358 = vsel %vm334, %v274, 0
      %v361 = vsel %vm334, %v275, 0
      %v364 = vsel %vm334, %v276, 0
      %v367 = vsel %vm334, %v277, 0
      %v370 = vsel %vm334, %v278, 0
      %v373 = vsel %vm334, %v279, 0
      %375 = vmatprep.subr.mxu0 0.0
      %376 = vmatpush1.xpose.msra.mxu0 0.0
      %377 = vmatprep.subr.mxu0 0.0
      %378 = vmatpush1.xpose.msra.mxu0 0.0
      %379 = vmatprep.subr.mxu0 0.0
      %380 = vmatpush1.xpose.msra.mxu0 0.0
      %381 = vmatprep.subr.mxu0 0.0
      %382 = vmatpush1.xpose.msra.mxu0 0.0
      %383 = vmatprep.subr.mxu0 0.0
      %384 = vmatpush1.xpose.msra.mxu0 %v373
      %385 = vmatprep.subr.mxu0 0.0
      %386 = vmatpush1.xpose.msra.mxu0 %v370
      %387 = vmatprep.subr.mxu0 0.0
      %388 = vmatpush1.xpose.msra.mxu0 %v367
      %389 = vmatprep.subr.mxu0 0.0
      %390 = vmatpush1.xpose.msra.mxu0 %v364
      %391 = vmatprep.subr.mxu0 0.0
      %392 = vmatpush1.xpose.msra.mxu0 %v361
      %393 = vmatprep.subr.mxu0 0.0
      %394 = vmatpush1.xpose.msra.mxu0 %v358
      %395 = vmatprep.subr.mxu0 0.0
      %396 = vmatpush1.xpose.msra.mxu0 %v355
      %397 = vmatprep.subr.mxu0 0.0
      %398 = vmatpush1.xpose.msra.mxu0 %v352
      %399 = vmatprep.subr.mxu0 0.0
      %400 = vmatpush1.xpose.msra.mxu0 %v349
      %401 = vmatprep.subr.mxu0 0.0
      %402 = vmatpush1.xpose.msra.mxu0 %v346
      %403 = vmatprep.subr.mxu0 0.0
      %404 = vmatpush1.xpose.msra.mxu0 %v343
      %405 = vmatprep.subr.mxu0 0.0
      %406 = vmatpush1.xpose.msra.mxu0 %v340
      %407 = vmatprep.subr.mxu0 0.0
      %408 = vmatpush2.xpose.msra.mxu0 0.0
      %409 = vmatprep.subr.mxu0 0.0
      %410 = vmatpush2.xpose.msra.mxu0 0.0
      %411 = vmatprep.subr.mxu0 0.0
      %412 = vmatpush2.xpose.msra.mxu0 0.0
      %413 = vmatprep.subr.mxu0 0.0
      %414 = vmatpush2.xpose.msra.mxu0 0.0
      %415 = vmatprep.subr.mxu0 0.0
      %416 = vmatpush2.xpose.msra.mxu0 0.0
      %417 = vmatprep.subr.mxu0 0.0
      %418 = vmatpush2.xpose.msra.mxu0 0.0
      %419 = vmatprep.subr.mxu0 0.0
      %420 = vmatpush2.xpose.msra.mxu0 0.0
      %421 = vmatprep.subr.mxu0 0.0
      %422 = vmatpush2.xpose.msra.mxu0 0.0
      %423 = vmatprep.subr.mxu0 0.0
      %424 = vmatpush2.xpose.msra.mxu0 0.0
      %425 = vmatprep.subr.mxu0 0.0
      %426 = vmatpush2.xpose.msra.mxu0 0.0
      %427 = vmatprep.subr.mxu0 0.0
      %428 = vmatpush2.xpose.msra.mxu0 0.0
      %429 = vmatprep.subr.mxu0 0.0
      %430 = vmatpush2.xpose.msra.mxu0 0.0
      %431 = vmatprep.subr.mxu0 0.0
      %432 = vmatpush2.xpose.msra.mxu0 0.0
      %433 = vmatprep.subr.mxu0 0.0
      %434 = vmatpush2.xpose.msra.mxu0 0.0
      %435 = vmatprep.subr.mxu0 0.0
      %436 = vmatpush2.xpose.msra.mxu0 0.0
      %437 = vmatprep.subr.mxu0 0.0
      %438 = vmatpush2.xpose.msra.mxu0 0.0
      %439 = vmatprep.mubr.f32.mxu0 0.0
      %440 = vmatmul.mubr.f32.gmra.mxu0 %v335
      %v441 = vpop.f32.mrf.mxu0
      %v442 = vadd.f32 %v290, %v441
      %v443 = vpop.f32.mrf.mxu0
      %444 = vmatprep.mubr.f32.mxu0 0.0
      %445 = vmatmul.mubr.f32.gmra.mxu0 %v337
      %v446 = vpop.f32.mrf.mxu0
      %v447 = vadd.f32 %v290, %v446
      %v448 = vpop.f32.mrf.mxu0
      %449 = vdwg.mxu0
      %v458 = vcombine.low %v260, %v261
      %v459 = vcombine.low %v262, %v263
      %v461 = vunpack.c.l.s4 1983009808
      %v462 = vunpack.c.0.s8 %v461
      %v463 = vlaneseq
      %v464 = vshrl.u32 %v463, 7
      %v465 = vsub.s32 %v462, %v464
      %v466 = vrot.slane %v458, %v465
      %v468 = vunpack.c.l.s4 1983009808
      %v469 = vunpack.c.0.s8 %v468
      %v470 = vlaneseq
      %v471 = vshrl.u32 %v470, 7
      %v472 = vsub.s32 %v469, %v471
      %v473 = vrot.slane %v459, %v472
      %v474 = vcombine.low %v466, %v473
      %v475 = vcombine.low %v264, %v265
      %v476 = vcombine.low %v266, %v267
      %v478 = vunpack.c.l.s4 1983009808
      %v479 = vunpack.c.0.s8 %v478
      %v480 = vlaneseq
      %v481 = vshrl.u32 %v480, 7
      %v482 = vsub.s32 %v479, %v481
      %v483 = vrot.slane %v475, %v482
      %v485 = vunpack.c.l.s4 1983009808
      %v486 = vunpack.c.0.s8 %v485
      %v487 = vlaneseq
      %v488 = vshrl.u32 %v487, 7
      %v489 = vsub.s32 %v486, %v488
      %v490 = vrot.slane %v476, %v489
      %v491 = vcombine.low %v483, %v490
      %v492 = vsel %vm334, %v474, 0
      %v494 = vsel %vm334, %v491, 0
      %496 = vmatprep.subr.mxu0 0.0
      %497 = vmatpush1.xpose.msra.mxu0 0.0
      %498 = vmatprep.subr.mxu0 0.0
      %499 = vmatpush1.xpose.msra.mxu0 0.0
      %500 = vmatprep.subr.mxu0 0.0
      %501 = vmatpush1.xpose.msra.mxu0 0.0
      %502 = vmatprep.subr.mxu0 0.0
      %503 = vmatpush1.xpose.msra.mxu0 0.0
      %504 = vmatprep.subr.mxu0 0.0
      %505 = vmatpush1.xpose.msra.mxu0 0.0
      %506 = vmatprep.subr.mxu0 0.0
      %507 = vmatpush1.xpose.msra.mxu0 0.0
      %508 = vmatprep.subr.mxu0 0.0
      %509 = vmatpush1.xpose.msra.mxu0 0.0
      %510 = vmatprep.subr.mxu0 0.0
      %511 = vmatpush1.xpose.msra.mxu0 0.0
      %512 = vmatprep.subr.mxu0 0.0
      %513 = vmatpush1.xpose.msra.mxu0 0.0
      %514 = vmatprep.subr.mxu0 0.0
      %515 = vmatpush1.xpose.msra.mxu0 0.0
      %516 = vmatprep.subr.mxu0 0.0
      %517 = vmatpush1.xpose.msra.mxu0 0.0
      %518 = vmatprep.subr.mxu0 0.0
      %519 = vmatpush1.xpose.msra.mxu0 0.0
      %520 = vmatprep.subr.mxu0 0.0
      %521 = vmatpush1.xpose.msra.mxu0 %v349
      %522 = vmatprep.subr.mxu0 0.0
      %523 = vmatpush1.xpose.msra.mxu0 %v346
      %524 = vmatprep.subr.mxu0 0.0
      %525 = vmatpush1.xpose.msra.mxu0 %v343
      %526 = vmatprep.subr.mxu0 0.0
      %527 = vmatpush1.xpose.msra.mxu0 %v340
      %528 = vmatprep.subr.mxu0 0.0
      %529 = vmatpush2.xpose.msra.mxu0 0.0
      %530 = vmatprep.subr.mxu0 0.0
      %531 = vmatpush2.xpose.msra.mxu0 0.0
      %532 = vmatprep.subr.mxu0 0.0
      %533 = vmatpush2.xpose.msra.mxu0 0.0
      %534 = vmatprep.subr.mxu0 0.0
      %535 = vmatpush2.xpose.msra.mxu0 0.0
      %536 = vmatprep.subr.mxu0 0.0
      %537 = vmatpush2.xpose.msra.mxu0 0.0
      %538 = vmatprep.subr.mxu0 0.0
      %539 = vmatpush2.xpose.msra.mxu0 0.0
      %540 = vmatprep.subr.mxu0 0.0
      %541 = vmatpush2.xpose.msra.mxu0 0.0
      %542 = vmatprep.subr.mxu0 0.0
      %543 = vmatpush2.xpose.msra.mxu0 0.0
      %544 = vmatprep.subr.mxu0 0.0
      %545 = vmatpush2.xpose.msra.mxu0 0.0
      %546 = vmatprep.subr.mxu0 0.0
      %547 = vmatpush2.xpose.msra.mxu0 0.0
      %548 = vmatprep.subr.mxu0 0.0
      %549 = vmatpush2.xpose.msra.mxu0 0.0
      %550 = vmatprep.subr.mxu0 0.0
      %551 = vmatpush2.xpose.msra.mxu0 0.0
      %552 = vmatprep.subr.mxu0 0.0
      %553 = vmatpush2.xpose.msra.mxu0 0.0
      %554 = vmatprep.subr.mxu0 0.0
      %555 = vmatpush2.xpose.msra.mxu0 0.0
      %556 = vmatprep.subr.mxu0 0.0
      %557 = vmatpush2.xpose.msra.mxu0 0.0
      %558 = vmatprep.subr.mxu0 0.0
      %559 = vmatpush2.xpose.msra.mxu0 0.0
      %560 = vmatprep.mubr.f32.mxu0 0.0
      %561 = vmatmul.mubr.f32.gmra.mxu0 %v492
      %v562 = vpop.f32.mrf.mxu0
      %v563 = vadd.f32 %v290, %v562
      %v564 = vpop.f32.mrf.mxu0
      %565 = vmatprep.mubr.f32.mxu0 0.0
      %566 = vmatmul.mubr.f32.gmra.mxu0 %v494
      %v567 = vpop.f32.mrf.mxu0
      %v568 = vadd.f32 %v290, %v567
      %v569 = vpop.f32.mrf.mxu0
      %570 = vdwg.mxu0
      %v571 = vmul.f32 %v563, 0.35355338
      %v572 = vmul.f32 %v568, 0.35355338
      %v575 = vcombine.high %v442, %v442
      %v577 = vunpack.c.l.s4 1983009808
      %v578 = vunpack.c.0.s8 %v577
      %v579 = vlaneseq
      %v580 = vshrl.u32 %v579, 7
      %v581 = vsub.s32 %v578, %v580
      %v582 = vrot.slane %v442, %v581
      %v584 = vunpack.c.l.s4 1983009808
      %v585 = vunpack.c.0.s8 %v584
      %v586 = vlaneseq
      %v587 = vshrl.u32 %v586, 7
      %v588 = vsub.s32 %v585, %v587
      %v589 = vrot.slane %v575, %v588
      %v590 = vcombine.high %v582, %v582
      %v591 = vcombine.high %v589, %v589
      %v592 = vcombine.high %v447, %v447
      %v594 = vunpack.c.l.s4 1983009808
      %v595 = vunpack.c.0.s8 %v594
      %v596 = vlaneseq
      %v597 = vshrl.u32 %v596, 7
      %v598 = vsub.s32 %v595, %v597
      %v599 = vrot.slane %v447, %v598
      %v601 = vunpack.c.l.s4 1983009808
      %v602 = vunpack.c.0.s8 %v601
      %v603 = vlaneseq
      %v604 = vshrl.u32 %v603, 7
      %v605 = vsub.s32 %v602, %v604
      %v606 = vrot.slane %v592, %v605
      %v607 = vcombine.high %v599, %v599
      %v608 = vcombine.high %v606, %v606
      %v611 = vcombine.high %v571, %v571
      %v613 = vunpack.c.l.s4 1983009808
      %v614 = vunpack.c.0.s8 %v613
      %v615 = vlaneseq
      %v616 = vshrl.u32 %v615, 7
      %v617 = vsub.s32 %v614, %v616
      %v618 = vrot.slane %v571, %v617
      %v620 = vunpack.c.l.s4 1983009808
      %v621 = vunpack.c.0.s8 %v620
      %v622 = vlaneseq
      %v623 = vshrl.u32 %v622, 7
      %v624 = vsub.s32 %v621, %v623
      %v625 = vrot.slane %v611, %v624
      %v626 = vcombine.high %v618, %v618
      %v627 = vcombine.high %v625, %v625
      %v628 = vcombine.high %v572, %v572
      %v630 = vunpack.c.l.s4 1983009808
      %v631 = vunpack.c.0.s8 %v630
      %v632 = vlaneseq
      %v633 = vshrl.u32 %v632, 7
      %v634 = vsub.s32 %v631, %v633
      %v635 = vrot.slane %v572, %v634
      %v637 = vunpack.c.l.s4 1983009808
      %v638 = vunpack.c.0.s8 %v637
      %v639 = vlaneseq
      %v640 = vshrl.u32 %v639, 7
      %v641 = vsub.s32 %v638, %v640
      %v642 = vrot.slane %v628, %v641
      %v643 = vcombine.high %v635, %v635
      %v644 = vcombine.high %v642, %v642
      %v645 = vlaneseq
      %v646 = vshrl.u32 %v645, 7
      %v647 = vsub.s32 0, %v646
      %v648 = vrot.slane %v582, %v647
      %v649 = vlaneseq
      %v650 = vshrl.u32 %v649, 7
      %v651 = vsub.s32 0, %v650
      %v652 = vrot.slane %v590, %v651
      %v653 = vlaneseq
      %v654 = vshrl.u32 %v653, 7
      %v655 = vsub.s32 0, %v654
      %v656 = vrot.slane %v589, %v655
      %v657 = vlaneseq
      %v658 = vshrl.u32 %v657, 7
      %v659 = vsub.s32 0, %v658
      %v660 = vrot.slane %v591, %v659
      %v661 = vlaneseq
      %v662 = vshrl.u32 %v661, 7
      %v663 = vsub.s32 0, %v662
      %v664 = vrot.slane %v599, %v663
      %v665 = vlaneseq
      %v666 = vshrl.u32 %v665, 7
      %v667 = vsub.s32 0, %v666
      %v668 = vrot.slane %v607, %v667
      %v669 = vlaneseq
      %v670 = vshrl.u32 %v669, 7
      %v671 = vsub.s32 0, %v670
      %v672 = vrot.slane %v606, %v671
      %v673 = vlaneseq
      %v674 = vshrl.u32 %v673, 7
      %v675 = vsub.s32 0, %v674
      %v676 = vrot.slane %v608, %v675
      %vm677 = vcmask 1041409
      %v678 = vsel %vm677, %v652, %v648
      %vm679 = vcmask 1042434
      %v680 = vsel %vm679, %v656, %v678
      %vm681 = vcmask 1043459
      %v682 = vsel %vm681, %v660, %v680
      %vm683 = vcmask 1044484
      %v684 = vsel %vm683, %v664, %v682
      %vm685 = vcmask 1045509
      %v686 = vsel %vm685, %v668, %v684
      %vm687 = vcmask 1046534
      %v688 = vsel %vm687, %v672, %v686
      %vm689 = vcmask 1047559
      %v690 = vsel %vm689, %v676, %v688
      %vm692 = vcmask 785408
      %693 = vst.msk [vmem:[#allocation2] sm:$0xff] %vm692, %v690
      %v694 = vlaneseq
      %v695 = vshrl.u32 %v694, 7
      %v696 = vsub.s32 0, %v695
      %v697 = vrot.slane %v618, %v696
      %v698 = vlaneseq
      %v699 = vshrl.u32 %v698, 7
      %v700 = vsub.s32 0, %v699
      %v701 = vrot.slane %v626, %v700
      %v702 = vlaneseq
      %v703 = vshrl.u32 %v702, 7
      %v704 = vsub.s32 0, %v703
      %v705 = vrot.slane %v625, %v704
      %v706 = vlaneseq
      %v707 = vshrl.u32 %v706, 7
      %v708 = vsub.s32 0, %v707
      %v709 = vrot.slane %v627, %v708
      %v710 = vlaneseq
      %v711 = vshrl.u32 %v710, 7
      %v712 = vsub.s32 0, %v711
      %v713 = vrot.slane %v635, %v712
      %v714 = vlaneseq
      %v715 = vshrl.u32 %v714, 7
      %v716 = vsub.s32 0, %v715
      %v717 = vrot.slane %v643, %v716
      %v718 = vlaneseq
      %v719 = vshrl.u32 %v718, 7
      %v720 = vsub.s32 0, %v719
      %v721 = vrot.slane %v642, %v720
      %v722 = vlaneseq
      %v723 = vshrl.u32 %v722, 7
      %v724 = vsub.s32 0, %v723
      %v725 = vrot.slane %v644, %v724
      %v726 = vsel %vm677, %v701, %v697
      %v727 = vsel %vm679, %v705, %v726
      %v728 = vsel %vm681, %v709, %v727
      %v729 = vsel %vm683, %v713, %v728
      %v730 = vsel %vm685, %v717, %v729
      %v731 = vsel %vm687, %v721, %v730
      %v732 = vsel %vm689, %v725, %v731
      %734 = vst.msk [vmem:[#allocation3] sm:$0xff] %vm334, %v732
      %v735 = vlaneseq
      %v736 = vshrl.u32 %v735, 7
      %v737 = vsub.s32 1, %v736
      %v738 = vrot.slane %v582, %v737
      %v739 = vlaneseq
      %v740 = vshrl.u32 %v739, 7
      %v741 = vsub.s32 1, %v740
      %v742 = vrot.slane %v590, %v741
      %v743 = vlaneseq
      %v744 = vshrl.u32 %v743, 7
      %v745 = vsub.s32 1, %v744
      %v746 = vrot.slane %v589, %v745
      %v747 = vlaneseq
      %v748 = vshrl.u32 %v747, 7
      %v749 = vsub.s32 1, %v748
      %v750 = vrot.slane %v591, %v749
      %v751 = vlaneseq
      %v752 = vshrl.u32 %v751, 7
      %v753 = vsub.s32 1, %v752
      %v754 = vrot.slane %v599, %v753
      %v755 = vlaneseq
      %v756 = vshrl.u32 %v755, 7
      %v757 = vsub.s32 1, %v756
      %v758 = vrot.slane %v607, %v757
      %v759 = vlaneseq
      %v760 = vshrl.u32 %v759, 7
      %v761 = vsub.s32 1, %v760
      %v762 = vrot.slane %v606, %v761
      %v763 = vlaneseq
      %v764 = vshrl.u32 %v763, 7
      %v765 = vsub.s32 1, %v764
      %v766 = vrot.slane %v608, %v765
      %v767 = vsel %vm679, %v742, %v738
      %v768 = vsel %vm681, %v746, %v767
      %v769 = vsel %vm683, %v750, %v768
      %v770 = vsel %vm685, %v754, %v769
      %v771 = vsel %vm687, %v758, %v770
      %v772 = vsel %vm689, %v762, %v771
      %s775 = scalar_lea.vmem [#allocation2], 8
      %vm776 = vcmask 785409
      %777 = vst.msk [vmem:[%s775 - $0x1] sm:$0xfe] %vm776, %v772
      %vm778 = vcmask 778240
      %779 = vst.msk [vmem:[%s775 + $0x7] sm:$0x1] %vm778, %v766
      %v780 = vlaneseq
      %v781 = vshrl.u32 %v780, 7
      %v782 = vsub.s32 1, %v781
      %v783 = vrot.slane %v618, %v782
      %v784 = vlaneseq
      %v785 = vshrl.u32 %v784, 7
      %v786 = vsub.s32 1, %v785
      %v787 = vrot.slane %v626, %v786
      %v788 = vlaneseq
      %v789 = vshrl.u32 %v788, 7
      %v790 = vsub.s32 1, %v789
      %v791 = vrot.slane %v625, %v790
      %v792 = vlaneseq
      %v793 = vshrl.u32 %v792, 7
      %v794 = vsub.s32 1, %v793
      %v795 = vrot.slane %v627, %v794
      %v796 = vlaneseq
      %v797 = vshrl.u32 %v796, 7
      %v798 = vsub.s32 1, %v797
      %v799 = vrot.slane %v635, %v798
      %v800 = vlaneseq
      %v801 = vshrl.u32 %v800, 7
      %v802 = vsub.s32 1, %v801
      %v803 = vrot.slane %v643, %v802
      %v804 = vlaneseq
      %v805 = vshrl.u32 %v804, 7
      %v806 = vsub.s32 1, %v805
      %v807 = vrot.slane %v642, %v806
      %v808 = vlaneseq
      %v809 = vshrl.u32 %v808, 7
      %v810 = vsub.s32 1, %v809
      %v811 = vrot.slane %v644, %v810
      %v812 = vsel %vm679, %v787, %v783
      %v813 = vsel %vm681, %v791, %v812
      %v814 = vsel %vm683, %v795, %v813
      %v815 = vsel %vm685, %v799, %v814
      %v816 = vsel %vm687, %v803, %v815
      %v817 = vsel %vm689, %v807, %v816
      %s820 = scalar_lea.vmem [#allocation3], 8
      %vm821 = vcmask 261121
      %822 = vst.msk [vmem:[%s820 - $0x1] sm:$0xfe] %vm821, %v817
      %vm823 = vcmask 253952
      %824 = vst.msk [vmem:[%s820 + $0x7] sm:$0x1] %vm823, %v811
      %v825 = vld [vmem:[#allocation2] sm:$0xff]
      %v826 = vmul.f32 %v825, 0.35355338
      %828 = vrot.lane.b32.xlu0 %v825, 96
      %v829 = vpop.permute.xlu0 %828
      %vm830 = vcmask 64512
      %v832 = vsel %vm830, %v826, 0
      %v834 = vsel %vm830, %v829, 0
      %836 = vmatprep.subr.mxu0 0.0
      %837 = vmatpush1.xpose.msra.mxu0 0.0
      %838 = vmatprep.subr.mxu0 0.0
      %839 = vmatpush1.xpose.msra.mxu0 0.0
      %840 = vmatprep.subr.mxu0 0.0
      %841 = vmatpush1.xpose.msra.mxu0 0.0
      %842 = vmatprep.subr.mxu0 0.0
      %843 = vmatpush1.xpose.msra.mxu0 0.0
      %844 = vmatprep.subr.mxu0 0.0
      %845 = vmatpush1.xpose.msra.mxu0 0.0
      %846 = vmatprep.subr.mxu0 0.0
      %847 = vmatpush1.xpose.msra.mxu0 0.0
      %848 = vmatprep.subr.mxu0 0.0
      %849 = vmatpush1.xpose.msra.mxu0 0.0
      %850 = vmatprep.subr.mxu0 0.0
      %851 = vmatpush1.xpose.msra.mxu0 0.0
      %852 = vmatprep.subr.mxu0 0.0
      %853 = vmatpush1.xpose.msra.mxu0 0.0
      %854 = vmatprep.subr.mxu0 0.0
      %855 = vmatpush1.xpose.msra.mxu0 0.0
      %856 = vmatprep.subr.mxu0 0.0
      %857 = vmatpush1.xpose.msra.mxu0 0.0
      %858 = vmatprep.subr.mxu0 0.0
      %859 = vmatpush1.xpose.msra.mxu0 0.0
      %860 = vmatprep.subr.mxu0 0.0
      %861 = vmatpush1.xpose.msra.mxu0 0.0
      %862 = vmatprep.subr.mxu0 0.0
      %863 = vmatpush1.xpose.msra.mxu0 0.0
      %864 = vmatprep.subr.mxu0 0.0
      %865 = vmatpush1.xpose.msra.mxu0 0.0
      %866 = vmatprep.subr.mxu0 0.0
      %867 = vmatpush1.xpose.msra.mxu0 %v834
      %868 = vmatprep.subr.mxu0 0.0
      %869 = vmatpush2.xpose.msra.mxu0 0.0
      %870 = vmatprep.subr.mxu0 0.0
      %871 = vmatpush2.xpose.msra.mxu0 0.0
      %872 = vmatprep.subr.mxu0 0.0
      %873 = vmatpush2.xpose.msra.mxu0 0.0
      %874 = vmatprep.subr.mxu0 0.0
      %875 = vmatpush2.xpose.msra.mxu0 0.0
      %876 = vmatprep.subr.mxu0 0.0
      %877 = vmatpush2.xpose.msra.mxu0 0.0
      %878 = vmatprep.subr.mxu0 0.0
      %879 = vmatpush2.xpose.msra.mxu0 0.0
      %880 = vmatprep.subr.mxu0 0.0
      %881 = vmatpush2.xpose.msra.mxu0 0.0
      %882 = vmatprep.subr.mxu0 0.0
      %883 = vmatpush2.xpose.msra.mxu0 0.0
      %884 = vmatprep.subr.mxu0 0.0
      %885 = vmatpush2.xpose.msra.mxu0 0.0
      %886 = vmatprep.subr.mxu0 0.0
      %887 = vmatpush2.xpose.msra.mxu0 0.0
      %888 = vmatprep.subr.mxu0 0.0
      %889 = vmatpush2.xpose.msra.mxu0 0.0
      %890 = vmatprep.subr.mxu0 0.0
      %891 = vmatpush2.xpose.msra.mxu0 0.0
      %892 = vmatprep.subr.mxu0 0.0
      %893 = vmatpush2.xpose.msra.mxu0 0.0
      %894 = vmatprep.subr.mxu0 0.0
      %895 = vmatpush2.xpose.msra.mxu0 0.0
      %896 = vmatprep.subr.mxu0 0.0
      %897 = vmatpush2.xpose.msra.mxu0 0.0
      %898 = vmatprep.subr.mxu0 0.0
      %899 = vmatpush2.xpose.msra.mxu0 0.0
      %900 = vmatprep.mubr.f32.mxu0 0.0
      %901 = vmatmul.mubr.f32.gmra.mxu0 %v832
      %v902 = vpop.f32.mrf.mxu0
      %v903 = vadd.f32 0.0, %v902
      %v904 = vpop.f32.mrf.mxu0
      %905 = vdwg.mxu0
      %v906 = vsel %vm830, %v903, -inf
      %907 = vmax.xlane.f32.xlu0 %v906
      %v908 = vpop.xlane.xlu0 %907
      %v909 = vsub.f32 %v903, %v908
      %v910 = vmul.f32 %v909, 1.442695
      %v911 = vpow.pop %v910
      %v912 = vsel %vm830, %v911, 0.0
      %913 = vadd.xlane.f32.xlu0 %v912
      %v914 = vpop.xlane.xlu0 %913
      %v915 = vrcp.pop %v914
      %v916 = vmul.f32 %v911, %v915
      %v917 = vadd.f32 %v916, 0.0
      %918 = vrot.lane.b32.xlu0 %v826, 120
      %v919 = vpop.permute.xlu0 %918
      %920 = vrot.lane.b32.xlu0 %v825, 88
      %v921 = vpop.permute.xlu0 %920
      %v922 = vsel %vm830, %v919, 0
      %v924 = vsel %vm830, %v921, 0
      %926 = vmatprep.subr.mxu0 0.0
      %927 = vmatpush1.xpose.msra.mxu0 0.0
      %928 = vmatprep.subr.mxu0 0.0
      %929 = vmatpush1.xpose.msra.mxu0 0.0
      %930 = vmatprep.subr.mxu0 0.0
      %931 = vmatpush1.xpose.msra.mxu0 0.0
      %932 = vmatprep.subr.mxu0 0.0
      %933 = vmatpush1.xpose.msra.mxu0 0.0
      %934 = vmatprep.subr.mxu0 0.0
      %935 = vmatpush1.xpose.msra.mxu0 0.0
      %936 = vmatprep.subr.mxu0 0.0
      %937 = vmatpush1.xpose.msra.mxu0 0.0
      %938 = vmatprep.subr.mxu0 0.0
      %939 = vmatpush1.xpose.msra.mxu0 0.0
      %940 = vmatprep.subr.mxu0 0.0
      %941 = vmatpush1.xpose.msra.mxu0 0.0
      %942 = vmatprep.subr.mxu0 0.0
      %943 = vmatpush1.xpose.msra.mxu0 0.0
      %944 = vmatprep.subr.mxu0 0.0
      %945 = vmatpush1.xpose.msra.mxu0 0.0
      %946 = vmatprep.subr.mxu0 0.0
      %947 = vmatpush1.xpose.msra.mxu0 0.0
      %948 = vmatprep.subr.mxu0 0.0
      %949 = vmatpush1.xpose.msra.mxu0 0.0
      %950 = vmatprep.subr.mxu0 0.0
      %951 = vmatpush1.xpose.msra.mxu0 0.0
      %952 = vmatprep.subr.mxu0 0.0
      %953 = vmatpush1.xpose.msra.mxu0 0.0
      %954 = vmatprep.subr.mxu0 0.0
      %955 = vmatpush1.xpose.msra.mxu0 0.0
      %956 = vmatprep.subr.mxu0 0.0
      %957 = vmatpush1.xpose.msra.mxu0 %v924
      %958 = vmatprep.subr.mxu0 0.0
      %959 = vmatpush2.xpose.msra.mxu0 0.0
      %960 = vmatprep.subr.mxu0 0.0
      %961 = vmatpush2.xpose.msra.mxu0 0.0
      %962 = vmatprep.subr.mxu0 0.0
      %963 = vmatpush2.xpose.msra.mxu0 0.0
      %964 = vmatprep.subr.mxu0 0.0
      %965 = vmatpush2.xpose.msra.mxu0 0.0
      %966 = vmatprep.subr.mxu0 0.0
      %967 = vmatpush2.xpose.msra.mxu0 0.0
      %968 = vmatprep.subr.mxu0 0.0
      %969 = vmatpush2.xpose.msra.mxu0 0.0
      %970 = vmatprep.subr.mxu0 0.0
      %971 = vmatpush2.xpose.msra.mxu0 0.0
      %972 = vmatprep.subr.mxu0 0.0
      %973 = vmatpush2.xpose.msra.mxu0 0.0
      %974 = vmatprep.subr.mxu0 0.0
      %975 = vmatpush2.xpose.msra.mxu0 0.0
      %976 = vmatprep.subr.mxu0 0.0
      %977 = vmatpush2.xpose.msra.mxu0 0.0
      %978 = vmatprep.subr.mxu0 0.0
      %979 = vmatpush2.xpose.msra.mxu0 0.0
      %980 = vmatprep.subr.mxu0 0.0
      %981 = vmatpush2.xpose.msra.mxu0 0.0
      %982 = vmatprep.subr.mxu0 0.0
      %983 = vmatpush2.xpose.msra.mxu0 0.0
      %984 = vmatprep.subr.mxu0 0.0
      %985 = vmatpush2.xpose.msra.mxu0 0.0
      %986 = vmatprep.subr.mxu0 0.0
      %987 = vmatpush2.xpose.msra.mxu0 0.0
      %988 = vmatprep.subr.mxu0 0.0
      %989 = vmatpush2.xpose.msra.mxu0 0.0
      %990 = vmatprep.mubr.f32.mxu0 0.0
      %991 = vmatmul.mubr.f32.gmra.mxu0 %v922
      %v992 = vpop.f32.mrf.mxu0
      %v993 = vadd.f32 0.0, %v992
      %v994 = vpop.f32.mrf.mxu0
      %995 = vdwg.mxu0
      %v996 = vsel %vm830, %v993, -inf
      %997 = vmax.xlane.f32.xlu0 %v996
      %v998 = vpop.xlane.xlu0 %997
      %v999 = vsub.f32 %v993, %v998
      %v1000 = vmul.f32 %v999, 1.442695
      %v1001 = vpow.pop %v1000
      %v1002 = vsel %vm830, %v1001, 0.0
      %1003 = vadd.xlane.f32.xlu0 %v1002
      %v1004 = vpop.xlane.xlu0 %1003
      %v1005 = vrcp.pop %v1004
      %v1006 = vmul.f32 %v1001, %v1005
      %v1007 = vadd.f32 %v917, %v1006
      %1008 = vrot.lane.b32.xlu0 %v826, 112
      %v1009 = vpop.permute.xlu0 %1008
      %1010 = vrot.lane.b32.xlu0 %v825, 80
      %v1011 = vpop.permute.xlu0 %1010
      %v1012 = vsel %vm830, %v1009, 0
      %v1014 = vsel %vm830, %v1011, 0
      %1016 = vmatprep.subr.mxu0 0.0
      %1017 = vmatpush1.xpose.msra.mxu0 0.0
      %1018 = vmatprep.subr.mxu0 0.0
      %1019 = vmatpush1.xpose.msra.mxu0 0.0
      %1020 = vmatprep.subr.mxu0 0.0
      %1021 = vmatpush1.xpose.msra.mxu0 0.0
      %1022 = vmatprep.subr.mxu0 0.0
      %1023 = vmatpush1.xpose.msra.mxu0 0.0
      %1024 = vmatprep.subr.mxu0 0.0
      %1025 = vmatpush1.xpose.msra.mxu0 0.0
      %1026 = vmatprep.subr.mxu0 0.0
      %1027 = vmatpush1.xpose.msra.mxu0 0.0
      %1028 = vmatprep.subr.mxu0 0.0
      %1029 = vmatpush1.xpose.msra.mxu0 0.0
      %1030 = vmatprep.subr.mxu0 0.0
      %1031 = vmatpush1.xpose.msra.mxu0 0.0
      %1032 = vmatprep.subr.mxu0 0.0
      %1033 = vmatpush1.xpose.msra.mxu0 0.0
      %1034 = vmatprep.subr.mxu0 0.0
      %1035 = vmatpush1.xpose.msra.mxu0 0.0
      %1036 = vmatprep.subr.mxu0 0.0
      %1037 = vmatpush1.xpose.msra.mxu0 0.0
      %1038 = vmatprep.subr.mxu0 0.0
      %1039 = vmatpush1.xpose.msra.mxu0 0.0
      %1040 = vmatprep.subr.mxu0 0.0
      %1041 = vmatpush1.xpose.msra.mxu0 0.0
      %1042 = vmatprep.subr.mxu0 0.0
      %1043 = vmatpush1.xpose.msra.mxu0 0.0
      %1044 = vmatprep.subr.mxu0 0.0
      %1045 = vmatpush1.xpose.msra.mxu0 0.0
      %1046 = vmatprep.subr.mxu0 0.0
      %1047 = vmatpush1.xpose.msra.mxu0 %v1014
      %1048 = vmatprep.subr.mxu0 0.0
      %1049 = vmatpush2.xpose.msra.mxu0 0.0
      %1050 = vmatprep.subr.mxu0 0.0
      %1051 = vmatpush2.xpose.msra.mxu0 0.0
      %1052 = vmatprep.subr.mxu0 0.0
      %1053 = vmatpush2.xpose.msra.mxu0 0.0
      %1054 = vmatprep.subr.mxu0 0.0
      %1055 = vmatpush2.xpose.msra.mxu0 0.0
      %1056 = vmatprep.subr.mxu0 0.0
      %1057 = vmatpush2.xpose.msra.mxu0 0.0
      %1058 = vmatprep.subr.mxu0 0.0
      %1059 = vmatpush2.xpose.msra.mxu0 0.0
      %1060 = vmatprep.subr.mxu0 0.0
      %1061 = vmatpush2.xpose.msra.mxu0 0.0
      %1062 = vmatprep.subr.mxu0 0.0
      %1063 = vmatpush2.xpose.msra.mxu0 0.0
      %1064 = vmatprep.subr.mxu0 0.0
      %1065 = vmatpush2.xpose.msra.mxu0 0.0
      %1066 = vmatprep.subr.mxu0 0.0
      %1067 = vmatpush2.xpose.msra.mxu0 0.0
      %1068 = vmatprep.subr.mxu0 0.0
      %1069 = vmatpush2.xpose.msra.mxu0 0.0
      %1070 = vmatprep.subr.mxu0 0.0
      %1071 = vmatpush2.xpose.msra.mxu0 0.0
      %1072 = vmatprep.subr.mxu0 0.0
      %1073 = vmatpush2.xpose.msra.mxu0 0.0
      %1074 = vmatprep.subr.mxu0 0.0
      %1075 = vmatpush2.xpose.msra.mxu0 0.0
      %1076 = vmatprep.subr.mxu0 0.0
      %1077 = vmatpush2.xpose.msra.mxu0 0.0
      %1078 = vmatprep.subr.mxu0 0.0
      %1079 = vmatpush2.xpose.msra.mxu0 0.0
      %1080 = vmatprep.mubr.f32.mxu0 0.0
      %1081 = vmatmul.mubr.f32.gmra.mxu0 %v1012
      %v1082 = vpop.f32.mrf.mxu0
      %v1083 = vadd.f32 0.0, %v1082
      %v1084 = vpop.f32.mrf.mxu0
      %1085 = vdwg.mxu0
      %v1086 = vsel %vm830, %v1083, -inf
      %1087 = vmax.xlane.f32.xlu0 %v1086
      %v1088 = vpop.xlane.xlu0 %1087
      %v1089 = vsub.f32 %v1083, %v1088
      %v1090 = vmul.f32 %v1089, 1.442695
      %v1091 = vpow.pop %v1090
      %v1092 = vsel %vm830, %v1091, 0.0
      %1093 = vadd.xlane.f32.xlu0 %v1092
      %v1094 = vpop.xlane.xlu0 %1093
      %v1095 = vrcp.pop %v1094
      %v1096 = vmul.f32 %v1091, %v1095
      %v1097 = vadd.f32 %v1007, %v1096
      %1098 = vrot.lane.b32.xlu0 %v826, 104
      %v1099 = vpop.permute.xlu0 %1098
      %1100 = vrot.lane.b32.xlu0 %v825, 72
      %v1101 = vpop.permute.xlu0 %1100
      %v1102 = vsel %vm830, %v1099, 0
      %v1104 = vsel %vm830, %v1101, 0
      %1106 = vmatprep.subr.mxu0 0.0
      %1107 = vmatpush1.xpose.msra.mxu0 0.0
      %1108 = vmatprep.subr.mxu0 0.0
      %1109 = vmatpush1.xpose.msra.mxu0 0.0
      %1110 = vmatprep.subr.mxu0 0.0
      %1111 = vmatpush1.xpose.msra.mxu0 0.0
      %1112 = vmatprep.subr.mxu0 0.0
      %1113 = vmatpush1.xpose.msra.mxu0 0.0
      %1114 = vmatprep.subr.mxu0 0.0
      %1115 = vmatpush1.xpose.msra.mxu0 0.0
      %1116 = vmatprep.subr.mxu0 0.0
      %1117 = vmatpush1.xpose.msra.mxu0 0.0
      %1118 = vmatprep.subr.mxu0 0.0
      %1119 = vmatpush1.xpose.msra.mxu0 0.0
      %1120 = vmatprep.subr.mxu0 0.0
      %1121 = vmatpush1.xpose.msra.mxu0 0.0
      %1122 = vmatprep.subr.mxu0 0.0
      %1123 = vmatpush1.xpose.msra.mxu0 0.0
      %1124 = vmatprep.subr.mxu0 0.0
      %1125 = vmatpush1.xpose.msra.mxu0 0.0
      %1126 = vmatprep.subr.mxu0 0.0
      %1127 = vmatpush1.xpose.msra.mxu0 0.0
      %1128 = vmatprep.subr.mxu0 0.0
      %1129 = vmatpush1.xpose.msra.mxu0 0.0
      %1130 = vmatprep.subr.mxu0 0.0
      %1131 = vmatpush1.xpose.msra.mxu0 0.0
      %1132 = vmatprep.subr.mxu0 0.0
      %1133 = vmatpush1.xpose.msra.mxu0 0.0
      %1134 = vmatprep.subr.mxu0 0.0
      %1135 = vmatpush1.xpose.msra.mxu0 0.0
      %1136 = vmatprep.subr.mxu0 0.0
      %1137 = vmatpush1.xpose.msra.mxu0 %v1104
      %1138 = vmatprep.subr.mxu0 0.0
      %1139 = vmatpush2.xpose.msra.mxu0 0.0
      %1140 = vmatprep.subr.mxu0 0.0
      %1141 = vmatpush2.xpose.msra.mxu0 0.0
      %1142 = vmatprep.subr.mxu0 0.0
      %1143 = vmatpush2.xpose.msra.mxu0 0.0
      %1144 = vmatprep.subr.mxu0 0.0
      %1145 = vmatpush2.xpose.msra.mxu0 0.0
      %1146 = vmatprep.subr.mxu0 0.0
      %1147 = vmatpush2.xpose.msra.mxu0 0.0
      %1148 = vmatprep.subr.mxu0 0.0
      %1149 = vmatpush2.xpose.msra.mxu0 0.0
      %1150 = vmatprep.subr.mxu0 0.0
      %1151 = vmatpush2.xpose.msra.mxu0 0.0
      %1152 = vmatprep.subr.mxu0 0.0
      %1153 = vmatpush2.xpose.msra.mxu0 0.0
      %1154 = vmatprep.subr.mxu0 0.0
      %1155 = vmatpush2.xpose.msra.mxu0 0.0
      %1156 = vmatprep.subr.mxu0 0.0
      %1157 = vmatpush2.xpose.msra.mxu0 0.0
      %1158 = vmatprep.subr.mxu0 0.0
      %1159 = vmatpush2.xpose.msra.mxu0 0.0
      %1160 = vmatprep.subr.mxu0 0.0
      %1161 = vmatpush2.xpose.msra.mxu0 0.0
      %1162 = vmatprep.subr.mxu0 0.0
      %1163 = vmatpush2.xpose.msra.mxu0 0.0
      %1164 = vmatprep.subr.mxu0 0.0
      %1165 = vmatpush2.xpose.msra.mxu0 0.0
      %1166 = vmatprep.subr.mxu0 0.0
      %1167 = vmatpush2.xpose.msra.mxu0 0.0
      %1168 = vmatprep.subr.mxu0 0.0
      %1169 = vmatpush2.xpose.msra.mxu0 0.0
      %1170 = vmatprep.mubr.f32.mxu0 0.0
      %1171 = vmatmul.mubr.f32.gmra.mxu0 %v1102
      %v1172 = vpop.f32.mrf.mxu0
      %v1173 = vadd.f32 0.0, %v1172
      %v1174 = vpop.f32.mrf.mxu0
      %1175 = vdwg.mxu0
      %v1176 = vsel %vm830, %v1173, -inf
      %1177 = vmax.xlane.f32.xlu0 %v1176
      %v1178 = vpop.xlane.xlu0 %1177
      %v1179 = vsub.f32 %v1173, %v1178
      %v1180 = vmul.f32 %v1179, 1.442695
      %v1181 = vpow.pop %v1180
      %v1182 = vsel %vm830, %v1181, 0.0
      %1183 = vadd.xlane.f32.xlu0 %v1182
      %v1184 = vpop.xlane.xlu0 %1183
      %v1185 = vrcp.pop %v1184
      %v1186 = vmul.f32 %v1181, %v1185
      %v1187 = vadd.f32 %v1097, %v1186
      %v1188 = vmul.f32 %v1187, 0.25
      %1189 = vst.msk [vmem:[#allocation4] sm:$0xff] %vm830, %v1188
      %v1190 = vld [vmem:[%s775] sm:$0xff]
      %v1191 = vmul.f32 %v1190, 0.35355338
      %1193 = vrot.lane.b32.xlu0 %v1190, 96
      %v1194 = vpop.permute.xlu0 %1193
      %v1196 = vsel %vm830, %v1191, 0
      %v1198 = vsel %vm830, %v1194, 0
      %1200 = vmatprep.subr.mxu0 0.0
      %1201 = vmatpush1.xpose.msra.mxu0 0.0
      %1202 = vmatprep.subr.mxu0 0.0
      %1203 = vmatpush1.xpose.msra.mxu0 0.0
      %1204 = vmatprep.subr.mxu0 0.0
      %1205 = vmatpush1.xpose.msra.mxu0 0.0
      %1206 = vmatprep.subr.mxu0 0.0
      %1207 = vmatpush1.xpose.msra.mxu0 0.0
      %1208 = vmatprep.subr.mxu0 0.0
      %1209 = vmatpush1.xpose.msra.mxu0 0.0
      %1210 = vmatprep.subr.mxu0 0.0
      %1211 = vmatpush1.xpose.msra.mxu0 0.0
      %1212 = vmatprep.subr.mxu0 0.0
      %1213 = vmatpush1.xpose.msra.mxu0 0.0
      %1214 = vmatprep.subr.mxu0 0.0
      %1215 = vmatpush1.xpose.msra.mxu0 0.0
      %1216 = vmatprep.subr.mxu0 0.0
      %1217 = vmatpush1.xpose.msra.mxu0 0.0
      %1218 = vmatprep.subr.mxu0 0.0
      %1219 = vmatpush1.xpose.msra.mxu0 0.0
      %1220 = vmatprep.subr.mxu0 0.0
      %1221 = vmatpush1.xpose.msra.mxu0 0.0
      %1222 = vmatprep.subr.mxu0 0.0
      %1223 = vmatpush1.xpose.msra.mxu0 0.0
      %1224 = vmatprep.subr.mxu0 0.0
      %1225 = vmatpush1.xpose.msra.mxu0 0.0
      %1226 = vmatprep.subr.mxu0 0.0
      %1227 = vmatpush1.xpose.msra.mxu0 0.0
      %1228 = vmatprep.subr.mxu0 0.0
      %1229 = vmatpush1.xpose.msra.mxu0 0.0
      %1230 = vmatprep.subr.mxu0 0.0
      %1231 = vmatpush1.xpose.msra.mxu0 %v1198
      %1232 = vmatprep.subr.mxu0 0.0
      %1233 = vmatpush2.xpose.msra.mxu0 0.0
      %1234 = vmatprep.subr.mxu0 0.0
      %1235 = vmatpush2.xpose.msra.mxu0 0.0
      %1236 = vmatprep.subr.mxu0 0.0
      %1237 = vmatpush2.xpose.msra.mxu0 0.0
      %1238 = vmatprep.subr.mxu0 0.0
      %1239 = vmatpush2.xpose.msra.mxu0 0.0
      %1240 = vmatprep.subr.mxu0 0.0
      %1241 = vmatpush2.xpose.msra.mxu0 0.0
      %1242 = vmatprep.subr.mxu0 0.0
      %1243 = vmatpush2.xpose.msra.mxu0 0.0
      %1244 = vmatprep.subr.mxu0 0.0
      %1245 = vmatpush2.xpose.msra.mxu0 0.0
      %1246 = vmatprep.subr.mxu0 0.0
      %1247 = vmatpush2.xpose.msra.mxu0 0.0
      %1248 = vmatprep.subr.mxu0 0.0
      %1249 = vmatpush2.xpose.msra.mxu0 0.0
      %1250 = vmatprep.subr.mxu0 0.0
      %1251 = vmatpush2.xpose.msra.mxu0 0.0
      %1252 = vmatprep.subr.mxu0 0.0
      %1253 = vmatpush2.xpose.msra.mxu0 0.0
      %1254 = vmatprep.subr.mxu0 0.0
      %1255 = vmatpush2.xpose.msra.mxu0 0.0
      %1256 = vmatprep.subr.mxu0 0.0
      %1257 = vmatpush2.xpose.msra.mxu0 0.0
      %1258 = vmatprep.subr.mxu0 0.0
      %1259 = vmatpush2.xpose.msra.mxu0 0.0
      %1260 = vmatprep.subr.mxu0 0.0
      %1261 = vmatpush2.xpose.msra.mxu0 0.0
      %1262 = vmatprep.subr.mxu0 0.0
      %1263 = vmatpush2.xpose.msra.mxu0 0.0
      %1264 = vmatprep.mubr.f32.mxu0 0.0
      %1265 = vmatmul.mubr.f32.gmra.mxu0 %v1196
      %v1266 = vpop.f32.mrf.mxu0
      %v1267 = vadd.f32 0.0, %v1266
      %v1268 = vpop.f32.mrf.mxu0
      %1269 = vdwg.mxu0
      %v1270 = vsel %vm830, %v1267, -inf
      %1271 = vmax.xlane.f32.xlu0 %v1270
      %v1272 = vpop.xlane.xlu0 %1271
      %v1273 = vsub.f32 %v1267, %v1272
      %v1274 = vmul.f32 %v1273, 1.442695
      %v1275 = vpow.pop %v1274
      %v1276 = vsel %vm830, %v1275, 0.0
      %1277 = vadd.xlane.f32.xlu0 %v1276
      %v1278 = vpop.xlane.xlu0 %1277
      %v1279 = vrcp.pop %v1278
      %v1280 = vmul.f32 %v1275, %v1279
      %v1281 = vadd.f32 %v1280, 0.0
      %1282 = vrot.lane.b32.xlu0 %v1191, 120
      %v1283 = vpop.permute.xlu0 %1282
      %1284 = vrot.lane.b32.xlu0 %v1190, 88
      %v1285 = vpop.permute.xlu0 %1284
      %v1286 = vsel %vm830, %v1283, 0
      %v1288 = vsel %vm830, %v1285, 0
      %1290 = vmatprep.subr.mxu0 0.0
      %1291 = vmatpush1.xpose.msra.mxu0 0.0
      %1292 = vmatprep.subr.mxu0 0.0
      %1293 = vmatpush1.xpose.msra.mxu0 0.0
      %1294 = vmatprep.subr.mxu0 0.0
      %1295 = vmatpush1.xpose.msra.mxu0 0.0
      %1296 = vmatprep.subr.mxu0 0.0
      %1297 = vmatpush1.xpose.msra.mxu0 0.0
      %1298 = vmatprep.subr.mxu0 0.0
      %1299 = vmatpush1.xpose.msra.mxu0 0.0
      %1300 = vmatprep.subr.mxu0 0.0
      %1301 = vmatpush1.xpose.msra.mxu0 0.0
      %1302 = vmatprep.subr.mxu0 0.0
      %1303 = vmatpush1.xpose.msra.mxu0 0.0
      %1304 = vmatprep.subr.mxu0 0.0
      %1305 = vmatpush1.xpose.msra.mxu0 0.0
      %1306 = vmatprep.subr.mxu0 0.0
      %1307 = vmatpush1.xpose.msra.mxu0 0.0
      %1308 = vmatprep.subr.mxu0 0.0
      %1309 = vmatpush1.xpose.msra.mxu0 0.0
      %1310 = vmatprep.subr.mxu0 0.0
      %1311 = vmatpush1.xpose.msra.mxu0 0.0
      %1312 = vmatprep.subr.mxu0 0.0
      %1313 = vmatpush1.xpose.msra.mxu0 0.0
      %1314 = vmatprep.subr.mxu0 0.0
      %1315 = vmatpush1.xpose.msra.mxu0 0.0
      %1316 = vmatprep.subr.mxu0 0.0
      %1317 = vmatpush1.xpose.msra.mxu0 0.0
      %1318 = vmatprep.subr.mxu0 0.0
      %1319 = vmatpush1.xpose.msra.mxu0 0.0
      %1320 = vmatprep.subr.mxu0 0.0
      %1321 = vmatpush1.xpose.msra.mxu0 %v1288
      %1322 = vmatprep.subr.mxu0 0.0
      %1323 = vmatpush2.xpose.msra.mxu0 0.0
      %1324 = vmatprep.subr.mxu0 0.0
      %1325 = vmatpush2.xpose.msra.mxu0 0.0
      %1326 = vmatprep.subr.mxu0 0.0
      %1327 = vmatpush2.xpose.msra.mxu0 0.0
      %1328 = vmatprep.subr.mxu0 0.0
      %1329 = vmatpush2.xpose.msra.mxu0 0.0
      %1330 = vmatprep.subr.mxu0 0.0
      %1331 = vmatpush2.xpose.msra.mxu0 0.0
      %1332 = vmatprep.subr.mxu0 0.0
      %1333 = vmatpush2.xpose.msra.mxu0 0.0
      %1334 = vmatprep.subr.mxu0 0.0
      %1335 = vmatpush2.xpose.msra.mxu0 0.0
      %1336 = vmatprep.subr.mxu0 0.0
      %1337 = vmatpush2.xpose.msra.mxu0 0.0
      %1338 = vmatprep.subr.mxu0 0.0
      %1339 = vmatpush2.xpose.msra.mxu0 0.0
      %1340 = vmatprep.subr.mxu0 0.0
      %1341 = vmatpush2.xpose.msra.mxu0 0.0
      %1342 = vmatprep.subr.mxu0 0.0
      %1343 = vmatpush2.xpose.msra.mxu0 0.0
      %1344 = vmatprep.subr.mxu0 0.0
      %1345 = vmatpush2.xpose.msra.mxu0 0.0
      %1346 = vmatprep.subr.mxu0 0.0
      %1347 = vmatpush2.xpose.msra.mxu0 0.0
      %1348 = vmatprep.subr.mxu0 0.0
      %1349 = vmatpush2.xpose.msra.mxu0 0.0
      %1350 = vmatprep.subr.mxu0 0.0
      %1351 = vmatpush2.xpose.msra.mxu0 0.0
      %1352 = vmatprep.subr.mxu0 0.0
      %1353 = vmatpush2.xpose.msra.mxu0 0.0
      %1354 = vmatprep.mubr.f32.mxu0 0.0
      %1355 = vmatmul.mubr.f32.gmra.mxu0 %v1286
      %v1356 = vpop.f32.mrf.mxu0
      %v1357 = vadd.f32 0.0, %v1356
      %v1358 = vpop.f32.mrf.mxu0
      %1359 = vdwg.mxu0
      %v1360 = vsel %vm830, %v1357, -inf
      %1361 = vmax.xlane.f32.xlu0 %v1360
      %v1362 = vpop.xlane.xlu0 %1361
      %v1363 = vsub.f32 %v1357, %v1362
      %v1364 = vmul.f32 %v1363, 1.442695
      %v1365 = vpow.pop %v1364
      %v1366 = vsel %vm830, %v1365, 0.0
      %1367 = vadd.xlane.f32.xlu0 %v1366
      %v1368 = vpop.xlane.xlu0 %1367
      %v1369 = vrcp.pop %v1368
      %v1370 = vmul.f32 %v1365, %v1369
      %v1371 = vadd.f32 %v1281, %v1370
      %1372 = vrot.lane.b32.xlu0 %v1191, 112
      %v1373 = vpop.permute.xlu0 %1372
      %1374 = vrot.lane.b32.xlu0 %v1190, 80
      %v1375 = vpop.permute.xlu0 %1374
      %v1376 = vsel %vm830, %v1373, 0
      %v1378 = vsel %vm830, %v1375, 0
      %1380 = vmatprep.subr.mxu0 0.0
      %1381 = vmatpush1.xpose.msra.mxu0 0.0
      %1382 = vmatprep.subr.mxu0 0.0
      %1383 = vmatpush1.xpose.msra.mxu0 0.0
      %1384 = vmatprep.subr.mxu0 0.0
      %1385 = vmatpush1.xpose.msra.mxu0 0.0
      %1386 = vmatprep.subr.mxu0 0.0
      %1387 = vmatpush1.xpose.msra.mxu0 0.0
      %1388 = vmatprep.subr.mxu0 0.0
      %1389 = vmatpush1.xpose.msra.mxu0 0.0
      %1390 = vmatprep.subr.mxu0 0.0
      %1391 = vmatpush1.xpose.msra.mxu0 0.0
      %1392 = vmatprep.subr.mxu0 0.0
      %1393 = vmatpush1.xpose.msra.mxu0 0.0
      %1394 = vmatprep.subr.mxu0 0.0
      %1395 = vmatpush1.xpose.msra.mxu0 0.0
      %1396 = vmatprep.subr.mxu0 0.0
      %1397 = vmatpush1.xpose.msra.mxu0 0.0
      %1398 = vmatprep.subr.mxu0 0.0
      %1399 = vmatpush1.xpose.msra.mxu0 0.0
      %1400 = vmatprep.subr.mxu0 0.0
      %1401 = vmatpush1.xpose.msra.mxu0 0.0
      %1402 = vmatprep.subr.mxu0 0.0
      %1403 = vmatpush1.xpose.msra.mxu0 0.0
      %1404 = vmatprep.subr.mxu0 0.0
      %1405 = vmatpush1.xpose.msra.mxu0 0.0
      %1406 = vmatprep.subr.mxu0 0.0
      %1407 = vmatpush1.xpose.msra.mxu0 0.0
      %1408 = vmatprep.subr.mxu0 0.0
      %1409 = vmatpush1.xpose.msra.mxu0 0.0
      %1410 = vmatprep.subr.mxu0 0.0
      %1411 = vmatpush1.xpose.msra.mxu0 %v1378
      %1412 = vmatprep.subr.mxu0 0.0
      %1413 = vmatpush2.xpose.msra.mxu0 0.0
      %1414 = vmatprep.subr.mxu0 0.0
      %1415 = vmatpush2.xpose.msra.mxu0 0.0
      %1416 = vmatprep.subr.mxu0 0.0
      %1417 = vmatpush2.xpose.msra.mxu0 0.0
      %1418 = vmatprep.subr.mxu0 0.0
      %1419 = vmatpush2.xpose.msra.mxu0 0.0
      %1420 = vmatprep.subr.mxu0 0.0
      %1421 = vmatpush2.xpose.msra.mxu0 0.0
      %1422 = vmatprep.subr.mxu0 0.0
      %1423 = vmatpush2.xpose.msra.mxu0 0.0
      %1424 = vmatprep.subr.mxu0 0.0
      %1425 = vmatpush2.xpose.msra.mxu0 0.0
      %1426 = vmatprep.subr.mxu0 0.0
      %1427 = vmatpush2.xpose.msra.mxu0 0.0
      %1428 = vmatprep.subr.mxu0 0.0
      %1429 = vmatpush2.xpose.msra.mxu0 0.0
      %1430 = vmatprep.subr.mxu0 0.0
      %1431 = vmatpush2.xpose.msra.mxu0 0.0
      %1432 = vmatprep.subr.mxu0 0.0
      %1433 = vmatpush2.xpose.msra.mxu0 0.0
      %1434 = vmatprep.subr.mxu0 0.0
      %1435 = vmatpush2.xpose.msra.mxu0 0.0
      %1436 = vmatprep.subr.mxu0 0.0
      %1437 = vmatpush2.xpose.msra.mxu0 0.0
      %1438 = vmatprep.subr.mxu0 0.0
      %1439 = vmatpush2.xpose.msra.mxu0 0.0
      %1440 = vmatprep.subr.mxu0 0.0
      %1441 = vmatpush2.xpose.msra.mxu0 0.0
      %1442 = vmatprep.subr.mxu0 0.0
      %1443 = vmatpush2.xpose.msra.mxu0 0.0
      %1444 = vmatprep.mubr.f32.mxu0 0.0
      %1445 = vmatmul.mubr.f32.gmra.mxu0 %v1376
      %v1446 = vpop.f32.mrf.mxu0
      %v1447 = vadd.f32 0.0, %v1446
      %v1448 = vpop.f32.mrf.mxu0
      %1449 = vdwg.mxu0
      %v1450 = vsel %vm830, %v1447, -inf
      %1451 = vmax.xlane.f32.xlu0 %v1450
      %v1452 = vpop.xlane.xlu0 %1451
      %v1453 = vsub.f32 %v1447, %v1452
      %v1454 = vmul.f32 %v1453, 1.442695
      %v1455 = vpow.pop %v1454
      %v1456 = vsel %vm830, %v1455, 0.0
      %1457 = vadd.xlane.f32.xlu0 %v1456
      %v1458 = vpop.xlane.xlu0 %1457
      %v1459 = vrcp.pop %v1458
      %v1460 = vmul.f32 %v1455, %v1459
      %v1461 = vadd.f32 %v1371, %v1460
      %1462 = vrot.lane.b32.xlu0 %v1191, 104
      %v1463 = vpop.permute.xlu0 %1462
      %1464 = vrot.lane.b32.xlu0 %v1190, 72
      %v1465 = vpop.permute.xlu0 %1464
      %v1466 = vsel %vm830, %v1463, 0
      %v1468 = vsel %vm830, %v1465, 0
      %1470 = vmatprep.subr.mxu0 0.0
      %1471 = vmatpush1.xpose.msra.mxu0 0.0
      %1472 = vmatprep.subr.mxu0 0.0
      %1473 = vmatpush1.xpose.msra.mxu0 0.0
      %1474 = vmatprep.subr.mxu0 0.0
      %1475 = vmatpush1.xpose.msra.mxu0 0.0
      %1476 = vmatprep.subr.mxu0 0.0
      %1477 = vmatpush1.xpose.msra.mxu0 0.0
      %1478 = vmatprep.subr.mxu0 0.0
      %1479 = vmatpush1.xpose.msra.mxu0 0.0
      %1480 = vmatprep.subr.mxu0 0.0
      %1481 = vmatpush1.xpose.msra.mxu0 0.0
      %1482 = vmatprep.subr.mxu0 0.0
      %1483 = vmatpush1.xpose.msra.mxu0 0.0
      %1484 = vmatprep.subr.mxu0 0.0
      %1485 = vmatpush1.xpose.msra.mxu0 0.0
      %1486 = vmatprep.subr.mxu0 0.0
      %1487 = vmatpush1.xpose.msra.mxu0 0.0
      %1488 = vmatprep.subr.mxu0 0.0
      %1489 = vmatpush1.xpose.msra.mxu0 0.0
      %1490 = vmatprep.subr.mxu0 0.0
      %1491 = vmatpush1.xpose.msra.mxu0 0.0
      %1492 = vmatprep.subr.mxu0 0.0
      %1493 = vmatpush1.xpose.msra.mxu0 0.0
      %1494 = vmatprep.subr.mxu0 0.0
      %1495 = vmatpush1.xpose.msra.mxu0 0.0
      %1496 = vmatprep.subr.mxu0 0.0
      %1497 = vmatpush1.xpose.msra.mxu0 0.0
      %1498 = vmatprep.subr.mxu0 0.0
      %1499 = vmatpush1.xpose.msra.mxu0 0.0
      %1500 = vmatprep.subr.mxu0 0.0
      %1501 = vmatpush1.xpose.msra.mxu0 %v1468
      %1502 = vmatprep.subr.mxu0 0.0
      %1503 = vmatpush2.xpose.msra.mxu0 0.0
      %1504 = vmatprep.subr.mxu0 0.0
      %1505 = vmatpush2.xpose.msra.mxu0 0.0
      %1506 = vmatprep.subr.mxu0 0.0
      %1507 = vmatpush2.xpose.msra.mxu0 0.0
      %1508 = vmatprep.subr.mxu0 0.0
      %1509 = vmatpush2.xpose.msra.mxu0 0.0
      %1510 = vmatprep.subr.mxu0 0.0
      %1511 = vmatpush2.xpose.msra.mxu0 0.0
      %1512 = vmatprep.subr.mxu0 0.0
      %1513 = vmatpush2.xpose.msra.mxu0 0.0
      %1514 = vmatprep.subr.mxu0 0.0
      %1515 = vmatpush2.xpose.msra.mxu0 0.0
      %1516 = vmatprep.subr.mxu0 0.0
      %1517 = vmatpush2.xpose.msra.mxu0 0.0
      %1518 = vmatprep.subr.mxu0 0.0
      %1519 = vmatpush2.xpose.msra.mxu0 0.0
      %1520 = vmatprep.subr.mxu0 0.0
      %1521 = vmatpush2.xpose.msra.mxu0 0.0
      %1522 = vmatprep.subr.mxu0 0.0
      %1523 = vmatpush2.xpose.msra.mxu0 0.0
      %1524 = vmatprep.subr.mxu0 0.0
      %1525 = vmatpush2.xpose.msra.mxu0 0.0
      %1526 = vmatprep.subr.mxu0 0.0
      %1527 = vmatpush2.xpose.msra.mxu0 0.0
      %1528 = vmatprep.subr.mxu0 0.0
      %1529 = vmatpush2.xpose.msra.mxu0 0.0
      %1530 = vmatprep.subr.mxu0 0.0
      %1531 = vmatpush2.xpose.msra.mxu0 0.0
      %1532 = vmatprep.subr.mxu0 0.0
      %1533 = vmatpush2.xpose.msra.mxu0 0.0
      %1534 = vmatprep.mubr.f32.mxu0 0.0
      %1535 = vmatmul.mubr.f32.gmra.mxu0 %v1466
      %v1536 = vpop.f32.mrf.mxu0
      %v1537 = vadd.f32 0.0, %v1536
      %v1538 = vpop.f32.mrf.mxu0
      %1539 = vdwg.mxu0
      %v1540 = vsel %vm830, %v1537, -inf
      %1541 = vmax.xlane.f32.xlu0 %v1540
      %v1542 = vpop.xlane.xlu0 %1541
      %v1543 = vsub.f32 %v1537, %v1542
      %v1544 = vmul.f32 %v1543, 1.442695
      %v1545 = vpow.pop %v1544
      %v1546 = vsel %vm830, %v1545, 0.0
      %1547 = vadd.xlane.f32.xlu0 %v1546
      %v1548 = vpop.xlane.xlu0 %1547
      %v1549 = vrcp.pop %v1548
      %v1550 = vmul.f32 %v1545, %v1549
      %v1551 = vadd.f32 %v1461, %v1550
      %v1552 = vmul.f32 %v1551, 0.25
      %s1553 = scalar_lea.vmem [#allocation4], 8
      %1554 = vst.msk [vmem:[%s1553] sm:$0xff] %vm830, %v1552
      %v1555 = vld [vmem:[#allocation3] sm:$0xff]
      %v1556 = vld [vmem:[#allocation2] sm:$0xff]
      %v1557 = vld [vmem:[#allocation4] sm:$0xff]
      %1559 = vrot.lane.b32.xlu0 %v1556, 96
      %v1560 = vpop.permute.xlu0 %1559
      %v1562 = vsel %vm830, %v1555, 0
      %v1564 = vsel %vm830, %v1560, 0
      %1566 = vmatprep.subr.mxu0 0.0
      %1567 = vmatpush1.xpose.msra.mxu0 0.0
      %1568 = vmatprep.subr.mxu0 0.0
      %1569 = vmatpush1.xpose.msra.mxu0 0.0
      %1570 = vmatprep.subr.mxu0 0.0
      %1571 = vmatpush1.xpose.msra.mxu0 0.0
      %1572 = vmatprep.subr.mxu0 0.0
      %1573 = vmatpush1.xpose.msra.mxu0 0.0
      %1574 = vmatprep.subr.mxu0 0.0
      %1575 = vmatpush1.xpose.msra.mxu0 0.0
      %1576 = vmatprep.subr.mxu0 0.0
      %1577 = vmatpush1.xpose.msra.mxu0 0.0
      %1578 = vmatprep.subr.mxu0 0.0
      %1579 = vmatpush1.xpose.msra.mxu0 0.0
      %1580 = vmatprep.subr.mxu0 0.0
      %1581 = vmatpush1.xpose.msra.mxu0 0.0
      %1582 = vmatprep.subr.mxu0 0.0
      %1583 = vmatpush1.xpose.msra.mxu0 0.0
      %1584 = vmatprep.subr.mxu0 0.0
      %1585 = vmatpush1.xpose.msra.mxu0 0.0
      %1586 = vmatprep.subr.mxu0 0.0
      %1587 = vmatpush1.xpose.msra.mxu0 0.0
      %1588 = vmatprep.subr.mxu0 0.0
      %1589 = vmatpush1.xpose.msra.mxu0 0.0
      %1590 = vmatprep.subr.mxu0 0.0
      %1591 = vmatpush1.xpose.msra.mxu0 0.0
      %1592 = vmatprep.subr.mxu0 0.0
      %1593 = vmatpush1.xpose.msra.mxu0 0.0
      %1594 = vmatprep.subr.mxu0 0.0
      %1595 = vmatpush1.xpose.msra.mxu0 0.0
      %1596 = vmatprep.subr.mxu0 0.0
      %1597 = vmatpush1.xpose.msra.mxu0 %v1564
      %1598 = vmatprep.subr.mxu0 0.0
      %1599 = vmatpush2.xpose.msra.mxu0 0.0
      %1600 = vmatprep.subr.mxu0 0.0
      %1601 = vmatpush2.xpose.msra.mxu0 0.0
      %1602 = vmatprep.subr.mxu0 0.0
      %1603 = vmatpush2.xpose.msra.mxu0 0.0
      %1604 = vmatprep.subr.mxu0 0.0
      %1605 = vmatpush2.xpose.msra.mxu0 0.0
      %1606 = vmatprep.subr.mxu0 0.0
      %1607 = vmatpush2.xpose.msra.mxu0 0.0
      %1608 = vmatprep.subr.mxu0 0.0
      %1609 = vmatpush2.xpose.msra.mxu0 0.0
      %1610 = vmatprep.subr.mxu0 0.0
      %1611 = vmatpush2.xpose.msra.mxu0 0.0
      %1612 = vmatprep.subr.mxu0 0.0
      %1613 = vmatpush2.xpose.msra.mxu0 0.0
      %1614 = vmatprep.subr.mxu0 0.0
      %1615 = vmatpush2.xpose.msra.mxu0 0.0
      %1616 = vmatprep.subr.mxu0 0.0
      %1617 = vmatpush2.xpose.msra.mxu0 0.0
      %1618 = vmatprep.subr.mxu0 0.0
      %1619 = vmatpush2.xpose.msra.mxu0 0.0
      %1620 = vmatprep.subr.mxu0 0.0
      %1621 = vmatpush2.xpose.msra.mxu0 0.0
      %1622 = vmatprep.subr.mxu0 0.0
      %1623 = vmatpush2.xpose.msra.mxu0 0.0
      %1624 = vmatprep.subr.mxu0 0.0
      %1625 = vmatpush2.xpose.msra.mxu0 0.0
      %1626 = vmatprep.subr.mxu0 0.0
      %1627 = vmatpush2.xpose.msra.mxu0 0.0
      %1628 = vmatprep.subr.mxu0 0.0
      %1629 = vmatpush2.xpose.msra.mxu0 0.0
      %1630 = vmatprep.mubr.f32.mxu0 0.0
      %1631 = vmatmul.mubr.f32.gmra.mxu0 %v1562
      %v1632 = vpop.f32.mrf.mxu0
      %v1633 = vadd.f32 %v1557, %v1632
      %v1634 = vpop.f32.mrf.mxu0
      %1635 = vdwg.mxu0
      %v1636 = vsel %vm830, %v1633, -inf
      %1637 = vmax.xlane.f32.xlu0 %v1636
      %v1638 = vpop.xlane.xlu0 %1637
      %v1639 = vsub.f32 %v1633, %v1638
      %v1640 = vmul.f32 %v1639, 1.442695
      %v1641 = vpow.pop %v1640
      %v1642 = vsel %vm830, %v1641, 0.0
      %1643 = vadd.xlane.f32.xlu0 %v1642
      %v1644 = vpop.xlane.xlu0 %1643
      %v1645 = vrcp.pop %v1644
      %v1646 = vmul.f32 %v1641, %v1645
      %1647 = vrot.lane.b32.xlu0 %v1556, 64
      %v1648 = vpop.permute.xlu0 %1647
      %v1651 = vsel %vm830, %v1646, 0
      %1653 = vmatprep.subr.mxu0 0.0
      %1654 = vmatpush1.msra.mxu0 0.0
      %1655 = vmatprep.subr.mxu0 0.0
      %1656 = vmatpush1.msra.mxu0 0.0
      %1657 = vmatprep.subr.mxu0 0.0
      %1658 = vmatpush1.msra.mxu0 0.0
      %1659 = vmatprep.subr.mxu0 0.0
      %1660 = vmatpush1.msra.mxu0 0.0
      %1661 = vmatprep.subr.mxu0 0.0
      %1662 = vmatpush1.msra.mxu0 0.0
      %1663 = vmatprep.subr.mxu0 0.0
      %1664 = vmatpush1.msra.mxu0 0.0
      %1665 = vmatprep.subr.mxu0 0.0
      %1666 = vmatpush1.msra.mxu0 0.0
      %1667 = vmatprep.subr.mxu0 0.0
      %1668 = vmatpush1.msra.mxu0 0.0
      %1669 = vmatprep.subr.mxu0 0.0
      %1670 = vmatpush1.msra.mxu0 0.0
      %1671 = vmatprep.subr.mxu0 0.0
      %1672 = vmatpush1.msra.mxu0 0.0
      %1673 = vmatprep.subr.mxu0 0.0
      %1674 = vmatpush1.msra.mxu0 0.0
      %1675 = vmatprep.subr.mxu0 0.0
      %1676 = vmatpush1.msra.mxu0 0.0
      %1677 = vmatprep.subr.mxu0 0.0
      %1678 = vmatpush1.msra.mxu0 0.0
      %1679 = vmatprep.subr.mxu0 0.0
      %1680 = vmatpush1.msra.mxu0 0.0
      %1681 = vmatprep.subr.mxu0 0.0
      %1682 = vmatpush1.msra.mxu0 0.0
      %1683 = vmatprep.subr.mxu0 0.0
      %1684 = vmatpush1.msra.mxu0 %v1648
      %1685 = vmatprep.subr.mxu0 0.0
      %1686 = vmatpush2.msra.mxu0 0.0
      %1687 = vmatprep.subr.mxu0 0.0
      %1688 = vmatpush2.msra.mxu0 0.0
      %1689 = vmatprep.subr.mxu0 0.0
      %1690 = vmatpush2.msra.mxu0 0.0
      %1691 = vmatprep.subr.mxu0 0.0
      %1692 = vmatpush2.msra.mxu0 0.0
      %1693 = vmatprep.subr.mxu0 0.0
      %1694 = vmatpush2.msra.mxu0 0.0
      %1695 = vmatprep.subr.mxu0 0.0
      %1696 = vmatpush2.msra.mxu0 0.0
      %1697 = vmatprep.subr.mxu0 0.0
      %1698 = vmatpush2.msra.mxu0 0.0
      %1699 = vmatprep.subr.mxu0 0.0
      %1700 = vmatpush2.msra.mxu0 0.0
      %1701 = vmatprep.subr.mxu0 0.0
      %1702 = vmatpush2.msra.mxu0 0.0
      %1703 = vmatprep.subr.mxu0 0.0
      %1704 = vmatpush2.msra.mxu0 0.0
      %1705 = vmatprep.subr.mxu0 0.0
      %1706 = vmatpush2.msra.mxu0 0.0
      %1707 = vmatprep.subr.mxu0 0.0
      %1708 = vmatpush2.msra.mxu0 0.0
      %1709 = vmatprep.subr.mxu0 0.0
      %1710 = vmatpush2.msra.mxu0 0.0
      %1711 = vmatprep.subr.mxu0 0.0
      %1712 = vmatpush2.msra.mxu0 0.0
      %1713 = vmatprep.subr.mxu0 0.0
      %1714 = vmatpush2.msra.mxu0 0.0
      %1715 = vmatprep.subr.mxu0 0.0
      %1716 = vmatpush2.msra.mxu0 0.0
      %1717 = vmatprep.mubr.f32.mxu0 0.0
      %1718 = vmatmul.mubr.f32.gmra.mxu0 %v1651
      %v1719 = vpop.f32.mrf.mxu0
      %v1720 = vadd.f32 0.0, %v1719
      %v1721 = vpop.f32.mrf.mxu0
      %1722 = vdwg.mxu0
      %v1723 = vld [vmem:[%s1553] sm:$0xff]
      %1724 = vrot.lane.b32.xlu0 %v1555, 120
      %v1725 = vpop.permute.xlu0 %1724
      %1726 = vrot.lane.b32.xlu0 %v1556, 88
      %v1727 = vpop.permute.xlu0 %1726
      %v1728 = vsel %vm830, %v1725, 0
      %v1730 = vsel %vm830, %v1727, 0
      %1732 = vmatprep.subr.mxu0 0.0
      %1733 = vmatpush1.xpose.msra.mxu0 0.0
      %1734 = vmatprep.subr.mxu0 0.0
      %1735 = vmatpush1.xpose.msra.mxu0 0.0
      %1736 = vmatprep.subr.mxu0 0.0
      %1737 = vmatpush1.xpose.msra.mxu0 0.0
      %1738 = vmatprep.subr.mxu0 0.0
      %1739 = vmatpush1.xpose.msra.mxu0 0.0
      %1740 = vmatprep.subr.mxu0 0.0
      %1741 = vmatpush1.xpose.msra.mxu0 0.0
      %1742 = vmatprep.subr.mxu0 0.0
      %1743 = vmatpush1.xpose.msra.mxu0 0.0
      %1744 = vmatprep.subr.mxu0 0.0
      %1745 = vmatpush1.xpose.msra.mxu0 0.0
      %1746 = vmatprep.subr.mxu0 0.0
      %1747 = vmatpush1.xpose.msra.mxu0 0.0
      %1748 = vmatprep.subr.mxu0 0.0
      %1749 = vmatpush1.xpose.msra.mxu0 0.0
      %1750 = vmatprep.subr.mxu0 0.0
      %1751 = vmatpush1.xpose.msra.mxu0 0.0
      %1752 = vmatprep.subr.mxu0 0.0
      %1753 = vmatpush1.xpose.msra.mxu0 0.0
      %1754 = vmatprep.subr.mxu0 0.0
      %1755 = vmatpush1.xpose.msra.mxu0 0.0
      %1756 = vmatprep.subr.mxu0 0.0
      %1757 = vmatpush1.xpose.msra.mxu0 0.0
      %1758 = vmatprep.subr.mxu0 0.0
      %1759 = vmatpush1.xpose.msra.mxu0 0.0
      %1760 = vmatprep.subr.mxu0 0.0
      %1761 = vmatpush1.xpose.msra.mxu0 0.0
      %1762 = vmatprep.subr.mxu0 0.0
      %1763 = vmatpush1.xpose.msra.mxu0 %v1730
      %1764 = vmatprep.subr.mxu0 0.0
      %1765 = vmatpush2.xpose.msra.mxu0 0.0
      %1766 = vmatprep.subr.mxu0 0.0
      %1767 = vmatpush2.xpose.msra.mxu0 0.0
      %1768 = vmatprep.subr.mxu0 0.0
      %1769 = vmatpush2.xpose.msra.mxu0 0.0
      %1770 = vmatprep.subr.mxu0 0.0
      %1771 = vmatpush2.xpose.msra.mxu0 0.0
      %1772 = vmatprep.subr.mxu0 0.0
      %1773 = vmatpush2.xpose.msra.mxu0 0.0
      %1774 = vmatprep.subr.mxu0 0.0
      %1775 = vmatpush2.xpose.msra.mxu0 0.0
      %1776 = vmatprep.subr.mxu0 0.0
      %1777 = vmatpush2.xpose.msra.mxu0 0.0
      %1778 = vmatprep.subr.mxu0 0.0
      %1779 = vmatpush2.xpose.msra.mxu0 0.0
      %1780 = vmatprep.subr.mxu0 0.0
      %1781 = vmatpush2.xpose.msra.mxu0 0.0
      %1782 = vmatprep.subr.mxu0 0.0
      %1783 = vmatpush2.xpose.msra.mxu0 0.0
      %1784 = vmatprep.subr.mxu0 0.0
      %1785 = vmatpush2.xpose.msra.mxu0 0.0
      %1786 = vmatprep.subr.mxu0 0.0
      %1787 = vmatpush2.xpose.msra.mxu0 0.0
      %1788 = vmatprep.subr.mxu0 0.0
      %1789 = vmatpush2.xpose.msra.mxu0 0.0
      %1790 = vmatprep.subr.mxu0 0.0
      %1791 = vmatpush2.xpose.msra.mxu0 0.0
      %1792 = vmatprep.subr.mxu0 0.0
      %1793 = vmatpush2.xpose.msra.mxu0 0.0
      %1794 = vmatprep.subr.mxu0 0.0
      %1795 = vmatpush2.xpose.msra.mxu0 0.0
      %1796 = vmatprep.mubr.f32.mxu0 0.0
      %1797 = vmatmul.mubr.f32.gmra.mxu0 %v1728
      %v1798 = vpop.f32.mrf.mxu0
      %v1799 = vadd.f32 %v1723, %v1798
      %v1800 = vpop.f32.mrf.mxu0
      %1801 = vdwg.mxu0
      %v1802 = vsel %vm830, %v1799, -inf
      %1803 = vmax.xlane.f32.xlu0 %v1802
      %v1804 = vpop.xlane.xlu0 %1803
      %v1805 = vsub.f32 %v1799, %v1804
      %v1806 = vmul.f32 %v1805, 1.442695
      %v1807 = vpow.pop %v1806
      %v1808 = vsel %vm830, %v1807, 0.0
      %1809 = vadd.xlane.f32.xlu0 %v1808
      %v1810 = vpop.xlane.xlu0 %1809
      %v1811 = vrcp.pop %v1810
      %v1812 = vmul.f32 %v1807, %v1811
      %1813 = vrot.lane.b32.xlu0 %v1556, 56
      %v1814 = vpop.permute.xlu0 %1813
      %v1817 = vsel %vm830, %v1812, 0
      %1819 = vmatprep.subr.mxu0 0.0
      %1820 = vmatpush1.msra.mxu0 0.0
      %1821 = vmatprep.subr.mxu0 0.0
      %1822 = vmatpush1.msra.mxu0 0.0
      %1823 = vmatprep.subr.mxu0 0.0
      %1824 = vmatpush1.msra.mxu0 0.0
      %1825 = vmatprep.subr.mxu0 0.0
      %1826 = vmatpush1.msra.mxu0 0.0
      %1827 = vmatprep.subr.mxu0 0.0
      %1828 = vmatpush1.msra.mxu0 0.0
      %1829 = vmatprep.subr.mxu0 0.0
      %1830 = vmatpush1.msra.mxu0 0.0
      %1831 = vmatprep.subr.mxu0 0.0
      %1832 = vmatpush1.msra.mxu0 0.0
      %1833 = vmatprep.subr.mxu0 0.0
      %1834 = vmatpush1.msra.mxu0 0.0
      %1835 = vmatprep.subr.mxu0 0.0
      %1836 = vmatpush1.msra.mxu0 0.0
      %1837 = vmatprep.subr.mxu0 0.0
      %1838 = vmatpush1.msra.mxu0 0.0
      %1839 = vmatprep.subr.mxu0 0.0
      %1840 = vmatpush1.msra.mxu0 0.0
      %1841 = vmatprep.subr.mxu0 0.0
      %1842 = vmatpush1.msra.mxu0 0.0
      %1843 = vmatprep.subr.mxu0 0.0
      %1844 = vmatpush1.msra.mxu0 0.0
      %1845 = vmatprep.subr.mxu0 0.0
      %1846 = vmatpush1.msra.mxu0 0.0
      %1847 = vmatprep.subr.mxu0 0.0
      %1848 = vmatpush1.msra.mxu0 0.0
      %1849 = vmatprep.subr.mxu0 0.0
      %1850 = vmatpush1.msra.mxu0 %v1814
      %1851 = vmatprep.subr.mxu0 0.0
      %1852 = vmatpush2.msra.mxu0 0.0
      %1853 = vmatprep.subr.mxu0 0.0
      %1854 = vmatpush2.msra.mxu0 0.0
      %1855 = vmatprep.subr.mxu0 0.0
      %1856 = vmatpush2.msra.mxu0 0.0
      %1857 = vmatprep.subr.mxu0 0.0
      %1858 = vmatpush2.msra.mxu0 0.0
      %1859 = vmatprep.subr.mxu0 0.0
      %1860 = vmatpush2.msra.mxu0 0.0
      %1861 = vmatprep.subr.mxu0 0.0
      %1862 = vmatpush2.msra.mxu0 0.0
      %1863 = vmatprep.subr.mxu0 0.0
      %1864 = vmatpush2.msra.mxu0 0.0
      %1865 = vmatprep.subr.mxu0 0.0
      %1866 = vmatpush2.msra.mxu0 0.0
      %1867 = vmatprep.subr.mxu0 0.0
      %1868 = vmatpush2.msra.mxu0 0.0
      %1869 = vmatprep.subr.mxu0 0.0
      %1870 = vmatpush2.msra.mxu0 0.0
      %1871 = vmatprep.subr.mxu0 0.0
      %1872 = vmatpush2.msra.mxu0 0.0
      %1873 = vmatprep.subr.mxu0 0.0
      %1874 = vmatpush2.msra.mxu0 0.0
      %1875 = vmatprep.subr.mxu0 0.0
      %1876 = vmatpush2.msra.mxu0 0.0
      %1877 = vmatprep.subr.mxu0 0.0
      %1878 = vmatpush2.msra.mxu0 0.0
      %1879 = vmatprep.subr.mxu0 0.0
      %1880 = vmatpush2.msra.mxu0 0.0
      %1881 = vmatprep.subr.mxu0 0.0
      %1882 = vmatpush2.msra.mxu0 0.0
      %1883 = vmatprep.mubr.f32.mxu0 0.0
      %1884 = vmatmul.mubr.f32.gmra.mxu0 %v1817
      %v1885 = vpop.f32.mrf.mxu0
      %v1886 = vadd.f32 0.0, %v1885
      %v1887 = vpop.f32.mrf.mxu0
      %1888 = vdwg.mxu0
      %1889 = vrot.lane.b32.xlu0 %v1555, 112
      %v1890 = vpop.permute.xlu0 %1889
      %1891 = vrot.lane.b32.xlu0 %v1556, 80
      %v1892 = vpop.permute.xlu0 %1891
      %v1893 = vsel %vm830, %v1890, 0
      %v1895 = vsel %vm830, %v1892, 0
      %1897 = vmatprep.subr.mxu0 0.0
      %1898 = vmatpush1.xpose.msra.mxu0 0.0
      %1899 = vmatprep.subr.mxu0 0.0
      %1900 = vmatpush1.xpose.msra.mxu0 0.0
      %1901 = vmatprep.subr.mxu0 0.0
      %1902 = vmatpush1.xpose.msra.mxu0 0.0
      %1903 = vmatprep.subr.mxu0 0.0
      %1904 = vmatpush1.xpose.msra.mxu0 0.0
      %1905 = vmatprep.subr.mxu0 0.0
      %1906 = vmatpush1.xpose.msra.mxu0 0.0
      %1907 = vmatprep.subr.mxu0 0.0
      %1908 = vmatpush1.xpose.msra.mxu0 0.0
      %1909 = vmatprep.subr.mxu0 0.0
      %1910 = vmatpush1.xpose.msra.mxu0 0.0
      %1911 = vmatprep.subr.mxu0 0.0
      %1912 = vmatpush1.xpose.msra.mxu0 0.0
      %1913 = vmatprep.subr.mxu0 0.0
      %1914 = vmatpush1.xpose.msra.mxu0 0.0
      %1915 = vmatprep.subr.mxu0 0.0
      %1916 = vmatpush1.xpose.msra.mxu0 0.0
      %1917 = vmatprep.subr.mxu0 0.0
      %1918 = vmatpush1.xpose.msra.mxu0 0.0
      %1919 = vmatprep.subr.mxu0 0.0
      %1920 = vmatpush1.xpose.msra.mxu0 0.0
      %1921 = vmatprep.subr.mxu0 0.0
      %1922 = vmatpush1.xpose.msra.mxu0 0.0
      %1923 = vmatprep.subr.mxu0 0.0
      %1924 = vmatpush1.xpose.msra.mxu0 0.0
      %1925 = vmatprep.subr.mxu0 0.0
      %1926 = vmatpush1.xpose.msra.mxu0 0.0
      %1927 = vmatprep.subr.mxu0 0.0
      %1928 = vmatpush1.xpose.msra.mxu0 %v1895
      %1929 = vmatprep.subr.mxu0 0.0
      %1930 = vmatpush2.xpose.msra.mxu0 0.0
      %1931 = vmatprep.subr.mxu0 0.0
      %1932 = vmatpush2.xpose.msra.mxu0 0.0
      %1933 = vmatprep.subr.mxu0 0.0
      %1934 = vmatpush2.xpose.msra.mxu0 0.0
      %1935 = vmatprep.subr.mxu0 0.0
      %1936 = vmatpush2.xpose.msra.mxu0 0.0
      %1937 = vmatprep.subr.mxu0 0.0
      %1938 = vmatpush2.xpose.msra.mxu0 0.0
      %1939 = vmatprep.subr.mxu0 0.0
      %1940 = vmatpush2.xpose.msra.mxu0 0.0
      %1941 = vmatprep.subr.mxu0 0.0
      %1942 = vmatpush2.xpose.msra.mxu0 0.0
      %1943 = vmatprep.subr.mxu0 0.0
      %1944 = vmatpush2.xpose.msra.mxu0 0.0
      %1945 = vmatprep.subr.mxu0 0.0
      %1946 = vmatpush2.xpose.msra.mxu0 0.0
      %1947 = vmatprep.subr.mxu0 0.0
      %1948 = vmatpush2.xpose.msra.mxu0 0.0
      %1949 = vmatprep.subr.mxu0 0.0
      %1950 = vmatpush2.xpose.msra.mxu0 0.0
      %1951 = vmatprep.subr.mxu0 0.0
      %1952 = vmatpush2.xpose.msra.mxu0 0.0
      %1953 = vmatprep.subr.mxu0 0.0
      %1954 = vmatpush2.xpose.msra.mxu0 0.0
      %1955 = vmatprep.subr.mxu0 0.0
      %1956 = vmatpush2.xpose.msra.mxu0 0.0
      %1957 = vmatprep.subr.mxu0 0.0
      %1958 = vmatpush2.xpose.msra.mxu0 0.0
      %1959 = vmatprep.subr.mxu0 0.0
      %1960 = vmatpush2.xpose.msra.mxu0 0.0
      %1961 = vmatprep.mubr.f32.mxu0 0.0
      %1962 = vmatmul.mubr.f32.gmra.mxu0 %v1893
      %v1963 = vpop.f32.mrf.mxu0
      %v1964 = vadd.f32 %v1557, %v1963
      %v1965 = vpop.f32.mrf.mxu0
      %1966 = vdwg.mxu0
      %v1967 = vsel %vm830, %v1964, -inf
      %1968 = vmax.xlane.f32.xlu0 %v1967
      %v1969 = vpop.xlane.xlu0 %1968
      %v1970 = vsub.f32 %v1964, %v1969
      %v1971 = vmul.f32 %v1970, 1.442695
      %v1972 = vpow.pop %v1971
      %v1973 = vsel %vm830, %v1972, 0.0
      %1974 = vadd.xlane.f32.xlu0 %v1973
      %v1975 = vpop.xlane.xlu0 %1974
      %v1976 = vrcp.pop %v1975
      %v1977 = vmul.f32 %v1972, %v1976
      %1978 = vrot.lane.b32.xlu0 %v1556, 48
      %v1979 = vpop.permute.xlu0 %1978
      %v1982 = vsel %vm830, %v1977, 0
      %1984 = vmatprep.subr.mxu0 0.0
      %1985 = vmatpush1.msra.mxu0 0.0
      %1986 = vmatprep.subr.mxu0 0.0
      %1987 = vmatpush1.msra.mxu0 0.0
      %1988 = vmatprep.subr.mxu0 0.0
      %1989 = vmatpush1.msra.mxu0 0.0
      %1990 = vmatprep.subr.mxu0 0.0
      %1991 = vmatpush1.msra.mxu0 0.0
      %1992 = vmatprep.subr.mxu0 0.0
      %1993 = vmatpush1.msra.mxu0 0.0
      %1994 = vmatprep.subr.mxu0 0.0
      %1995 = vmatpush1.msra.mxu0 0.0
      %1996 = vmatprep.subr.mxu0 0.0
      %1997 = vmatpush1.msra.mxu0 0.0
      %1998 = vmatprep.subr.mxu0 0.0
      %1999 = vmatpush1.msra.mxu0 0.0
      %2000 = vmatprep.subr.mxu0 0.0
      %2001 = vmatpush1.msra.mxu0 0.0
      %2002 = vmatprep.subr.mxu0 0.0
      %2003 = vmatpush1.msra.mxu0 0.0
      %2004 = vmatprep.subr.mxu0 0.0
      %2005 = vmatpush1.msra.mxu0 0.0
      %2006 = vmatprep.subr.mxu0 0.0
      %2007 = vmatpush1.msra.mxu0 0.0
      %2008 = vmatprep.subr.mxu0 0.0
      %2009 = vmatpush1.msra.mxu0 0.0
      %2010 = vmatprep.subr.mxu0 0.0
      %2011 = vmatpush1.msra.mxu0 0.0
      %2012 = vmatprep.subr.mxu0 0.0
      %2013 = vmatpush1.msra.mxu0 0.0
      %2014 = vmatprep.subr.mxu0 0.0
      %2015 = vmatpush1.msra.mxu0 %v1979
      %2016 = vmatprep.subr.mxu0 0.0
      %2017 = vmatpush2.msra.mxu0 0.0
      %2018 = vmatprep.subr.mxu0 0.0
      %2019 = vmatpush2.msra.mxu0 0.0
      %2020 = vmatprep.subr.mxu0 0.0
      %2021 = vmatpush2.msra.mxu0 0.0
      %2022 = vmatprep.subr.mxu0 0.0
      %2023 = vmatpush2.msra.mxu0 0.0
      %2024 = vmatprep.subr.mxu0 0.0
      %2025 = vmatpush2.msra.mxu0 0.0
      %2026 = vmatprep.subr.mxu0 0.0
      %2027 = vmatpush2.msra.mxu0 0.0
      %2028 = vmatprep.subr.mxu0 0.0
      %2029 = vmatpush2.msra.mxu0 0.0
      %2030 = vmatprep.subr.mxu0 0.0
      %2031 = vmatpush2.msra.mxu0 0.0
      %2032 = vmatprep.subr.mxu0 0.0
      %2033 = vmatpush2.msra.mxu0 0.0
      %2034 = vmatprep.subr.mxu0 0.0
      %2035 = vmatpush2.msra.mxu0 0.0
      %2036 = vmatprep.subr.mxu0 0.0
      %2037 = vmatpush2.msra.mxu0 0.0
      %2038 = vmatprep.subr.mxu0 0.0
      %2039 = vmatpush2.msra.mxu0 0.0
      %2040 = vmatprep.subr.mxu0 0.0
      %2041 = vmatpush2.msra.mxu0 0.0
      %2042 = vmatprep.subr.mxu0 0.0
      %2043 = vmatpush2.msra.mxu0 0.0
      %2044 = vmatprep.subr.mxu0 0.0
      %2045 = vmatpush2.msra.mxu0 0.0
      %2046 = vmatprep.subr.mxu0 0.0
      %2047 = vmatpush2.msra.mxu0 0.0
      %2048 = vmatprep.mubr.f32.mxu0 0.0
      %2049 = vmatmul.mubr.f32.gmra.mxu0 %v1982
      %v2050 = vpop.f32.mrf.mxu0
      %v2051 = vadd.f32 0.0, %v2050
      %v2052 = vpop.f32.mrf.mxu0
      %2053 = vdwg.mxu0
      %2054 = vrot.lane.b32.xlu0 %v1555, 104
      %v2055 = vpop.permute.xlu0 %2054
      %2056 = vrot.lane.b32.xlu0 %v1556, 72
      %v2057 = vpop.permute.xlu0 %2056
      %v2058 = vsel %vm830, %v2055, 0
      %v2060 = vsel %vm830, %v2057, 0
      %2062 = vmatprep.subr.mxu0 0.0
      %2063 = vmatpush1.xpose.msra.mxu0 0.0
      %2064 = vmatprep.subr.mxu0 0.0
      %2065 = vmatpush1.xpose.msra.mxu0 0.0
      %2066 = vmatprep.subr.mxu0 0.0
      %2067 = vmatpush1.xpose.msra.mxu0 0.0
      %2068 = vmatprep.subr.mxu0 0.0
      %2069 = vmatpush1.xpose.msra.mxu0 0.0
      %2070 = vmatprep.subr.mxu0 0.0
      %2071 = vmatpush1.xpose.msra.mxu0 0.0
      %2072 = vmatprep.subr.mxu0 0.0
      %2073 = vmatpush1.xpose.msra.mxu0 0.0
      %2074 = vmatprep.subr.mxu0 0.0
      %2075 = vmatpush1.xpose.msra.mxu0 0.0
      %2076 = vmatprep.subr.mxu0 0.0
      %2077 = vmatpush1.xpose.msra.mxu0 0.0
      %2078 = vmatprep.subr.mxu0 0.0
      %2079 = vmatpush1.xpose.msra.mxu0 0.0
      %2080 = vmatprep.subr.mxu0 0.0
      %2081 = vmatpush1.xpose.msra.mxu0 0.0
      %2082 = vmatprep.subr.mxu0 0.0
      %2083 = vmatpush1.xpose.msra.mxu0 0.0
      %2084 = vmatprep.subr.mxu0 0.0
      %2085 = vmatpush1.xpose.msra.mxu0 0.0
      %2086 = vmatprep.subr.mxu0 0.0
      %2087 = vmatpush1.xpose.msra.mxu0 0.0
      %2088 = vmatprep.subr.mxu0 0.0
      %2089 = vmatpush1.xpose.msra.mxu0 0.0
      %2090 = vmatprep.subr.mxu0 0.0
      %2091 = vmatpush1.xpose.msra.mxu0 0.0
      %2092 = vmatprep.subr.mxu0 0.0
      %2093 = vmatpush1.xpose.msra.mxu0 %v2060
      %2094 = vmatprep.subr.mxu0 0.0
      %2095 = vmatpush2.xpose.msra.mxu0 0.0
      %2096 = vmatprep.subr.mxu0 0.0
      %2097 = vmatpush2.xpose.msra.mxu0 0.0
      %2098 = vmatprep.subr.mxu0 0.0
      %2099 = vmatpush2.xpose.msra.mxu0 0.0
      %2100 = vmatprep.subr.mxu0 0.0
      %2101 = vmatpush2.xpose.msra.mxu0 0.0
      %2102 = vmatprep.subr.mxu0 0.0
      %2103 = vmatpush2.xpose.msra.mxu0 0.0
      %2104 = vmatprep.subr.mxu0 0.0
      %2105 = vmatpush2.xpose.msra.mxu0 0.0
      %2106 = vmatprep.subr.mxu0 0.0
      %2107 = vmatpush2.xpose.msra.mxu0 0.0
      %2108 = vmatprep.subr.mxu0 0.0
      %2109 = vmatpush2.xpose.msra.mxu0 0.0
      %2110 = vmatprep.subr.mxu0 0.0
      %2111 = vmatpush2.xpose.msra.mxu0 0.0
      %2112 = vmatprep.subr.mxu0 0.0
      %2113 = vmatpush2.xpose.msra.mxu0 0.0
      %2114 = vmatprep.subr.mxu0 0.0
      %2115 = vmatpush2.xpose.msra.mxu0 0.0
      %2116 = vmatprep.subr.mxu0 0.0
      %2117 = vmatpush2.xpose.msra.mxu0 0.0
      %2118 = vmatprep.subr.mxu0 0.0
      %2119 = vmatpush2.xpose.msra.mxu0 0.0
      %2120 = vmatprep.subr.mxu0 0.0
      %2121 = vmatpush2.xpose.msra.mxu0 0.0
      %2122 = vmatprep.subr.mxu0 0.0
      %2123 = vmatpush2.xpose.msra.mxu0 0.0
      %2124 = vmatprep.subr.mxu0 0.0
      %2125 = vmatpush2.xpose.msra.mxu0 0.0
      %2126 = vmatprep.mubr.f32.mxu0 0.0
      %2127 = vmatmul.mubr.f32.gmra.mxu0 %v2058
      %v2128 = vpop.f32.mrf.mxu0
      %v2129 = vadd.f32 %v1723, %v2128
      %v2130 = vpop.f32.mrf.mxu0
      %2131 = vdwg.mxu0
      %v2132 = vsel %vm830, %v2129, -inf
      %2133 = vmax.xlane.f32.xlu0 %v2132
      %v2134 = vpop.xlane.xlu0 %2133
      %v2135 = vsub.f32 %v2129, %v2134
      %v2136 = vmul.f32 %v2135, 1.442695
      %v2137 = vpow.pop %v2136
      %v2138 = vsel %vm830, %v2137, 0.0
      %2139 = vadd.xlane.f32.xlu0 %v2138
      %v2140 = vpop.xlane.xlu0 %2139
      %v2141 = vrcp.pop %v2140
      %v2142 = vmul.f32 %v2137, %v2141
      %2143 = vrot.lane.b32.xlu0 %v1556, 40
      %v2144 = vpop.permute.xlu0 %2143
      %v2147 = vsel %vm830, %v2142, 0
      %2149 = vmatprep.subr.mxu0 0.0
      %2150 = vmatpush1.msra.mxu0 0.0
      %2151 = vmatprep.subr.mxu0 0.0
      %2152 = vmatpush1.msra.mxu0 0.0
      %2153 = vmatprep.subr.mxu0 0.0
      %2154 = vmatpush1.msra.mxu0 0.0
      %2155 = vmatprep.subr.mxu0 0.0
      %2156 = vmatpush1.msra.mxu0 0.0
      %2157 = vmatprep.subr.mxu0 0.0
      %2158 = vmatpush1.msra.mxu0 0.0
      %2159 = vmatprep.subr.mxu0 0.0
      %2160 = vmatpush1.msra.mxu0 0.0
      %2161 = vmatprep.subr.mxu0 0.0
      %2162 = vmatpush1.msra.mxu0 0.0
      %2163 = vmatprep.subr.mxu0 0.0
      %2164 = vmatpush1.msra.mxu0 0.0
      %2165 = vmatprep.subr.mxu0 0.0
      %2166 = vmatpush1.msra.mxu0 0.0
      %2167 = vmatprep.subr.mxu0 0.0
      %2168 = vmatpush1.msra.mxu0 0.0
      %2169 = vmatprep.subr.mxu0 0.0
      %2170 = vmatpush1.msra.mxu0 0.0
      %2171 = vmatprep.subr.mxu0 0.0
      %2172 = vmatpush1.msra.mxu0 0.0
      %2173 = vmatprep.subr.mxu0 0.0
      %2174 = vmatpush1.msra.mxu0 0.0
      %2175 = vmatprep.subr.mxu0 0.0
      %2176 = vmatpush1.msra.mxu0 0.0
      %2177 = vmatprep.subr.mxu0 0.0
      %2178 = vmatpush1.msra.mxu0 0.0
      %2179 = vmatprep.subr.mxu0 0.0
      %2180 = vmatpush1.msra.mxu0 %v2144
      %2181 = vmatprep.subr.mxu0 0.0
      %2182 = vmatpush2.msra.mxu0 0.0
      %2183 = vmatprep.subr.mxu0 0.0
      %2184 = vmatpush2.msra.mxu0 0.0
      %2185 = vmatprep.subr.mxu0 0.0
      %2186 = vmatpush2.msra.mxu0 0.0
      %2187 = vmatprep.subr.mxu0 0.0
      %2188 = vmatpush2.msra.mxu0 0.0
      %2189 = vmatprep.subr.mxu0 0.0
      %2190 = vmatpush2.msra.mxu0 0.0
      %2191 = vmatprep.subr.mxu0 0.0
      %2192 = vmatpush2.msra.mxu0 0.0
      %2193 = vmatprep.subr.mxu0 0.0
      %2194 = vmatpush2.msra.mxu0 0.0
      %2195 = vmatprep.subr.mxu0 0.0
      %2196 = vmatpush2.msra.mxu0 0.0
      %2197 = vmatprep.subr.mxu0 0.0
      %2198 = vmatpush2.msra.mxu0 0.0
      %2199 = vmatprep.subr.mxu0 0.0
      %2200 = vmatpush2.msra.mxu0 0.0
      %2201 = vmatprep.subr.mxu0 0.0
      %2202 = vmatpush2.msra.mxu0 0.0
      %2203 = vmatprep.subr.mxu0 0.0
      %2204 = vmatpush2.msra.mxu0 0.0
      %2205 = vmatprep.subr.mxu0 0.0
      %2206 = vmatpush2.msra.mxu0 0.0
      %2207 = vmatprep.subr.mxu0 0.0
      %2208 = vmatpush2.msra.mxu0 0.0
      %2209 = vmatprep.subr.mxu0 0.0
      %2210 = vmatpush2.msra.mxu0 0.0
      %2211 = vmatprep.subr.mxu0 0.0
      %2212 = vmatpush2.msra.mxu0 0.0
      %2213 = vmatprep.mubr.f32.mxu0 0.0
      %2214 = vmatmul.mubr.f32.gmra.mxu0 %v2147
      %v2215 = vpop.f32.mrf.mxu0
      %v2216 = vadd.f32 0.0, %v2215
      %v2217 = vpop.f32.mrf.mxu0
      %2218 = vdwg.mxu0
      %2220 = vrot.lane.b32.xlu0 %v1886, 8
      %v2221 = vpop.permute.xlu0 %2220
      %2224 = vrot.lane.b32.xlu0 %v2051, 16
      %v2225 = vpop.permute.xlu0 %2224
      %2228 = vrot.lane.b32.xlu0 %v2216, 24
      %v2229 = vpop.permute.xlu0 %2228
      %v2231 = vsel %vm830, %v1720, %v2221
      %vm2232 = vcmask 130048
      %v2233 = vsel %vm2232, %v2231, %v2225
      %vm2234 = vcmask 195584
      %v2235 = vsel %vm2234, %v2233, %v2229
      %v2236 = vld [vmem:[%s820] sm:$0xff]
      %v2237 = vld [vmem:[%s775] sm:$0xff]
      %2239 = vrot.lane.b32.xlu0 %v2237, 96
      %v2240 = vpop.permute.xlu0 %2239
      %v2242 = vsel %vm830, %v2236, 0
      %v2244 = vsel %vm830, %v2240, 0
      %2246 = vmatprep.subr.mxu0 0.0
      %2247 = vmatpush1.xpose.msra.mxu0 0.0
      %2248 = vmatprep.subr.mxu0 0.0
      %2249 = vmatpush1.xpose.msra.mxu0 0.0
      %2250 = vmatprep.subr.mxu0 0.0
      %2251 = vmatpush1.xpose.msra.mxu0 0.0
      %2252 = vmatprep.subr.mxu0 0.0
      %2253 = vmatpush1.xpose.msra.mxu0 0.0
      %2254 = vmatprep.subr.mxu0 0.0
      %2255 = vmatpush1.xpose.msra.mxu0 0.0
      %2256 = vmatprep.subr.mxu0 0.0
      %2257 = vmatpush1.xpose.msra.mxu0 0.0
      %2258 = vmatprep.subr.mxu0 0.0
      %2259 = vmatpush1.xpose.msra.mxu0 0.0
      %2260 = vmatprep.subr.mxu0 0.0
      %2261 = vmatpush1.xpose.msra.mxu0 0.0
      %2262 = vmatprep.subr.mxu0 0.0
      %2263 = vmatpush1.xpose.msra.mxu0 0.0
      %2264 = vmatprep.subr.mxu0 0.0
      %2265 = vmatpush1.xpose.msra.mxu0 0.0
      %2266 = vmatprep.subr.mxu0 0.0
      %2267 = vmatpush1.xpose.msra.mxu0 0.0
      %2268 = vmatprep.subr.mxu0 0.0
      %2269 = vmatpush1.xpose.msra.mxu0 0.0
      %2270 = vmatprep.subr.mxu0 0.0
      %2271 = vmatpush1.xpose.msra.mxu0 0.0
      %2272 = vmatprep.subr.mxu0 0.0
      %2273 = vmatpush1.xpose.msra.mxu0 0.0
      %2274 = vmatprep.subr.mxu0 0.0
      %2275 = vmatpush1.xpose.msra.mxu0 0.0
      %2276 = vmatprep.subr.mxu0 0.0
      %2277 = vmatpush1.xpose.msra.mxu0 %v2244
      %2278 = vmatprep.subr.mxu0 0.0
      %2279 = vmatpush2.xpose.msra.mxu0 0.0
      %2280 = vmatprep.subr.mxu0 0.0
      %2281 = vmatpush2.xpose.msra.mxu0 0.0
      %2282 = vmatprep.subr.mxu0 0.0
      %2283 = vmatpush2.xpose.msra.mxu0 0.0
      %2284 = vmatprep.subr.mxu0 0.0
      %2285 = vmatpush2.xpose.msra.mxu0 0.0
      %2286 = vmatprep.subr.mxu0 0.0
      %2287 = vmatpush2.xpose.msra.mxu0 0.0
      %2288 = vmatprep.subr.mxu0 0.0
      %2289 = vmatpush2.xpose.msra.mxu0 0.0
      %2290 = vmatprep.subr.mxu0 0.0
      %2291 = vmatpush2.xpose.msra.mxu0 0.0
      %2292 = vmatprep.subr.mxu0 0.0
      %2293 = vmatpush2.xpose.msra.mxu0 0.0
      %2294 = vmatprep.subr.mxu0 0.0
      %2295 = vmatpush2.xpose.msra.mxu0 0.0
      %2296 = vmatprep.subr.mxu0 0.0
      %2297 = vmatpush2.xpose.msra.mxu0 0.0
      %2298 = vmatprep.subr.mxu0 0.0
      %2299 = vmatpush2.xpose.msra.mxu0 0.0
      %2300 = vmatprep.subr.mxu0 0.0
      %2301 = vmatpush2.xpose.msra.mxu0 0.0
      %2302 = vmatprep.subr.mxu0 0.0
      %2303 = vmatpush2.xpose.msra.mxu0 0.0
      %2304 = vmatprep.subr.mxu0 0.0
      %2305 = vmatpush2.xpose.msra.mxu0 0.0
      %2306 = vmatprep.subr.mxu0 0.0
      %2307 = vmatpush2.xpose.msra.mxu0 0.0
      %2308 = vmatprep.subr.mxu0 0.0
      %2309 = vmatpush2.xpose.msra.mxu0 0.0
      %2310 = vmatprep.mubr.f32.mxu0 0.0
      %2311 = vmatmul.mubr.f32.gmra.mxu0 %v2242
      %v2312 = vpop.f32.mrf.mxu0
      %v2313 = vadd.f32 %v1557, %v2312
      %v2314 = vpop.f32.mrf.mxu0
      %2315 = vdwg.mxu0
      %v2316 = vsel %vm830, %v2313, -inf
      %2317 = vmax.xlane.f32.xlu0 %v2316
      %v2318 = vpop.xlane.xlu0 %2317
      %v2319 = vsub.f32 %v2313, %v2318
      %v2320 = vmul.f32 %v2319, 1.442695
      %v2321 = vpow.pop %v2320
      %v2322 = vsel %vm830, %v2321, 0.0
      %2323 = vadd.xlane.f32.xlu0 %v2322
      %v2324 = vpop.xlane.xlu0 %2323
      %v2325 = vrcp.pop %v2324
      %v2326 = vmul.f32 %v2321, %v2325
      %2327 = vrot.lane.b32.xlu0 %v2237, 64
      %v2328 = vpop.permute.xlu0 %2327
      %v2331 = vsel %vm830, %v2326, 0
      %2333 = vmatprep.subr.mxu0 0.0
      %2334 = vmatpush1.msra.mxu0 0.0
      %2335 = vmatprep.subr.mxu0 0.0
      %2336 = vmatpush1.msra.mxu0 0.0
      %2337 = vmatprep.subr.mxu0 0.0
      %2338 = vmatpush1.msra.mxu0 0.0
      %2339 = vmatprep.subr.mxu0 0.0
      %2340 = vmatpush1.msra.mxu0 0.0
      %2341 = vmatprep.subr.mxu0 0.0
      %2342 = vmatpush1.msra.mxu0 0.0
      %2343 = vmatprep.subr.mxu0 0.0
      %2344 = vmatpush1.msra.mxu0 0.0
      %2345 = vmatprep.subr.mxu0 0.0
      %2346 = vmatpush1.msra.mxu0 0.0
      %2347 = vmatprep.subr.mxu0 0.0
      %2348 = vmatpush1.msra.mxu0 0.0
      %2349 = vmatprep.subr.mxu0 0.0
      %2350 = vmatpush1.msra.mxu0 0.0
      %2351 = vmatprep.subr.mxu0 0.0
      %2352 = vmatpush1.msra.mxu0 0.0
      %2353 = vmatprep.subr.mxu0 0.0
      %2354 = vmatpush1.msra.mxu0 0.0
      %2355 = vmatprep.subr.mxu0 0.0
      %2356 = vmatpush1.msra.mxu0 0.0
      %2357 = vmatprep.subr.mxu0 0.0
      %2358 = vmatpush1.msra.mxu0 0.0
      %2359 = vmatprep.subr.mxu0 0.0
      %2360 = vmatpush1.msra.mxu0 0.0
      %2361 = vmatprep.subr.mxu0 0.0
      %2362 = vmatpush1.msra.mxu0 0.0
      %2363 = vmatprep.subr.mxu0 0.0
      %2364 = vmatpush1.msra.mxu0 %v2328
      %2365 = vmatprep.subr.mxu0 0.0
      %2366 = vmatpush2.msra.mxu0 0.0
      %2367 = vmatprep.subr.mxu0 0.0
      %2368 = vmatpush2.msra.mxu0 0.0
      %2369 = vmatprep.subr.mxu0 0.0
      %2370 = vmatpush2.msra.mxu0 0.0
      %2371 = vmatprep.subr.mxu0 0.0
      %2372 = vmatpush2.msra.mxu0 0.0
      %2373 = vmatprep.subr.mxu0 0.0
      %2374 = vmatpush2.msra.mxu0 0.0
      %2375 = vmatprep.subr.mxu0 0.0
      %2376 = vmatpush2.msra.mxu0 0.0
      %2377 = vmatprep.subr.mxu0 0.0
      %2378 = vmatpush2.msra.mxu0 0.0
      %2379 = vmatprep.subr.mxu0 0.0
      %2380 = vmatpush2.msra.mxu0 0.0
      %2381 = vmatprep.subr.mxu0 0.0
      %2382 = vmatpush2.msra.mxu0 0.0
      %2383 = vmatprep.subr.mxu0 0.0
      %2384 = vmatpush2.msra.mxu0 0.0
      %2385 = vmatprep.subr.mxu0 0.0
      %2386 = vmatpush2.msra.mxu0 0.0
      %2387 = vmatprep.subr.mxu0 0.0
      %2388 = vmatpush2.msra.mxu0 0.0
      %2389 = vmatprep.subr.mxu0 0.0
      %2390 = vmatpush2.msra.mxu0 0.0
      %2391 = vmatprep.subr.mxu0 0.0
      %2392 = vmatpush2.msra.mxu0 0.0
      %2393 = vmatprep.subr.mxu0 0.0
      %2394 = vmatpush2.msra.mxu0 0.0
      %2395 = vmatprep.subr.mxu0 0.0
      %2396 = vmatpush2.msra.mxu0 0.0
      %2397 = vmatprep.mubr.f32.mxu0 0.0
      %2398 = vmatmul.mubr.f32.gmra.mxu0 %v2331
      %v2399 = vpop.f32.mrf.mxu0
      %v2400 = vadd.f32 0.0, %v2399
      %v2401 = vpop.f32.mrf.mxu0
      %2402 = vdwg.mxu0
      %2403 = vrot.lane.b32.xlu0 %v2236, 120
      %v2404 = vpop.permute.xlu0 %2403
      %2405 = vrot.lane.b32.xlu0 %v2237, 88
      %v2406 = vpop.permute.xlu0 %2405
      %v2407 = vsel %vm830, %v2404, 0
      %v2409 = vsel %vm830, %v2406, 0
      %2411 = vmatprep.subr.mxu0 0.0
      %2412 = vmatpush1.xpose.msra.mxu0 0.0
      %2413 = vmatprep.subr.mxu0 0.0
      %2414 = vmatpush1.xpose.msra.mxu0 0.0
      %2415 = vmatprep.subr.mxu0 0.0
      %2416 = vmatpush1.xpose.msra.mxu0 0.0
      %2417 = vmatprep.subr.mxu0 0.0
      %2418 = vmatpush1.xpose.msra.mxu0 0.0
      %2419 = vmatprep.subr.mxu0 0.0
      %2420 = vmatpush1.xpose.msra.mxu0 0.0
      %2421 = vmatprep.subr.mxu0 0.0
      %2422 = vmatpush1.xpose.msra.mxu0 0.0
      %2423 = vmatprep.subr.mxu0 0.0
      %2424 = vmatpush1.xpose.msra.mxu0 0.0
      %2425 = vmatprep.subr.mxu0 0.0
      %2426 = vmatpush1.xpose.msra.mxu0 0.0
      %2427 = vmatprep.subr.mxu0 0.0
      %2428 = vmatpush1.xpose.msra.mxu0 0.0
      %2429 = vmatprep.subr.mxu0 0.0
      %2430 = vmatpush1.xpose.msra.mxu0 0.0
      %2431 = vmatprep.subr.mxu0 0.0
      %2432 = vmatpush1.xpose.msra.mxu0 0.0
      %2433 = vmatprep.subr.mxu0 0.0
      %2434 = vmatpush1.xpose.msra.mxu0 0.0
      %2435 = vmatprep.subr.mxu0 0.0
      %2436 = vmatpush1.xpose.msra.mxu0 0.0
      %2437 = vmatprep.subr.mxu0 0.0
      %2438 = vmatpush1.xpose.msra.mxu0 0.0
      %2439 = vmatprep.subr.mxu0 0.0
      %2440 = vmatpush1.xpose.msra.mxu0 0.0
      %2441 = vmatprep.subr.mxu0 0.0
      %2442 = vmatpush1.xpose.msra.mxu0 %v2409
      %2443 = vmatprep.subr.mxu0 0.0
      %2444 = vmatpush2.xpose.msra.mxu0 0.0
      %2445 = vmatprep.subr.mxu0 0.0
      %2446 = vmatpush2.xpose.msra.mxu0 0.0
      %2447 = vmatprep.subr.mxu0 0.0
      %2448 = vmatpush2.xpose.msra.mxu0 0.0
      %2449 = vmatprep.subr.mxu0 0.0
      %2450 = vmatpush2.xpose.msra.mxu0 0.0
      %2451 = vmatprep.subr.mxu0 0.0
      %2452 = vmatpush2.xpose.msra.mxu0 0.0
      %2453 = vmatprep.subr.mxu0 0.0
      %2454 = vmatpush2.xpose.msra.mxu0 0.0
      %2455 = vmatprep.subr.mxu0 0.0
      %2456 = vmatpush2.xpose.msra.mxu0 0.0
      %2457 = vmatprep.subr.mxu0 0.0
      %2458 = vmatpush2.xpose.msra.mxu0 0.0
      %2459 = vmatprep.subr.mxu0 0.0
      %2460 = vmatpush2.xpose.msra.mxu0 0.0
      %2461 = vmatprep.subr.mxu0 0.0
      %2462 = vmatpush2.xpose.msra.mxu0 0.0
      %2463 = vmatprep.subr.mxu0 0.0
      %2464 = vmatpush2.xpose.msra.mxu0 0.0
      %2465 = vmatprep.subr.mxu0 0.0
      %2466 = vmatpush2.xpose.msra.mxu0 0.0
      %2467 = vmatprep.subr.mxu0 0.0
      %2468 = vmatpush2.xpose.msra.mxu0 0.0
      %2469 = vmatprep.subr.mxu0 0.0
      %2470 = vmatpush2.xpose.msra.mxu0 0.0
      %2471 = vmatprep.subr.mxu0 0.0
      %2472 = vmatpush2.xpose.msra.mxu0 0.0
      %2473 = vmatprep.subr.mxu0 0.0
      %2474 = vmatpush2.xpose.msra.mxu0 0.0
      %2475 = vmatprep.mubr.f32.mxu0 0.0
      %2476 = vmatmul.mubr.f32.gmra.mxu0 %v2407
      %v2477 = vpop.f32.mrf.mxu0
      %v2478 = vadd.f32 %v1723, %v2477
      %v2479 = vpop.f32.mrf.mxu0
      %2480 = vdwg.mxu0
      %v2481 = vsel %vm830, %v2478, -inf
      %2482 = vmax.xlane.f32.xlu0 %v2481
      %v2483 = vpop.xlane.xlu0 %2482
      %v2484 = vsub.f32 %v2478, %v2483
      %v2485 = vmul.f32 %v2484, 1.442695
      %v2486 = vpow.pop %v2485
      %v2487 = vsel %vm830, %v2486, 0.0
      %2488 = vadd.xlane.f32.xlu0 %v2487
      %v2489 = vpop.xlane.xlu0 %2488
      %v2490 = vrcp.pop %v2489
      %v2491 = vmul.f32 %v2486, %v2490
      %2492 = vrot.lane.b32.xlu0 %v2237, 56
      %v2493 = vpop.permute.xlu0 %2492
      %v2496 = vsel %vm830, %v2491, 0
      %2498 = vmatprep.subr.mxu0 0.0
      %2499 = vmatpush1.msra.mxu0 0.0
      %2500 = vmatprep.subr.mxu0 0.0
      %2501 = vmatpush1.msra.mxu0 0.0
      %2502 = vmatprep.subr.mxu0 0.0
      %2503 = vmatpush1.msra.mxu0 0.0
      %2504 = vmatprep.subr.mxu0 0.0
      %2505 = vmatpush1.msra.mxu0 0.0
      %2506 = vmatprep.subr.mxu0 0.0
      %2507 = vmatpush1.msra.mxu0 0.0
      %2508 = vmatprep.subr.mxu0 0.0
      %2509 = vmatpush1.msra.mxu0 0.0
      %2510 = vmatprep.subr.mxu0 0.0
      %2511 = vmatpush1.msra.mxu0 0.0
      %2512 = vmatprep.subr.mxu0 0.0
      %2513 = vmatpush1.msra.mxu0 0.0
      %2514 = vmatprep.subr.mxu0 0.0
      %2515 = vmatpush1.msra.mxu0 0.0
      %2516 = vmatprep.subr.mxu0 0.0
      %2517 = vmatpush1.msra.mxu0 0.0
      %2518 = vmatprep.subr.mxu0 0.0
      %2519 = vmatpush1.msra.mxu0 0.0
      %2520 = vmatprep.subr.mxu0 0.0
      %2521 = vmatpush1.msra.mxu0 0.0
      %2522 = vmatprep.subr.mxu0 0.0
      %2523 = vmatpush1.msra.mxu0 0.0
      %2524 = vmatprep.subr.mxu0 0.0
      %2525 = vmatpush1.msra.mxu0 0.0
      %2526 = vmatprep.subr.mxu0 0.0
      %2527 = vmatpush1.msra.mxu0 0.0
      %2528 = vmatprep.subr.mxu0 0.0
      %2529 = vmatpush1.msra.mxu0 %v2493
      %2530 = vmatprep.subr.mxu0 0.0
      %2531 = vmatpush2.msra.mxu0 0.0
      %2532 = vmatprep.subr.mxu0 0.0
      %2533 = vmatpush2.msra.mxu0 0.0
      %2534 = vmatprep.subr.mxu0 0.0
      %2535 = vmatpush2.msra.mxu0 0.0
      %2536 = vmatprep.subr.mxu0 0.0
      %2537 = vmatpush2.msra.mxu0 0.0
      %2538 = vmatprep.subr.mxu0 0.0
      %2539 = vmatpush2.msra.mxu0 0.0
      %2540 = vmatprep.subr.mxu0 0.0
      %2541 = vmatpush2.msra.mxu0 0.0
      %2542 = vmatprep.subr.mxu0 0.0
      %2543 = vmatpush2.msra.mxu0 0.0
      %2544 = vmatprep.subr.mxu0 0.0
      %2545 = vmatpush2.msra.mxu0 0.0
      %2546 = vmatprep.subr.mxu0 0.0
      %2547 = vmatpush2.msra.mxu0 0.0
      %2548 = vmatprep.subr.mxu0 0.0
      %2549 = vmatpush2.msra.mxu0 0.0
      %2550 = vmatprep.subr.mxu0 0.0
      %2551 = vmatpush2.msra.mxu0 0.0
      %2552 = vmatprep.subr.mxu0 0.0
      %2553 = vmatpush2.msra.mxu0 0.0
      %2554 = vmatprep.subr.mxu0 0.0
      %2555 = vmatpush2.msra.mxu0 0.0
      %2556 = vmatprep.subr.mxu0 0.0
      %2557 = vmatpush2.msra.mxu0 0.0
      %2558 = vmatprep.subr.mxu0 0.0
      %2559 = vmatpush2.msra.mxu0 0.0
      %2560 = vmatprep.subr.mxu0 0.0
      %2561 = vmatpush2.msra.mxu0 0.0
      %2562 = vmatprep.mubr.f32.mxu0 0.0
      %2563 = vmatmul.mubr.f32.gmra.mxu0 %v2496
      %v2564 = vpop.f32.mrf.mxu0
      %v2565 = vadd.f32 0.0, %v2564
      %v2566 = vpop.f32.mrf.mxu0
      %2567 = vdwg.mxu0
      %2568 = vrot.lane.b32.xlu0 %v2236, 112
      %v2569 = vpop.permute.xlu0 %2568
      %2570 = vrot.lane.b32.xlu0 %v2237, 80
      %v2571 = vpop.permute.xlu0 %2570
      %v2572 = vsel %vm830, %v2569, 0
      %v2574 = vsel %vm830, %v2571, 0
      %2576 = vmatprep.subr.mxu0 0.0
      %2577 = vmatpush1.xpose.msra.mxu0 0.0
      %2578 = vmatprep.subr.mxu0 0.0
      %2579 = vmatpush1.xpose.msra.mxu0 0.0
      %2580 = vmatprep.subr.mxu0 0.0
      %2581 = vmatpush1.xpose.msra.mxu0 0.0
      %2582 = vmatprep.subr.mxu0 0.0
      %2583 = vmatpush1.xpose.msra.mxu0 0.0
      %2584 = vmatprep.subr.mxu0 0.0
      %2585 = vmatpush1.xpose.msra.mxu0 0.0
      %2586 = vmatprep.subr.mxu0 0.0
      %2587 = vmatpush1.xpose.msra.mxu0 0.0
      %2588 = vmatprep.subr.mxu0 0.0
      %2589 = vmatpush1.xpose.msra.mxu0 0.0
      %2590 = vmatprep.subr.mxu0 0.0
      %2591 = vmatpush1.xpose.msra.mxu0 0.0
      %2592 = vmatprep.subr.mxu0 0.0
      %2593 = vmatpush1.xpose.msra.mxu0 0.0
      %2594 = vmatprep.subr.mxu0 0.0
      %2595 = vmatpush1.xpose.msra.mxu0 0.0
      %2596 = vmatprep.subr.mxu0 0.0
      %2597 = vmatpush1.xpose.msra.mxu0 0.0
      %2598 = vmatprep.subr.mxu0 0.0
      %2599 = vmatpush1.xpose.msra.mxu0 0.0
      %2600 = vmatprep.subr.mxu0 0.0
      %2601 = vmatpush1.xpose.msra.mxu0 0.0
      %2602 = vmatprep.subr.mxu0 0.0
      %2603 = vmatpush1.xpose.msra.mxu0 0.0
      %2604 = vmatprep.subr.mxu0 0.0
      %2605 = vmatpush1.xpose.msra.mxu0 0.0
      %2606 = vmatprep.subr.mxu0 0.0
      %2607 = vmatpush1.xpose.msra.mxu0 %v2574
      %2608 = vmatprep.subr.mxu0 0.0
      %2609 = vmatpush2.xpose.msra.mxu0 0.0
      %2610 = vmatprep.subr.mxu0 0.0
      %2611 = vmatpush2.xpose.msra.mxu0 0.0
      %2612 = vmatprep.subr.mxu0 0.0
      %2613 = vmatpush2.xpose.msra.mxu0 0.0
      %2614 = vmatprep.subr.mxu0 0.0
      %2615 = vmatpush2.xpose.msra.mxu0 0.0
      %2616 = vmatprep.subr.mxu0 0.0
      %2617 = vmatpush2.xpose.msra.mxu0 0.0
      %2618 = vmatprep.subr.mxu0 0.0
      %2619 = vmatpush2.xpose.msra.mxu0 0.0
      %2620 = vmatprep.subr.mxu0 0.0
      %2621 = vmatpush2.xpose.msra.mxu0 0.0
      %2622 = vmatprep.subr.mxu0 0.0
      %2623 = vmatpush2.xpose.msra.mxu0 0.0
      %2624 = vmatprep.subr.mxu0 0.0
      %2625 = vmatpush2.xpose.msra.mxu0 0.0
      %2626 = vmatprep.subr.mxu0 0.0
      %2627 = vmatpush2.xpose.msra.mxu0 0.0
      %2628 = vmatprep.subr.mxu0 0.0
      %2629 = vmatpush2.xpose.msra.mxu0 0.0
      %2630 = vmatprep.subr.mxu0 0.0
      %2631 = vmatpush2.xpose.msra.mxu0 0.0
      %2632 = vmatprep.subr.mxu0 0.0
      %2633 = vmatpush2.xpose.msra.mxu0 0.0
      %2634 = vmatprep.subr.mxu0 0.0
      %2635 = vmatpush2.xpose.msra.mxu0 0.0
      %2636 = vmatprep.subr.mxu0 0.0
      %2637 = vmatpush2.xpose.msra.mxu0 0.0
      %2638 = vmatprep.subr.mxu0 0.0
      %2639 = vmatpush2.xpose.msra.mxu0 0.0
      %2640 = vmatprep.mubr.f32.mxu0 0.0
      %2641 = vmatmul.mubr.f32.gmra.mxu0 %v2572
      %v2642 = vpop.f32.mrf.mxu0
      %v2643 = vadd.f32 %v1557, %v2642
      %v2644 = vpop.f32.mrf.mxu0
      %2645 = vdwg.mxu0
      %v2646 = vsel %vm830, %v2643, -inf
      %2647 = vmax.xlane.f32.xlu0 %v2646
      %v2648 = vpop.xlane.xlu0 %2647
      %v2649 = vsub.f32 %v2643, %v2648
      %v2650 = vmul.f32 %v2649, 1.442695
      %v2651 = vpow.pop %v2650
      %v2652 = vsel %vm830, %v2651, 0.0
      %2653 = vadd.xlane.f32.xlu0 %v2652
      %v2654 = vpop.xlane.xlu0 %2653
      %v2655 = vrcp.pop %v2654
      %v2656 = vmul.f32 %v2651, %v2655
      %2657 = vrot.lane.b32.xlu0 %v2237, 48
      %v2658 = vpop.permute.xlu0 %2657
      %v2661 = vsel %vm830, %v2656, 0
      %2663 = vmatprep.subr.mxu0 0.0
      %2664 = vmatpush1.msra.mxu0 0.0
      %2665 = vmatprep.subr.mxu0 0.0
      %2666 = vmatpush1.msra.mxu0 0.0
      %2667 = vmatprep.subr.mxu0 0.0
      %2668 = vmatpush1.msra.mxu0 0.0
      %2669 = vmatprep.subr.mxu0 0.0
      %2670 = vmatpush1.msra.mxu0 0.0
      %2671 = vmatprep.subr.mxu0 0.0
      %2672 = vmatpush1.msra.mxu0 0.0
      %2673 = vmatprep.subr.mxu0 0.0
      %2674 = vmatpush1.msra.mxu0 0.0
      %2675 = vmatprep.subr.mxu0 0.0
      %2676 = vmatpush1.msra.mxu0 0.0
      %2677 = vmatprep.subr.mxu0 0.0
      %2678 = vmatpush1.msra.mxu0 0.0
      %2679 = vmatprep.subr.mxu0 0.0
      %2680 = vmatpush1.msra.mxu0 0.0
      %2681 = vmatprep.subr.mxu0 0.0
      %2682 = vmatpush1.msra.mxu0 0.0
      %2683 = vmatprep.subr.mxu0 0.0
      %2684 = vmatpush1.msra.mxu0 0.0
      %2685 = vmatprep.subr.mxu0 0.0
      %2686 = vmatpush1.msra.mxu0 0.0
      %2687 = vmatprep.subr.mxu0 0.0
      %2688 = vmatpush1.msra.mxu0 0.0
      %2689 = vmatprep.subr.mxu0 0.0
      %2690 = vmatpush1.msra.mxu0 0.0
      %2691 = vmatprep.subr.mxu0 0.0
      %2692 = vmatpush1.msra.mxu0 0.0
      %2693 = vmatprep.subr.mxu0 0.0
      %2694 = vmatpush1.msra.mxu0 %v2658
      %2695 = vmatprep.subr.mxu0 0.0
      %2696 = vmatpush2.msra.mxu0 0.0
      %2697 = vmatprep.subr.mxu0 0.0
      %2698 = vmatpush2.msra.mxu0 0.0
      %2699 = vmatprep.subr.mxu0 0.0
      %2700 = vmatpush2.msra.mxu0 0.0
      %2701 = vmatprep.subr.mxu0 0.0
      %2702 = vmatpush2.msra.mxu0 0.0
      %2703 = vmatprep.subr.mxu0 0.0
      %2704 = vmatpush2.msra.mxu0 0.0
      %2705 = vmatprep.subr.mxu0 0.0
      %2706 = vmatpush2.msra.mxu0 0.0
      %2707 = vmatprep.subr.mxu0 0.0
      %2708 = vmatpush2.msra.mxu0 0.0
      %2709 = vmatprep.subr.mxu0 0.0
      %2710 = vmatpush2.msra.mxu0 0.0
      %2711 = vmatprep.subr.mxu0 0.0
      %2712 = vmatpush2.msra.mxu0 0.0
      %2713 = vmatprep.subr.mxu0 0.0
      %2714 = vmatpush2.msra.mxu0 0.0
      %2715 = vmatprep.subr.mxu0 0.0
      %2716 = vmatpush2.msra.mxu0 0.0
      %2717 = vmatprep.subr.mxu0 0.0
      %2718 = vmatpush2.msra.mxu0 0.0
      %2719 = vmatprep.subr.mxu0 0.0
      %2720 = vmatpush2.msra.mxu0 0.0
      %2721 = vmatprep.subr.mxu0 0.0
      %2722 = vmatpush2.msra.mxu0 0.0
      %2723 = vmatprep.subr.mxu0 0.0
      %2724 = vmatpush2.msra.mxu0 0.0
      %2725 = vmatprep.subr.mxu0 0.0
      %2726 = vmatpush2.msra.mxu0 0.0
      %2727 = vmatprep.mubr.f32.mxu0 0.0
      %2728 = vmatmul.mubr.f32.gmra.mxu0 %v2661
      %v2729 = vpop.f32.mrf.mxu0
      %v2730 = vadd.f32 0.0, %v2729
      %v2731 = vpop.f32.mrf.mxu0
      %2732 = vdwg.mxu0
      %2733 = vrot.lane.b32.xlu0 %v2236, 104
      %v2734 = vpop.permute.xlu0 %2733
      %2735 = vrot.lane.b32.xlu0 %v2237, 72
      %v2736 = vpop.permute.xlu0 %2735
      %v2737 = vsel %vm830, %v2734, 0
      %v2739 = vsel %vm830, %v2736, 0
      %2741 = vmatprep.subr.mxu0 0.0
      %2742 = vmatpush1.xpose.msra.mxu0 0.0
      %2743 = vmatprep.subr.mxu0 0.0
      %2744 = vmatpush1.xpose.msra.mxu0 0.0
      %2745 = vmatprep.subr.mxu0 0.0
      %2746 = vmatpush1.xpose.msra.mxu0 0.0
      %2747 = vmatprep.subr.mxu0 0.0
      %2748 = vmatpush1.xpose.msra.mxu0 0.0
      %2749 = vmatprep.subr.mxu0 0.0
      %2750 = vmatpush1.xpose.msra.mxu0 0.0
      %2751 = vmatprep.subr.mxu0 0.0
      %2752 = vmatpush1.xpose.msra.mxu0 0.0
      %2753 = vmatprep.subr.mxu0 0.0
      %2754 = vmatpush1.xpose.msra.mxu0 0.0
      %2755 = vmatprep.subr.mxu0 0.0
      %2756 = vmatpush1.xpose.msra.mxu0 0.0
      %2757 = vmatprep.subr.mxu0 0.0
      %2758 = vmatpush1.xpose.msra.mxu0 0.0
      %2759 = vmatprep.subr.mxu0 0.0
      %2760 = vmatpush1.xpose.msra.mxu0 0.0
      %2761 = vmatprep.subr.mxu0 0.0
      %2762 = vmatpush1.xpose.msra.mxu0 0.0
      %2763 = vmatprep.subr.mxu0 0.0
      %2764 = vmatpush1.xpose.msra.mxu0 0.0
      %2765 = vmatprep.subr.mxu0 0.0
      %2766 = vmatpush1.xpose.msra.mxu0 0.0
      %2767 = vmatprep.subr.mxu0 0.0
      %2768 = vmatpush1.xpose.msra.mxu0 0.0
      %2769 = vmatprep.subr.mxu0 0.0
      %2770 = vmatpush1.xpose.msra.mxu0 0.0
      %2771 = vmatprep.subr.mxu0 0.0
      %2772 = vmatpush1.xpose.msra.mxu0 %v2739
      %2773 = vmatprep.subr.mxu0 0.0
      %2774 = vmatpush2.xpose.msra.mxu0 0.0
      %2775 = vmatprep.subr.mxu0 0.0
      %2776 = vmatpush2.xpose.msra.mxu0 0.0
      %2777 = vmatprep.subr.mxu0 0.0
      %2778 = vmatpush2.xpose.msra.mxu0 0.0
      %2779 = vmatprep.subr.mxu0 0.0
      %2780 = vmatpush2.xpose.msra.mxu0 0.0
      %2781 = vmatprep.subr.mxu0 0.0
      %2782 = vmatpush2.xpose.msra.mxu0 0.0
      %2783 = vmatprep.subr.mxu0 0.0
      %2784 = vmatpush2.xpose.msra.mxu0 0.0
      %2785 = vmatprep.subr.mxu0 0.0
      %2786 = vmatpush2.xpose.msra.mxu0 0.0
      %2787 = vmatprep.subr.mxu0 0.0
      %2788 = vmatpush2.xpose.msra.mxu0 0.0
      %2789 = vmatprep.subr.mxu0 0.0
      %2790 = vmatpush2.xpose.msra.mxu0 0.0
      %2791 = vmatprep.subr.mxu0 0.0
      %2792 = vmatpush2.xpose.msra.mxu0 0.0
      %2793 = vmatprep.subr.mxu0 0.0
      %2794 = vmatpush2.xpose.msra.mxu0 0.0
      %2795 = vmatprep.subr.mxu0 0.0
      %2796 = vmatpush2.xpose.msra.mxu0 0.0
      %2797 = vmatprep.subr.mxu0 0.0
      %2798 = vmatpush2.xpose.msra.mxu0 0.0
      %2799 = vmatprep.subr.mxu0 0.0
      %2800 = vmatpush2.xpose.msra.mxu0 0.0
      %2801 = vmatprep.subr.mxu0 0.0
      %2802 = vmatpush2.xpose.msra.mxu0 0.0
      %2803 = vmatprep.subr.mxu0 0.0
      %2804 = vmatpush2.xpose.msra.mxu0 0.0
      %2805 = vmatprep.mubr.f32.mxu0 0.0
      %2806 = vmatmul.mubr.f32.gmra.mxu0 %v2737
      %v2807 = vpop.f32.mrf.mxu0
      %v2808 = vadd.f32 %v1723, %v2807
      %v2809 = vpop.f32.mrf.mxu0
      %2810 = vdwg.mxu0
      %v2811 = vsel %vm830, %v2808, -inf
      %2812 = vmax.xlane.f32.xlu0 %v2811
      %v2813 = vpop.xlane.xlu0 %2812
      %v2814 = vsub.f32 %v2808, %v2813
      %v2815 = vmul.f32 %v2814, 1.442695
      %v2816 = vpow.pop %v2815
      %v2817 = vsel %vm830, %v2816, 0.0
      %2818 = vadd.xlane.f32.xlu0 %v2817
      %v2819 = vpop.xlane.xlu0 %2818
      %v2820 = vrcp.pop %v2819
      %v2821 = vmul.f32 %v2816, %v2820
      %2822 = vrot.lane.b32.xlu0 %v2237, 40
      %v2823 = vpop.permute.xlu0 %2822
      %v2826 = vsel %vm830, %v2821, 0
      %2828 = vmatprep.subr.mxu0 0.0
      %2829 = vmatpush1.msra.mxu0 0.0
      %2830 = vmatprep.subr.mxu0 0.0
      %2831 = vmatpush1.msra.mxu0 0.0
      %2832 = vmatprep.subr.mxu0 0.0
      %2833 = vmatpush1.msra.mxu0 0.0
      %2834 = vmatprep.subr.mxu0 0.0
      %2835 = vmatpush1.msra.mxu0 0.0
      %2836 = vmatprep.subr.mxu0 0.0
      %2837 = vmatpush1.msra.mxu0 0.0
      %2838 = vmatprep.subr.mxu0 0.0
      %2839 = vmatpush1.msra.mxu0 0.0
      %2840 = vmatprep.subr.mxu0 0.0
      %2841 = vmatpush1.msra.mxu0 0.0
      %2842 = vmatprep.subr.mxu0 0.0
      %2843 = vmatpush1.msra.mxu0 0.0
      %2844 = vmatprep.subr.mxu0 0.0
      %2845 = vmatpush1.msra.mxu0 0.0
      %2846 = vmatprep.subr.mxu0 0.0
      %2847 = vmatpush1.msra.mxu0 0.0
      %2848 = vmatprep.subr.mxu0 0.0
      %2849 = vmatpush1.msra.mxu0 0.0
      %2850 = vmatprep.subr.mxu0 0.0
      %2851 = vmatpush1.msra.mxu0 0.0
      %2852 = vmatprep.subr.mxu0 0.0
      %2853 = vmatpush1.msra.mxu0 0.0
      %2854 = vmatprep.subr.mxu0 0.0
      %2855 = vmatpush1.msra.mxu0 0.0
      %2856 = vmatprep.subr.mxu0 0.0
      %2857 = vmatpush1.msra.mxu0 0.0
      %2858 = vmatprep.subr.mxu0 0.0
      %2859 = vmatpush1.msra.mxu0 %v2823
      %2860 = vmatprep.subr.mxu0 0.0
      %2861 = vmatpush2.msra.mxu0 0.0
      %2862 = vmatprep.subr.mxu0 0.0
      %2863 = vmatpush2.msra.mxu0 0.0
      %2864 = vmatprep.subr.mxu0 0.0
      %2865 = vmatpush2.msra.mxu0 0.0
      %2866 = vmatprep.subr.mxu0 0.0
      %2867 = vmatpush2.msra.mxu0 0.0
      %2868 = vmatprep.subr.mxu0 0.0
      %2869 = vmatpush2.msra.mxu0 0.0
      %2870 = vmatprep.subr.mxu0 0.0
      %2871 = vmatpush2.msra.mxu0 0.0
      %2872 = vmatprep.subr.mxu0 0.0
      %2873 = vmatpush2.msra.mxu0 0.0
      %2874 = vmatprep.subr.mxu0 0.0
      %2875 = vmatpush2.msra.mxu0 0.0
      %2876 = vmatprep.subr.mxu0 0.0
      %2877 = vmatpush2.msra.mxu0 0.0
      %2878 = vmatprep.subr.mxu0 0.0
      %2879 = vmatpush2.msra.mxu0 0.0
      %2880 = vmatprep.subr.mxu0 0.0
      %2881 = vmatpush2.msra.mxu0 0.0
      %2882 = vmatprep.subr.mxu0 0.0
      %2883 = vmatpush2.msra.mxu0 0.0
      %2884 = vmatprep.subr.mxu0 0.0
      %2885 = vmatpush2.msra.mxu0 0.0
      %2886 = vmatprep.subr.mxu0 0.0
      %2887 = vmatpush2.msra.mxu0 0.0
      %2888 = vmatprep.subr.mxu0 0.0
      %2889 = vmatpush2.msra.mxu0 0.0
      %2890 = vmatprep.subr.mxu0 0.0
      %2891 = vmatpush2.msra.mxu0 0.0
      %2892 = vmatprep.mubr.f32.mxu0 0.0
      %2893 = vmatmul.mubr.f32.gmra.mxu0 %v2826
      %v2894 = vpop.f32.mrf.mxu0
      %v2895 = vadd.f32 0.0, %v2894
      %v2896 = vpop.f32.mrf.mxu0
      %2897 = vdwg.mxu0
      %2899 = vrot.lane.b32.xlu0 %v2565, 8
      %v2900 = vpop.permute.xlu0 %2899
      %2903 = vrot.lane.b32.xlu0 %v2730, 16
      %v2904 = vpop.permute.xlu0 %2903
      %2907 = vrot.lane.b32.xlu0 %v2895, 24
      %v2908 = vpop.permute.xlu0 %2907
      %v2910 = vsel %vm830, %v2400, %v2900
      %v2911 = vsel %vm2232, %v2910, %v2904
      %v2912 = vsel %vm2234, %v2911, %v2908
      %v2914 = vcombine.high %v2235, %v2235
      %v2916 = vunpack.c.l.s4 1966171168
      %v2917 = vunpack.c.0.s8 %v2916
      %v2918 = vlaneseq
      %v2919 = vshrl.u32 %v2918, 7
      %v2920 = vsub.s32 %v2917, %v2919
      %v2921 = vrot.slane %v2235, %v2920
      %v2923 = vunpack.c.l.s4 1966171168
      %v2924 = vunpack.c.0.s8 %v2923
      %v2925 = vlaneseq
      %v2926 = vshrl.u32 %v2925, 7
      %v2927 = vsub.s32 %v2924, %v2926
      %v2928 = vrot.slane %v2914, %v2927
      %v2929 = vcombine.high %v2921, %v2921
      %v2930 = vcombine.high %v2928, %v2928
      %v2932 = vunpack.c.l.s4 1966171168
      %v2933 = vunpack.c.0.s8 %v2932
      %v2934 = vlaneseq
      %v2935 = vshrl.u32 %v2934, 7
      %v2936 = vsub.s32 %v2933, %v2935
      %v2937 = vrot.slane %v2921, %v2936
      %v2939 = vunpack.c.l.s4 1966171168
      %v2940 = vunpack.c.0.s8 %v2939
      %v2941 = vlaneseq
      %v2942 = vshrl.u32 %v2941, 7
      %v2943 = vsub.s32 %v2940, %v2942
      %v2944 = vrot.slane %v2928, %v2943
      %v2946 = vunpack.c.l.s4 1966171168
      %v2947 = vunpack.c.0.s8 %v2946
      %v2948 = vlaneseq
      %v2949 = vshrl.u32 %v2948, 7
      %v2950 = vsub.s32 %v2947, %v2949
      %v2951 = vrot.slane %v2929, %v2950
      %v2953 = vunpack.c.l.s4 1966171168
      %v2954 = vunpack.c.0.s8 %v2953
      %v2955 = vlaneseq
      %v2956 = vshrl.u32 %v2955, 7
      %v2957 = vsub.s32 %v2954, %v2956
      %v2958 = vrot.slane %v2930, %v2957
      %v2959 = vcombine.high %v2937, %v2937
      %v2960 = vcombine.high %v2944, %v2944
      %v2961 = vcombine.high %v2951, %v2951
      %v2962 = vcombine.high %v2958, %v2958
      %v2972 = vcombine.high %v2912, %v2912
      %v2974 = vunpack.c.l.s4 1966171168
      %v2975 = vunpack.c.0.s8 %v2974
      %v2976 = vlaneseq
      %v2977 = vshrl.u32 %v2976, 7
      %v2978 = vsub.s32 %v2975, %v2977
      %v2979 = vrot.slane %v2912, %v2978
      %v2981 = vunpack.c.l.s4 1966171168
      %v2982 = vunpack.c.0.s8 %v2981
      %v2983 = vlaneseq
      %v2984 = vshrl.u32 %v2983, 7
      %v2985 = vsub.s32 %v2982, %v2984
      %v2986 = vrot.slane %v2972, %v2985
      %v2987 = vcombine.high %v2979, %v2979
      %v2988 = vcombine.high %v2986, %v2986
      %v2990 = vunpack.c.l.s4 1966171168
      %v2991 = vunpack.c.0.s8 %v2990
      %v2992 = vlaneseq
      %v2993 = vshrl.u32 %v2992, 7
      %v2994 = vsub.s32 %v2991, %v2993
      %v2995 = vrot.slane %v2979, %v2994
      %v2997 = vunpack.c.l.s4 1966171168
      %v2998 = vunpack.c.0.s8 %v2997
      %v2999 = vlaneseq
      %v3000 = vshrl.u32 %v2999, 7
      %v3001 = vsub.s32 %v2998, %v3000
      %v3002 = vrot.slane %v2986, %v3001
      %v3004 = vunpack.c.l.s4 1966171168
      %v3005 = vunpack.c.0.s8 %v3004
      %v3006 = vlaneseq
      %v3007 = vshrl.u32 %v3006, 7
      %v3008 = vsub.s32 %v3005, %v3007
      %v3009 = vrot.slane %v2987, %v3008
      %v3011 = vunpack.c.l.s4 1966171168
      %v3012 = vunpack.c.0.s8 %v3011
      %v3013 = vlaneseq
      %v3014 = vshrl.u32 %v3013, 7
      %v3015 = vsub.s32 %v3012, %v3014
      %v3016 = vrot.slane %v2988, %v3015
      %v3017 = vcombine.high %v2995, %v2995
      %v3018 = vcombine.high %v3002, %v3002
      %v3019 = vcombine.high %v3009, %v3009
      %v3020 = vcombine.high %v3016, %v3016
      %v3021 = vlaneseq
      %v3022 = vshrl.u32 %v3021, 7
      %v3023 = vsub.s32 0, %v3022
      %v3024 = vrot.slane %v2995, %v3023
      %v3025 = vlaneseq
      %v3026 = vshrl.u32 %v3025, 7
      %v3027 = vsub.s32 0, %v3026
      %v3028 = vrot.slane %v3009, %v3027
      %v3029 = vlaneseq
      %v3030 = vshrl.u32 %v3029, 7
      %v3031 = vsub.s32 0, %v3030
      %v3032 = vrot.slane %v3017, %v3031
      %v3033 = vlaneseq
      %v3034 = vshrl.u32 %v3033, 7
      %v3035 = vsub.s32 0, %v3034
      %v3036 = vrot.slane %v3019, %v3035
      %v3037 = vlaneseq
      %v3038 = vshrl.u32 %v3037, 7
      %v3039 = vsub.s32 0, %v3038
      %v3040 = vrot.slane %v3002, %v3039
      %v3041 = vlaneseq
      %v3042 = vshrl.u32 %v3041, 7
      %v3043 = vsub.s32 0, %v3042
      %v3044 = vrot.slane %v3016, %v3043
      %v3045 = vlaneseq
      %v3046 = vshrl.u32 %v3045, 7
      %v3047 = vsub.s32 0, %v3046
      %v3048 = vrot.slane %v3018, %v3047
      %v3049 = vlaneseq
      %v3050 = vshrl.u32 %v3049, 7
      %v3051 = vsub.s32 0, %v3050
      %v3052 = vrot.slane %v3020, %v3051
      %vm3061 = vcmask 1040384
      %v3062 = vsel %vm3061, %v2937, %v3024
      %v3063 = vsel %vm3061, %v2951, %v3028
      %v3064 = vsel %vm3061, %v2959, %v3032
      %v3065 = vsel %vm3061, %v2961, %v3036
      %v3066 = vsel %vm3061, %v2944, %v3040
      %v3067 = vsel %vm3061, %v2958, %v3044
      %v3068 = vsel %vm3061, %v2960, %v3048
      %v3069 = vsel %vm3061, %v2962, %v3052
      %v3071 = vlaneseq
      %v3072 = vshrl.u32 %v3071, 7
      %v3073 = vsub.s32 0, %v3072
      %v3074 = vrot.slane %v285, %v3073
      %v3084 = vcombine.low %v3062, %v3063
      %v3085 = vcombine.low %v3064, %v3065
      %v3087 = vunpack.c.l.s4 1983009808
      %v3088 = vunpack.c.0.s8 %v3087
      %v3089 = vlaneseq
      %v3090 = vshrl.u32 %v3089, 7
      %v3091 = vsub.s32 %v3088, %v3090
      %v3092 = vrot.slane %v3084, %v3091
      %v3094 = vunpack.c.l.s4 1983009808
      %v3095 = vunpack.c.0.s8 %v3094
      %v3096 = vlaneseq
      %v3097 = vshrl.u32 %v3096, 7
      %v3098 = vsub.s32 %v3095, %v3097
      %v3099 = vrot.slane %v3085, %v3098
      %v3100 = vcombine.low %v3092, %v3099
      %v3101 = vcombine.low %v3066, %v3067
      %v3102 = vcombine.low %v3068, %v3069
      %v3104 = vunpack.c.l.s4 1983009808
      %v3105 = vunpack.c.0.s8 %v3104
      %v3106 = vlaneseq
      %v3107 = vshrl.u32 %v3106, 7
      %v3108 = vsub.s32 %v3105, %v3107
      %v3109 = vrot.slane %v3101, %v3108
      %v3111 = vunpack.c.l.s4 1983009808
      %v3112 = vunpack.c.0.s8 %v3111
      %v3113 = vlaneseq
      %v3114 = vshrl.u32 %v3113, 7
      %v3115 = vsub.s32 %v3112, %v3114
      %v3116 = vrot.slane %v3102, %v3115
      %v3117 = vcombine.low %v3109, %v3116
      %v3118 = vsel %vm334, %v3100, 0
      %v3120 = vsel %vm334, %v3117, 0
      %v3123 = vsel %vm334, %v281, 0
      %v3126 = vsel %vm334, %v282, 0
      %v3129 = vsel %vm334, %v283, 0
      %v3132 = vsel %vm334, %v284, 0
      %3134 = vmatprep.subr.mxu0 0.0
      %3135 = vmatpush1.xpose.msra.mxu0 0.0
      %3136 = vmatprep.subr.mxu0 0.0
      %3137 = vmatpush1.xpose.msra.mxu0 0.0
      %3138 = vmatprep.subr.mxu0 0.0
      %3139 = vmatpush1.xpose.msra.mxu0 0.0
      %3140 = vmatprep.subr.mxu0 0.0
      %3141 = vmatpush1.xpose.msra.mxu0 0.0
      %3142 = vmatprep.subr.mxu0 0.0
      %3143 = vmatpush1.xpose.msra.mxu0 0.0
      %3144 = vmatprep.subr.mxu0 0.0
      %3145 = vmatpush1.xpose.msra.mxu0 0.0
      %3146 = vmatprep.subr.mxu0 0.0
      %3147 = vmatpush1.xpose.msra.mxu0 0.0
      %3148 = vmatprep.subr.mxu0 0.0
      %3149 = vmatpush1.xpose.msra.mxu0 0.0
      %3150 = vmatprep.subr.mxu0 0.0
      %3151 = vmatpush1.xpose.msra.mxu0 0.0
      %3152 = vmatprep.subr.mxu0 0.0
      %3153 = vmatpush1.xpose.msra.mxu0 0.0
      %3154 = vmatprep.subr.mxu0 0.0
      %3155 = vmatpush1.xpose.msra.mxu0 0.0
      %3156 = vmatprep.subr.mxu0 0.0
      %3157 = vmatpush1.xpose.msra.mxu0 0.0
      %3158 = vmatprep.subr.mxu0 0.0
      %3159 = vmatpush1.xpose.msra.mxu0 %v3132
      %3160 = vmatprep.subr.mxu0 0.0
      %3161 = vmatpush1.xpose.msra.mxu0 %v3129
      %3162 = vmatprep.subr.mxu0 0.0
      %3163 = vmatpush1.xpose.msra.mxu0 %v3126
      %3164 = vmatprep.subr.mxu0 0.0
      %3165 = vmatpush1.xpose.msra.mxu0 %v3123
      %3166 = vmatprep.subr.mxu0 0.0
      %3167 = vmatpush2.xpose.msra.mxu0 0.0
      %3168 = vmatprep.subr.mxu0 0.0
      %3169 = vmatpush2.xpose.msra.mxu0 0.0
      %3170 = vmatprep.subr.mxu0 0.0
      %3171 = vmatpush2.xpose.msra.mxu0 0.0
      %3172 = vmatprep.subr.mxu0 0.0
      %3173 = vmatpush2.xpose.msra.mxu0 0.0
      %3174 = vmatprep.subr.mxu0 0.0
      %3175 = vmatpush2.xpose.msra.mxu0 0.0
      %3176 = vmatprep.subr.mxu0 0.0
      %3177 = vmatpush2.xpose.msra.mxu0 0.0
      %3178 = vmatprep.subr.mxu0 0.0
      %3179 = vmatpush2.xpose.msra.mxu0 0.0
      %3180 = vmatprep.subr.mxu0 0.0
      %3181 = vmatpush2.xpose.msra.mxu0 0.0
      %3182 = vmatprep.subr.mxu0 0.0
      %3183 = vmatpush2.xpose.msra.mxu0 0.0
      %3184 = vmatprep.subr.mxu0 0.0
      %3185 = vmatpush2.xpose.msra.mxu0 0.0
      %3186 = vmatprep.subr.mxu0 0.0
      %3187 = vmatpush2.xpose.msra.mxu0 0.0
      %3188 = vmatprep.subr.mxu0 0.0
      %3189 = vmatpush2.xpose.msra.mxu0 0.0
      %3190 = vmatprep.subr.mxu0 0.0
      %3191 = vmatpush2.xpose.msra.mxu0 0.0
      %3192 = vmatprep.subr.mxu0 0.0
      %3193 = vmatpush2.xpose.msra.mxu0 0.0
      %3194 = vmatprep.subr.mxu0 0.0
      %3195 = vmatpush2.xpose.msra.mxu0 0.0
      %3196 = vmatprep.subr.mxu0 0.0
      %3197 = vmatpush2.xpose.msra.mxu0 0.0
      %3198 = vmatprep.mubr.f32.mxu0 0.0
      %3199 = vmatmul.mubr.f32.gmra.mxu0 %v3118
      %v3200 = vpop.f32.mrf.mxu0
      %v3201 = vadd.f32 %v3074, %v3200
      %v3202 = vpop.f32.mrf.mxu0
      %3203 = vmatprep.mubr.f32.mxu0 0.0
      %3204 = vmatmul.mubr.f32.gmra.mxu0 %v3120
      %v3205 = vpop.f32.mrf.mxu0
      %v3206 = vadd.f32 %v3074, %v3205
      %v3207 = vpop.f32.mrf.mxu0
      %3208 = vdwg.mxu0
      %v3211 = vcombine.high %v3201, %v3201
      %v3213 = vunpack.c.l.s4 1983009808
      %v3214 = vunpack.c.0.s8 %v3213
      %v3215 = vlaneseq
      %v3216 = vshrl.u32 %v3215, 7
      %v3217 = vsub.s32 %v3214, %v3216
      %v3218 = vrot.slane %v3201, %v3217
      %v3220 = vunpack.c.l.s4 1983009808
      %v3221 = vunpack.c.0.s8 %v3220
      %v3222 = vlaneseq
      %v3223 = vshrl.u32 %v3222, 7
      %v3224 = vsub.s32 %v3221, %v3223
      %v3225 = vrot.slane %v3211, %v3224
      %v3226 = vcombine.high %v3218, %v3218
      %v3227 = vcombine.high %v3225, %v3225
      %v3228 = vcombine.high %v3206, %v3206
      %v3230 = vunpack.c.l.s4 1983009808
      %v3231 = vunpack.c.0.s8 %v3230
      %v3232 = vlaneseq
      %v3233 = vshrl.u32 %v3232, 7
      %v3234 = vsub.s32 %v3231, %v3233
      %v3235 = vrot.slane %v3206, %v3234
      %v3237 = vunpack.c.l.s4 1983009808
      %v3238 = vunpack.c.0.s8 %v3237
      %v3239 = vlaneseq
      %v3240 = vshrl.u32 %v3239, 7
      %v3241 = vsub.s32 %v3238, %v3240
      %v3242 = vrot.slane %v3228, %v3241
      %v3243 = vcombine.high %v3235, %v3235
      %v3244 = vcombine.high %v3242, %v3242
      %vm3253 = vcmask 254976
      %3254 = vst.msk [vmem:[%s231] sm:$0x3] %vm3253, %v3218
      %3255 = vst.msk [vmem:[%s231 + $0x2] sm:$0x3] %vm3253, %v3226
      %3256 = vst.msk [vmem:[%s231 + $0x4] sm:$0x3] %vm3253, %v3225
      %3257 = vst.msk [vmem:[%s231 + $0x6] sm:$0x3] %vm3253, %v3227
      %3258 = vst.msk [vmem:[%s231 + $0x8] sm:$0x3] %vm3253, %v3235
      %3259 = vst.msk [vmem:[%s231 + $0xa] sm:$0x3] %vm3253, %v3243
      %3260 = vst.msk [vmem:[%s231 + $0xc] sm:$0x3] %vm3253, %v3242
      %3261 = vst.msk [vmem:[%s231 + $0xe] sm:$0x3] %vm3253, %v3244
      %p3262 = scmp.lt.s32.totalorder %s17, 1
      %s3263 = scalar_select %p3262, %s17, 1
      %s3264 = smul.addr %s3263, 8
      %s3265 = smul.addr %s3264, 2
      %s3266 = scalar_lea.vmem %s6, %s3265
      // Predicated region
      $region45: #{sam_layer_forward.1} parent=43 // pred_check
        %p3267 = pneg %p161
      $region46: #{sam_layer_forward.1} parent=43 // pred_check_branch
        %3269 = sbr.rel (%p3267) target = $region48
      $region47: #{sam_layer_forward.1} parent=43 // pred_region
        _
      $region48: #{sam_layer_forward.1} parent=43 // pred_fallthru
        _
    $region44: #{sam_layer_forward.1} parent=5 // pred_fallthru
      _
    %p3270 = scmp.le.s32.totalorder 2, %s12
    // Predicated region
    $region49: #{sam_layer_forward.1} parent=5 // pred_check
      %p3271 = pneg %p3270
    $region50: #{sam_layer_forward.1} parent=5 // pred_check_branch
      %3273 = sbr.rel (%p3271) target = $region52
    $region51: #{sam_layer_forward.1} parent=5 // pred_region
      %s3274 = ssub.s32 %s12, 2
      // Predicated region
      $region53: #{sam_layer_forward.1} parent=51 // pred_check
        %p3275 = pneg %p167
      $region54: #{sam_layer_forward.1} parent=51 // pred_check_branch
        %3277 = sbr.rel (%p3275) target = $region56
      $region55: #{sam_layer_forward.1} parent=51 // pred_region
        %p3278 = scmp.lt.s32.totalorder %s18, 1
        %s3279 = scalar_select %p3278, %s18, 1
        %s3280 = smul.addr %s3279, 8
        %s3281 = smul.addr %s3280, 2
        %s3282 = scalar_lea.vmem %s6, %s3281
      $region56: #{sam_layer_forward.1} parent=51 // pred_fallthru
        _
    $region52: #{sam_layer_forward.1} parent=5 // pred_fallthru
      _
  $region6: #{sam_layer_forward.1} parent=0 // loop_footer
    %s16 = sadd.s32 1, %s12
  $region7: #{sam_layer_forward.1} parent=0 // loop_footer_branch
    %11 = sbr.rel target = $region3
  $region8: #{sam_layer_forward.1} parent=0 // loop_exit
    _

</llo_original>
